<compile_context>
chip_gen: v7x
topology: tpu7x:2x2x1
jax: 0.10.0
libtpu: 0.0.40
codegen_flags: <defaults>
</compile_context>

<pallas_src>
import functools

import jax
import jax.numpy as jnp
from jax.experimental import pallas as pl
from jax.experimental.pallas import tpu as pltpu


_PARAM_ORDER = ("ln1_g", "ln1_b", "wqkv_t", "bqkv", "wo_t", "bo",
                "ln2_g", "ln2_b", "wfc_t", "bfc", "wproj_t", "bproj")


def _layernorm_f32(x, gamma, beta, eps=1e-5):
    # Matches the LayerNorm subclass: compute in float32, default eps=1e-5.
    xf = x.astype(jnp.float32)
    mean = jnp.mean(xf, axis=-1, keepdims=True)
    var = jnp.mean(jnp.square(xf - mean), axis=-1, keepdims=True)
    return (xf - mean) * jax.lax.rsqrt(var + eps) * gamma + beta


def transformer_layers_kernel(
    x_ref,        # (Bt*Lp, D)   f32   block of Bt flattened sequences
    mask_ref,     # (Bt, 1, Lp)  f32   additive key-padding bias (0 / -1e30)
    ln1_g_ref, ln1_b_ref,    # (1, 1, D)   f32
    wqkv_ref, bqkv_ref,      # (1, D, 3D)  bf16 / (1, 1, 3D) f32
    wo_ref, bo_ref,          # (1, D, D)   bf16 / (1, 1, D)  f32
    ln2_g_ref, ln2_b_ref,    # (1, 1, D)   f32
    wfc_ref, bfc_ref,        # (1, D, 4D)  bf16 / (1, 1, 4D) f32
    wproj_ref, bproj_ref,    # (1, 4D, D)  bf16 / (1, 1, D)  f32
    out_ref,      # (Bt*Lp, D)   f32
    x_scratch,    # VMEM (Bt*Lp, D) f32  residual stream, persists across the layer axis
    *, n_head: int, seq_len: int, block_batch: int,
):
    l = pl.program_id(1)

    @pl.when(l == 0)
    def _():
        x_scratch[...] = x_ref[...].astype(jnp.float32)

    x = x_scratch[...]                                # (Bt*Lp, D) f32
    D = x.shape[-1]
    Dh = D // n_head
    Lp = seq_len

    # ---- attention branch ---------------------------------------------------
    ln1 = _layernorm_f32(x, ln1_g_ref[0], ln1_b_ref[0])
    qkv = jnp.dot(ln1.astype(jnp.bfloat16), wqkv_ref[0],
                  preferred_element_type=jnp.float32) + bqkv_ref[0]   # (Bt*Lp, 3D)

    ctx_rows = []
    for b in range(block_batch):                      # static unroll over sequences
        qkv_b = qkv[b * Lp:(b + 1) * Lp]              # (Lp, 3D)
        q = jnp.transpose(qkv_b[:, 0:D].reshape(Lp, n_head, Dh), (1, 0, 2))
        k = jnp.transpose(qkv_b[:, D:2 * D].reshape(Lp, n_head, Dh), (1, 0, 2))
        v = jnp.transpose(qkv_b[:, 2 * D:3 * D].reshape(Lp, n_head, Dh), (1, 0, 2))
        # 1/sqrt(Dh) is already folded into the Q weights/bias on the host.
        s = jnp.einsum("hqd,hkd->hqk",
                       q.astype(jnp.bfloat16), k.astype(jnp.bfloat16),
                       preferred_element_type=jnp.float32)            # (H, Lp, Lp)
        s = s + mask_ref[b][None, :, :]               # (1, 1, Lp) key-padding bias
        s = s - jnp.max(s, axis=-1, keepdims=True)
        p = jnp.exp(s)
        p = p * pl.reciprocal(jnp.sum(p, axis=-1, keepdims=True), approx=True)
        c = jnp.einsum("hqk,hkd->hqd",
                       p.astype(jnp.bfloat16), v.astype(jnp.bfloat16),
                       preferred_element_type=jnp.float32)            # (H, Lp, Dh)
        ctx_rows.append(jnp.transpose(c, (1, 0, 2)).reshape(Lp, D))
    ctx = ctx_rows[0] if block_batch == 1 else jnp.concatenate(ctx_rows, axis=0)

    attn = jnp.dot(ctx.astype(jnp.bfloat16), wo_ref[0],
                   preferred_element_type=jnp.float32) + bo_ref[0]
    x = x + attn                                      # residual 1 (f32)

    # ---- MLP branch -----------------------------------------------------------
    ln2 = _layernorm_f32(x, ln2_g_ref[0], ln2_b_ref[0])
    hid = jnp.dot(ln2.astype(jnp.bfloat16), wfc_ref[0],
                  preferred_element_type=jnp.float32) + bfc_ref[0]
    hid = hid * jax.nn.sigmoid(1.702 * hid)           # QuickGELU (f32)
    mlp = jnp.dot(hid.astype(jnp.bfloat16), wproj_ref[0],
                  preferred_element_type=jnp.float32) + bproj_ref[0]
    x = x + mlp                                       # residual 2

    x_scratch[...] = x

    @pl.when(l == pl.num_programs(1) - 1)
    def _():
        out_ref[...] = x.astype(out_ref.dtype)


def _vmem_limit_bytes():
    # ~3/4 of physical per-core VMEM (≈96 MiB on v5e/v6e, ≈48 MiB on v7x),
    # leaving headroom for compiler-internal scratch / semaphores.
    try:
        cap = int(pltpu.get_tpu_info().vmem_capacity_bytes)
        return (cap // 4) * 3
    except Exception:
        return None  # fall back to the compiler default


def _choose_block_batch(n, seq):
    """Pick Bt so Bt*seq rows per step fill the MXU, keeping >=2 batch steps if cheap."""
    target_rows = 256
    bt = min(n, max(1, -(-target_rows // seq)))
    while n % bt:
        bt -= 1
    if n // bt < 2:  # prefer >=2 parallel batch steps (v7x megacore) if rows stay >=128
        for cand in range(bt - 1, 0, -1):
            if n % cand == 0 and n // cand >= 2 and cand * seq >= 128:
                bt = cand
                break
    return bt


def transformer_call(x2d, mask_bias, sp, *, n_head, layers, seq_len, block_batch):
    total_rows, D = x2d.shape
    n = total_rows // seq_len
    nb = n // block_batch
    rows = block_batch * seq_len

    param_list = [sp[k] for k in _PARAM_ORDER]

    in_specs = [
        pl.BlockSpec((rows, D), lambda b, l: (b, 0)),
        pl.BlockSpec((block_batch, 1, seq_len), lambda b, l: (b, 0, 0)),
    ] + [
        # Stacked per-layer weights: streamed along the (fast, "arbitrary") layer axis,
        # so layer l+1 is auto-prefetched while layer l computes.
        # TODO(synk): for very large D on v7x, tile the 3D/4D columns of wqkv/wfc/wproj
        # with an extra inner grid axis instead of holding them whole.
        pl.BlockSpec((1,) + w.shape[1:], lambda b, l: (l, 0, 0)) for w in param_list
    ]

    kernel = functools.partial(transformer_layers_kernel,
                               n_head=n_head, seq_len=seq_len, block_batch=block_batch)

    # Advisory cost estimate for the whole fused stack.
    flops = layers * (24 * total_rows * D * D + 4 * n * seq_len * seq_len * D)
    transcendentals = layers * (n * n_head * seq_len * seq_len
                                + 4 * total_rows * D + 2 * total_rows)
    bytes_accessed = (2 * total_rows * D * 4 + n * seq_len * 4
                      + nb * layers * (12 * D * D * 2 + 12 * D * 4))

    return pl.pallas_call(
        kernel,
        out_shape=jax.ShapeDtypeStruct((total_rows, D), jnp.float32),
        grid_spec=pltpu.PrefetchScalarGridSpec(
            num_scalar_prefetch=0,
            grid=(nb, layers),
            in_specs=in_specs,
            out_specs=pl.BlockSpec((rows, D), lambda b, l: (b, 0)),
            scratch_shapes=[pltpu.VMEM((rows, D), jnp.float32)],
        ),
        compiler_params=pltpu.CompilerParams(
            dimension_semantics=("parallel", "arbitrary"),
            vmem_limit_bytes=_vmem_limit_bytes(),
        ),
        cost_estimate=pl.CostEstimate(
            flops=int(flops),
            transcendentals=int(transcendentals),
            bytes_accessed=int(bytes_accessed),
        ),
    )(x2d, mask_bias, *param_list)


def prepare_stacked_params(params, n_head):
    """PyTorch-layout per-layer params -> stacked, pre-transposed bf16 kernel layout."""
    def stack(name):
        return jnp.stack([p[name] for p in params], axis=0)

    wqkv = stack("wqkv").astype(jnp.float32)       # (layers, 3D, D)  (out, in)
    bqkv = stack("bqkv").astype(jnp.float32)       # (layers, 1, 3D)
    D = wqkv.shape[-1]
    scale = 1.0 / ((D // n_head) ** 0.5)
    # Fold the attention scale into the Q slice of the packed in_proj (host side).
    wqkv = wqkv.at[:, 0:D, :].multiply(scale)
    bqkv = bqkv.at[:, :, 0:D].multiply(scale)

    return {
        "ln1_g": stack("ln1_g").astype(jnp.float32),                          # (layers, 1, D)
        "ln1_b": stack("ln1_b").astype(jnp.float32),
        "wqkv_t": jnp.transpose(wqkv, (0, 2, 1)).astype(jnp.bfloat16),        # (layers, D, 3D)
        "bqkv": bqkv,
        "wo_t": jnp.transpose(stack("wo"), (0, 2, 1)).astype(jnp.bfloat16),   # (layers, D, D)
        "bo": stack("bo").astype(jnp.float32),
        "ln2_g": stack("ln2_g").astype(jnp.float32),
        "ln2_b": stack("ln2_b").astype(jnp.float32),
        "wfc_t": jnp.transpose(stack("wfc"), (0, 2, 1)).astype(jnp.bfloat16), # (layers, D, 4D)
        "bfc": stack("bfc").astype(jnp.float32),
        "wproj_t": jnp.transpose(stack("wproj"), (0, 2, 1)).astype(jnp.bfloat16),  # (layers, 4D, D)
        "bproj": stack("bproj").astype(jnp.float32),
    }


def transformer_forward(x_lnd, padding_mask, params, n_head, block_batch=None):
    """x_lnd: (L, N, D) float32 ; padding_mask: (N, L) bool (True = pad key)."""
    L, N, D = x_lnd.shape
    layers = len(params)
    Lp = ((L + 7) // 8) * 8  # sublane-align the sequence; padded keys masked below
    # TODO(synk): pad L to a multiple of 128 for full lane density on large models.

    x = jnp.transpose(x_lnd, (1, 0, 2)).astype(jnp.float32)      # (N, L, D)
    # TODO(synk): avoid this wrapper transpose by tiling the batch axis in place
    # once Bt is guaranteed to be a multiple of 8.
    if padding_mask is not None:
        # TODO(synk): torch MHA with a fully key-padded row yields NaN; the finite
        # -1e30 bias here falls back to an unmasked softmax for such rows.
        bias = jnp.where(padding_mask.astype(bool), -1e30, 0.0).astype(jnp.float32)
    else:
        bias = jnp.zeros((N, L), jnp.float32)
    if Lp != L:
        x = jnp.pad(x, ((0, 0), (0, Lp - L), (0, 0)))
        bias = jnp.pad(bias, ((0, 0), (0, Lp - L)), constant_values=-1e30)
    mask_bias = bias[:, None, :]                                  # (N, 1, Lp)
    x2d = x.reshape(N * Lp, D)

    if block_batch is None:
        block_batch = _choose_block_batch(N, Lp)

    sp = prepare_stacked_params(params, n_head)
    out2d = transformer_call(x2d, mask_bias, sp, n_head=n_head, layers=layers,
                             seq_len=Lp, block_batch=block_batch)

    out = out2d.reshape(N, Lp, D)[:, :L, :]
    return jnp.transpose(out, (1, 0, 2)), padding_mask            # back to (L, N, D)


def init_params(key, width, layers):
    """Deterministic synthetic parameters with the same shapes as the module."""
    D = width
    params = []
    for _ in range(layers):
        keys = jax.random.split(key, 9)
        key = keys[0]
        p = {
            "ln1_g": jnp.ones((1, D), jnp.float32),
            "ln1_b": jnp.zeros((1, D), jnp.float32),
            "wqkv": 0.02 * jax.random.normal(keys[1], (3 * D, D), jnp.float32),
            "bqkv": 0.01 * jax.random.normal(keys[2], (1, 3 * D), jnp.float32),
            "wo": 0.02 * jax.random.normal(keys[3], (D, D), jnp.float32),
            "bo": 0.01 * jax.random.normal(keys[4], (1, D), jnp.float32),
            "ln2_g": jnp.ones((1, D), jnp.float32),
            "ln2_b": jnp.zeros((1, D), jnp.float32),
            "wfc": 0.02 * jax.random.normal(keys[5], (4 * D, D), jnp.float32),
            "bfc": 0.01 * jax.random.normal(keys[6], (1, 4 * D), jnp.float32),
            "wproj": 0.02 * jax.random.normal(keys[7], (D, 4 * D), jnp.float32),
            "bproj": 0.01 * jax.random.normal(keys[8], (1, D), jnp.float32),
        }
        params.append(p)
    return params


if __name__ == "__main__":
    # Small shapes consistent with the module: width=32, heads=4, layers=2,
    # sequence L=8, batch N=2.  Transformer attn_mask=None (default).
    WIDTH, HEADS, LAYERS, L, N = 32, 4, 2, 8, 2

    root = jax.random.PRNGKey(0)
    kx, kp, km = jax.random.split(root, 3)

    x = jax.random.normal(kx, (L, N, WIDTH), jnp.float32)     # (seq, batch, width)
    # padding mask (N, L): mask the last two keys of batch element 1
    padding_mask = jnp.zeros((N, L), jnp.bool_).at[1, -2:].set(True)

    params = init_params(kp, WIDTH, LAYERS)

    out, out_mask = transformer_forward(x, padding_mask, params, HEADS)
    out = jax.block_until_ready(out)

    assert out.shape == (L, N, WIDTH)
    assert out.dtype == jnp.float32
    assert bool(jnp.all(jnp.isfinite(out)))
    print("KERNEL_OK")
</pallas_src>

<mosaic_0001>
module attributes {stable_mosaic.version = 11 : i64} {
  func.func @transformer_layers_kernel(%arg0: i32, %arg1: i32, %arg2: memref<16x32xf32, #tpu.memory_space<vmem>>, %arg3: memref<2x1x8xf32, #tpu.memory_space<vmem>>, %arg4: memref<1x1x32xf32, #tpu.memory_space<vmem>>, %arg5: memref<1x1x32xf32, #tpu.memory_space<vmem>>, %arg6: memref<1x32x96xbf16, #tpu.memory_space<vmem>>, %arg7: memref<1x1x96xf32, #tpu.memory_space<vmem>>, %arg8: memref<1x32x32xbf16, #tpu.memory_space<vmem>>, %arg9: memref<1x1x32xf32, #tpu.memory_space<vmem>>, %arg10: memref<1x1x32xf32, #tpu.memory_space<vmem>>, %arg11: memref<1x1x32xf32, #tpu.memory_space<vmem>>, %arg12: memref<1x32x128xbf16, #tpu.memory_space<vmem>>, %arg13: memref<1x1x128xf32, #tpu.memory_space<vmem>>, %arg14: memref<1x128x32xbf16, #tpu.memory_space<vmem>>, %arg15: memref<1x1x32xf32, #tpu.memory_space<vmem>>, %arg16: memref<16x32xf32, #tpu.memory_space<vmem>>, %arg17: memref<16x32xf32, #tpu.memory_space<vmem>>) attributes {dimension_semantics = [#tpu.dimension_semantics<parallel>, #tpu.dimension_semantics<arbitrary>], iteration_bounds = array<i64: 1, 2>, scalar_prefetch = 0 : i64, scratch_operands = 1 : i64, tpu.core_type = #tpu.core_type<tc>, window_params = [{transform_indices = @transform_0, window_bounds = array<i64: 16, 32>}, {transform_indices = @transform_1, window_bounds = array<i64: 2, 1, 8>}, {transform_indices = @transform_2, window_bounds = array<i64: 1, 1, 32>}, {transform_indices = @transform_3, window_bounds = array<i64: 1, 1, 32>}, {transform_indices = @transform_4, window_bounds = array<i64: 1, 32, 96>}, {transform_indices = @transform_5, window_bounds = array<i64: 1, 1, 96>}, {transform_indices = @transform_6, window_bounds = array<i64: 1, 32, 32>}, {transform_indices = @transform_7, window_bounds = array<i64: 1, 1, 32>}, {transform_indices = @transform_8, window_bounds = array<i64: 1, 1, 32>}, {transform_indices = @transform_9, window_bounds = array<i64: 1, 1, 32>}, {transform_indices = @transform_10, window_bounds = array<i64: 1, 32, 128>}, {transform_indices = @transform_11, window_bounds = array<i64: 1, 1, 128>}, {transform_indices = @transform_12, window_bounds = array<i64: 1, 128, 32>}, {transform_indices = @transform_13, window_bounds = array<i64: 1, 1, 32>}, {transform_indices = @transform_14, window_bounds = array<i64: 16, 32>}]} {
    %c0_i32 = arith.constant 0 : i32
    %0 = arith.cmpi eq, %arg1, %c0_i32 : i32
    %1 = arith.extui %0 : i1 to i32
    %c0_i32_0 = arith.constant 0 : i32
    %2 = arith.cmpi ne, %1, %c0_i32_0 : i32
    scf.if %2 {
      %c0_69 = arith.constant 0 : index
      %c0_70 = arith.constant 0 : index
      %169 = vector.load %arg2[%c0_69, %c0_70] : memref<16x32xf32, #tpu.memory_space<vmem>>, vector<16x32xf32>
      %c0_71 = arith.constant 0 : index
      %c0_72 = arith.constant 0 : index
      %170 = vector.load %arg17[%c0_71, %c0_72] : memref<16x32xf32, #tpu.memory_space<vmem>>, vector<16x32xf32>
      tpu.vector_store %arg17[%c0_71, %c0_72], %169 {strides = array<i32>} : memref<16x32xf32, #tpu.memory_space<vmem>>, vector<16x32xf32>,
    } else {
    }
    %c0 = arith.constant 0 : index
    %c0_1 = arith.constant 0 : index
    %3 = vector.load %arg17[%c0, %c0_1] : memref<16x32xf32, #tpu.memory_space<vmem>>, vector<16x32xf32>
    %c0_2 = arith.constant 0 : index
    %c0_3 = arith.constant 0 : index
    %c0_4 = arith.constant 0 : index
    %4 = vector.load %arg4[%c0_2, %c0_3, %c0_4] : memref<1x1x32xf32, #tpu.memory_space<vmem>>, vector<1x1x32xf32>
    %5 = vector.shape_cast %4 : vector<1x1x32xf32> to vector<1x32xf32>
    %c0_5 = arith.constant 0 : index
    %c0_6 = arith.constant 0 : index
    %c0_7 = arith.constant 0 : index
    %6 = vector.load %arg5[%c0_5, %c0_6, %c0_7] : memref<1x1x32xf32, #tpu.memory_space<vmem>>, vector<1x1x32xf32>
    %7 = vector.shape_cast %6 : vector<1x1x32xf32> to vector<1x32xf32>
    %cst = arith.constant dense<0.000000e+00> : vector<16xf32>
    %8 = vector.multi_reduction <add>, %3, %cst [1] : vector<16x32xf32> to vector<16xf32>
    %9 = vector.shape_cast %8 : vector<16xf32> to vector<16x1xf32>
    %cst_8 = arith.constant 3.200000e+01 : f32
    %10 = vector.broadcast %cst_8 : f32 to vector<16x1xf32>
    %11 = arith.divf %9, %10 : vector<16x1xf32>
    %12 = vector.broadcast %11 : vector<16x1xf32> to vector<16x32xf32>
    %13 = arith.subf %3, %12 : vector<16x32xf32>
    %14 = arith.mulf %13, %13 : vector<16x32xf32>
    %cst_9 = arith.constant dense<0.000000e+00> : vector<16xf32>
    %15 = vector.multi_reduction <add>, %14, %cst_9 [1] : vector<16x32xf32> to vector<16xf32>
    %16 = vector.shape_cast %15 : vector<16xf32> to vector<16x1xf32>
    %cst_10 = arith.constant 3.200000e+01 : f32
    %17 = vector.broadcast %cst_10 : f32 to vector<16x1xf32>
    %18 = arith.divf %16, %17 : vector<16x1xf32>
    %19 = vector.broadcast %11 : vector<16x1xf32> to vector<16x32xf32>
    %20 = arith.subf %3, %19 : vector<16x32xf32>
    %cst_11 = arith.constant 9.99999974E-6 : f32
    %21 = vector.broadcast %cst_11 : f32 to vector<16x1xf32>
    %22 = arith.addf %18, %21 : vector<16x1xf32>
    %23 = math.rsqrt %22 : vector<16x1xf32>
    %24 = vector.broadcast %23 : vector<16x1xf32> to vector<16x32xf32>
    %25 = arith.mulf %20, %24 : vector<16x32xf32>
    %26 = vector.broadcast %5 : vector<1x32xf32> to vector<16x32xf32>
    %27 = arith.mulf %25, %26 : vector<16x32xf32>
    %28 = vector.broadcast %7 : vector<1x32xf32> to vector<16x32xf32>
    %29 = arith.addf %27, %28 : vector<16x32xf32>
    %30 = arith.truncf %29 : vector<16x32xf32> to vector<16x32xbf16>
    %c0_12 = arith.constant 0 : index
    %c0_13 = arith.constant 0 : index
    %c0_14 = arith.constant 0 : index
    %31 = vector.load %arg6[%c0_12, %c0_13, %c0_14] : memref<1x32x96xbf16, #tpu.memory_space<vmem>>, vector<1x32x96xbf16>
    %32 = vector.shape_cast %31 : vector<1x32x96xbf16> to vector<32x96xbf16>
    %cst_15 = arith.constant dense<0.000000e+00> : vector<16x96xf32>
    %33 = tpu.matmul %30, %32, %cst_15 {dimension_numbers = #tpu.dot_dimension_numbers<[1], [0], [0], [1], [0, 0, 1, 1], [], []>} : vector<16x32xbf16>, vector<32x96xbf16>, vector<16x96xf32> -> vector<16x96xf32>
    %c0_16 = arith.constant 0 : index
    %c0_17 = arith.constant 0 : index
    %c0_18 = arith.constant 0 : index
    %34 = vector.load %arg7[%c0_16, %c0_17, %c0_18] : memref<1x1x96xf32, #tpu.memory_space<vmem>>, vector<1x1x96xf32>
    %35 = vector.shape_cast %34 : vector<1x1x96xf32> to vector<1x96xf32>
    %36 = vector.broadcast %35 : vector<1x96xf32> to vector<16x96xf32>
    %37 = arith.addf %33, %36 : vector<16x96xf32>
    %38 = vector.extract_strided_slice %37 {offsets = [0, 0], sizes = [8, 96], strides = [1, 1]} : vector<16x96xf32> to vector<8x96xf32>
    %39 = vector.extract_strided_slice %38 {offsets = [0, 0], sizes = [8, 32], strides = [1, 1]} : vector<8x96xf32> to vector<8x32xf32>
    %40 = vector.shape_cast %39 : vector<8x32xf32> to vector<8x4x8xf32>
    %41 = tpu.transpose %40, [1, 0, 2] : vector<8x4x8xf32> -> vector<4x8x8xf32>
    %42 = vector.extract_strided_slice %38 {offsets = [0, 32], sizes = [8, 32], strides = [1, 1]} : vector<8x96xf32> to vector<8x32xf32>
    %43 = vector.shape_cast %42 : vector<8x32xf32> to vector<8x4x8xf32>
    %44 = tpu.transpose %43, [1, 0, 2] : vector<8x4x8xf32> -> vector<4x8x8xf32>
    %45 = vector.extract_strided_slice %38 {offsets = [0, 64], sizes = [8, 32], strides = [1, 1]} : vector<8x96xf32> to vector<8x32xf32>
    %46 = vector.shape_cast %45 : vector<8x32xf32> to vector<8x4x8xf32>
    %47 = tpu.transpose %46, [1, 0, 2] : vector<8x4x8xf32> -> vector<4x8x8xf32>
    %48 = arith.truncf %41 : vector<4x8x8xf32> to vector<4x8x8xbf16>
    %49 = arith.truncf %44 : vector<4x8x8xf32> to vector<4x8x8xbf16>
    "tpu.trace_start"() <{level = 10 : i32, message = "hqd,hkd->hqk"}> : () -> ()
    %cst_19 = arith.constant dense<0.000000e+00> : vector<4x8x8xf32>
    %50 = tpu.matmul %48, %49, %cst_19 {dimension_numbers = #tpu.dot_dimension_numbers<[2], [2], [1], [1], [0, 0, 0, 1, 1, 1], [0], [0]>} : vector<4x8x8xbf16>, vector<4x8x8xbf16>, vector<4x8x8xf32> -> vector<4x8x8xf32>
    "tpu.trace_stop"() : () -> ()
    %c0_20 = arith.constant 0 : index
    %c0_21 = arith.constant 0 : index
    %c0_22 = arith.constant 0 : index
    %51 = vector.load %arg3[%c0_20, %c0_21, %c0_22] : memref<2x1x8xf32, #tpu.memory_space<vmem>>, vector<1x1x8xf32>
    %52 = vector.shape_cast %51 : vector<1x1x8xf32> to vector<1x8xf32>
    %53 = vector.shape_cast %52 : vector<1x8xf32> to vector<1x1x8xf32>
    %54 = vector.broadcast %53 : vector<1x1x8xf32> to vector<4x8x8xf32>
    %55 = arith.addf %50, %54 : vector<4x8x8xf32>
    %cst_23 = arith.constant dense<0xFF800000> : vector<4x8xf32>
    %56 = vector.multi_reduction <maximumf>, %55, %cst_23 [2] : vector<4x8x8xf32> to vector<4x8xf32>
    %57 = vector.shape_cast %56 : vector<4x8xf32> to vector<4x8x1xf32>
    %58 = vector.broadcast %57 : vector<4x8x1xf32> to vector<4x8x8xf32>
    %59 = arith.subf %55, %58 : vector<4x8x8xf32>
    %60 = math.exp %59 : vector<4x8x8xf32>
    %cst_24 = arith.constant dense<0.000000e+00> : vector<4x8xf32>
    %61 = vector.multi_reduction <add>, %60, %cst_24 [2] : vector<4x8x8xf32> to vector<4x8xf32>
    %62 = vector.shape_cast %61 : vector<4x8xf32> to vector<4x8x1xf32>
    %63 = tpu.reciprocal %62 {approx = true} : vector<4x8x1xf32> -> vector<4x8x1xf32>
    %64 = vector.broadcast %63 : vector<4x8x1xf32> to vector<4x8x8xf32>
    %65 = arith.mulf %60, %64 : vector<4x8x8xf32>
    %66 = arith.truncf %65 : vector<4x8x8xf32> to vector<4x8x8xbf16>
    %67 = arith.truncf %47 : vector<4x8x8xf32> to vector<4x8x8xbf16>
    "tpu.trace_start"() <{level = 10 : i32, message = "hqk,hkd->hqd"}> : () -> ()
    %cst_25 = arith.constant dense<0.000000e+00> : vector<4x8x8xf32>
    %68 = tpu.matmul %66, %67, %cst_25 {dimension_numbers = #tpu.dot_dimension_numbers<[2], [1], [1], [2], [0, 0, 0, 1, 1, 2], [0], [0]>} : vector<4x8x8xbf16>, vector<4x8x8xbf16>, vector<4x8x8xf32> -> vector<4x8x8xf32>
    "tpu.trace_stop"() : () -> ()
    %69 = tpu.transpose %68, [1, 0, 2] : vector<4x8x8xf32> -> vector<8x4x8xf32>
    %70 = vector.shape_cast %69 : vector<8x4x8xf32> to vector<8x32xf32>
    %71 = vector.extract_strided_slice %37 {offsets = [8, 0], sizes = [8, 96], strides = [1, 1]} : vector<16x96xf32> to vector<8x96xf32>
    %72 = vector.extract_strided_slice %71 {offsets = [0, 0], sizes = [8, 32], strides = [1, 1]} : vector<8x96xf32> to vector<8x32xf32>
    %73 = vector.shape_cast %72 : vector<8x32xf32> to vector<8x4x8xf32>
    %74 = tpu.transpose %73, [1, 0, 2] : vector<8x4x8xf32> -> vector<4x8x8xf32>
    %75 = vector.extract_strided_slice %71 {offsets = [0, 32], sizes = [8, 32], strides = [1, 1]} : vector<8x96xf32> to vector<8x32xf32>
    %76 = vector.shape_cast %75 : vector<8x32xf32> to vector<8x4x8xf32>
    %77 = tpu.transpose %76, [1, 0, 2] : vector<8x4x8xf32> -> vector<4x8x8xf32>
    %78 = vector.extract_strided_slice %71 {offsets = [0, 64], sizes = [8, 32], strides = [1, 1]} : vector<8x96xf32> to vector<8x32xf32>
    %79 = vector.shape_cast %78 : vector<8x32xf32> to vector<8x4x8xf32>
    %80 = tpu.transpose %79, [1, 0, 2] : vector<8x4x8xf32> -> vector<4x8x8xf32>
    %81 = arith.truncf %74 : vector<4x8x8xf32> to vector<4x8x8xbf16>
    %82 = arith.truncf %77 : vector<4x8x8xf32> to vector<4x8x8xbf16>
    "tpu.trace_start"() <{level = 10 : i32, message = "hqd,hkd->hqk"}> : () -> ()
    %cst_26 = arith.constant dense<0.000000e+00> : vector<4x8x8xf32>
    %83 = tpu.matmul %81, %82, %cst_26 {dimension_numbers = #tpu.dot_dimension_numbers<[2], [2], [1], [1], [0, 0, 0, 1, 1, 1], [0], [0]>} : vector<4x8x8xbf16>, vector<4x8x8xbf16>, vector<4x8x8xf32> -> vector<4x8x8xf32>
    "tpu.trace_stop"() : () -> ()
    %c1 = arith.constant 1 : index
    %c0_27 = arith.constant 0 : index
    %c0_28 = arith.constant 0 : index
    %84 = vector.load %arg3[%c1, %c0_27, %c0_28] : memref<2x1x8xf32, #tpu.memory_space<vmem>>, vector<1x1x8xf32>
    %85 = vector.shape_cast %84 : vector<1x1x8xf32> to vector<1x8xf32>
    %86 = vector.shape_cast %85 : vector<1x8xf32> to vector<1x1x8xf32>
    %87 = vector.broadcast %86 : vector<1x1x8xf32> to vector<4x8x8xf32>
    %88 = arith.addf %83, %87 : vector<4x8x8xf32>
    %cst_29 = arith.constant dense<0xFF800000> : vector<4x8xf32>
    %89 = vector.multi_reduction <maximumf>, %88, %cst_29 [2] : vector<4x8x8xf32> to vector<4x8xf32>
    %90 = vector.shape_cast %89 : vector<4x8xf32> to vector<4x8x1xf32>
    %91 = vector.broadcast %90 : vector<4x8x1xf32> to vector<4x8x8xf32>
    %92 = arith.subf %88, %91 : vector<4x8x8xf32>
    %93 = math.exp %92 : vector<4x8x8xf32>
    %cst_30 = arith.constant dense<0.000000e+00> : vector<4x8xf32>
    %94 = vector.multi_reduction <add>, %93, %cst_30 [2] : vector<4x8x8xf32> to vector<4x8xf32>
    %95 = vector.shape_cast %94 : vector<4x8xf32> to vector<4x8x1xf32>
    %96 = tpu.reciprocal %95 {approx = true} : vector<4x8x1xf32> -> vector<4x8x1xf32>
    %97 = vector.broadcast %96 : vector<4x8x1xf32> to vector<4x8x8xf32>
    %98 = arith.mulf %93, %97 : vector<4x8x8xf32>
    %99 = arith.truncf %98 : vector<4x8x8xf32> to vector<4x8x8xbf16>
    %100 = arith.truncf %80 : vector<4x8x8xf32> to vector<4x8x8xbf16>
    "tpu.trace_start"() <{level = 10 : i32, message = "hqk,hkd->hqd"}> : () -> ()
    %cst_31 = arith.constant dense<0.000000e+00> : vector<4x8x8xf32>
    %101 = tpu.matmul %99, %100, %cst_31 {dimension_numbers = #tpu.dot_dimension_numbers<[2], [1], [1], [2], [0, 0, 0, 1, 1, 2], [0], [0]>} : vector<4x8x8xbf16>, vector<4x8x8xbf16>, vector<4x8x8xf32> -> vector<4x8x8xf32>
    "tpu.trace_stop"() : () -> ()
    %102 = tpu.transpose %101, [1, 0, 2] : vector<4x8x8xf32> -> vector<8x4x8xf32>
    %103 = vector.shape_cast %102 : vector<8x4x8xf32> to vector<8x32xf32>
    %104 = tpu.concatenate %70, %103 in 0 : vector<8x32xf32>, vector<8x32xf32> -> vector<16x32xf32>
    %105 = arith.truncf %104 : vector<16x32xf32> to vector<16x32xbf16>
    %c0_32 = arith.constant 0 : index
    %c0_33 = arith.constant 0 : index
    %c0_34 = arith.constant 0 : index
    %106 = vector.load %arg8[%c0_32, %c0_33, %c0_34] : memref<1x32x32xbf16, #tpu.memory_space<vmem>>, vector<1x32x32xbf16>
    %107 = vector.shape_cast %106 : vector<1x32x32xbf16> to vector<32x32xbf16>
    %cst_35 = arith.constant dense<0.000000e+00> : vector<16x32xf32>
    %108 = tpu.matmul %105, %107, %cst_35 {dimension_numbers = #tpu.dot_dimension_numbers<[1], [0], [0], [1], [0, 0, 1, 1], [], []>} : vector<16x32xbf16>, vector<32x32xbf16>, vector<16x32xf32> -> vector<16x32xf32>
    %c0_36 = arith.constant 0 : index
    %c0_37 = arith.constant 0 : index
    %c0_38 = arith.constant 0 : index
    %109 = vector.load %arg9[%c0_36, %c0_37, %c0_38] : memref<1x1x32xf32, #tpu.memory_space<vmem>>, vector<1x1x32xf32>
    %110 = vector.shape_cast %109 : vector<1x1x32xf32> to vector<1x32xf32>
    %111 = vector.broadcast %110 : vector<1x32xf32> to vector<16x32xf32>
    %112 = arith.addf %108, %111 : vector<16x32xf32>
    %113 = arith.addf %3, %112 : vector<16x32xf32>
    %c0_39 = arith.constant 0 : index
    %c0_40 = arith.constant 0 : index
    %c0_41 = arith.constant 0 : index
    %114 = vector.load %arg10[%c0_39, %c0_40, %c0_41] : memref<1x1x32xf32, #tpu.memory_space<vmem>>, vector<1x1x32xf32>
    %115 = vector.shape_cast %114 : vector<1x1x32xf32> to vector<1x32xf32>
    %c0_42 = arith.constant 0 : index
    %c0_43 = arith.constant 0 : index
    %c0_44 = arith.constant 0 : index
    %116 = vector.load %arg11[%c0_42, %c0_43, %c0_44] : memref<1x1x32xf32, #tpu.memory_space<vmem>>, vector<1x1x32xf32>
    %117 = vector.shape_cast %116 : vector<1x1x32xf32> to vector<1x32xf32>
    %cst_45 = arith.constant dense<0.000000e+00> : vector<16xf32>
    %118 = vector.multi_reduction <add>, %113, %cst_45 [1] : vector<16x32xf32> to vector<16xf32>
    %119 = vector.shape_cast %118 : vector<16xf32> to vector<16x1xf32>
    %cst_46 = arith.constant 3.200000e+01 : f32
    %120 = vector.broadcast %cst_46 : f32 to vector<16x1xf32>
    %121 = arith.divf %119, %120 : vector<16x1xf32>
    %122 = vector.broadcast %121 : vector<16x1xf32> to vector<16x32xf32>
    %123 = arith.subf %113, %122 : vector<16x32xf32>
    %124 = arith.mulf %123, %123 : vector<16x32xf32>
    %cst_47 = arith.constant dense<0.000000e+00> : vector<16xf32>
    %125 = vector.multi_reduction <add>, %124, %cst_47 [1] : vector<16x32xf32> to vector<16xf32>
    %126 = vector.shape_cast %125 : vector<16xf32> to vector<16x1xf32>
    %cst_48 = arith.constant 3.200000e+01 : f32
    %127 = vector.broadcast %cst_48 : f32 to vector<16x1xf32>
    %128 = arith.divf %126, %127 : vector<16x1xf32>
    %129 = vector.broadcast %121 : vector<16x1xf32> to vector<16x32xf32>
    %130 = arith.subf %113, %129 : vector<16x32xf32>
    %cst_49 = arith.constant 9.99999974E-6 : f32
    %131 = vector.broadcast %cst_49 : f32 to vector<16x1xf32>
    %132 = arith.addf %128, %131 : vector<16x1xf32>
    %133 = math.rsqrt %132 : vector<16x1xf32>
    %134 = vector.broadcast %133 : vector<16x1xf32> to vector<16x32xf32>
    %135 = arith.mulf %130, %134 : vector<16x32xf32>
    %136 = vector.broadcast %115 : vector<1x32xf32> to vector<16x32xf32>
    %137 = arith.mulf %135, %136 : vector<16x32xf32>
    %138 = vector.broadcast %117 : vector<1x32xf32> to vector<16x32xf32>
    %139 = arith.addf %137, %138 : vector<16x32xf32>
    %140 = arith.truncf %139 : vector<16x32xf32> to vector<16x32xbf16>
    %c0_50 = arith.constant 0 : index
    %c0_51 = arith.constant 0 : index
    %c0_52 = arith.constant 0 : index
    %141 = vector.load %arg12[%c0_50, %c0_51, %c0_52] : memref<1x32x128xbf16, #tpu.memory_space<vmem>>, vector<1x32x128xbf16>
    %142 = vector.shape_cast %141 : vector<1x32x128xbf16> to vector<32x128xbf16>
    %cst_53 = arith.constant dense<0.000000e+00> : vector<16x128xf32>
    %143 = tpu.matmul %140, %142, %cst_53 {dimension_numbers = #tpu.dot_dimension_numbers<[1], [0], [0], [1], [0, 0, 1, 1], [], []>} : vector<16x32xbf16>, vector<32x128xbf16>, vector<16x128xf32> -> vector<16x128xf32>
    %c0_54 = arith.constant 0 : index
    %c0_55 = arith.constant 0 : index
    %c0_56 = arith.constant 0 : index
    %144 = vector.load %arg13[%c0_54, %c0_55, %c0_56] : memref<1x1x128xf32, #tpu.memory_space<vmem>>, vector<1x1x128xf32>
    %145 = vector.shape_cast %144 : vector<1x1x128xf32> to vector<1x128xf32>
    %146 = vector.broadcast %145 : vector<1x128xf32> to vector<16x128xf32>
    %147 = arith.addf %143, %146 : vector<16x128xf32>
    %cst_57 = arith.constant 1.702000e+00 : f32
    %148 = vector.broadcast %cst_57 : f32 to vector<16x128xf32>
    %149 = arith.mulf %148, %147 : vector<16x128xf32>
    %150 = arith.negf %149 : vector<16x128xf32>
    %151 = math.exp %150 : vector<16x128xf32>
    %cst_58 = arith.constant 1.000000e+00 : f32
    %152 = vector.broadcast %cst_58 : f32 to vector<16x128xf32>
    %153 = arith.addf %152, %151 : vector<16x128xf32>
    %154 = arith.divf %152, %153 : vector<16x128xf32>
    %155 = arith.mulf %147, %154 : vector<16x128xf32>
    %156 = arith.truncf %155 : vector<16x128xf32> to vector<16x128xbf16>
    %c0_59 = arith.constant 0 : index
    %c0_60 = arith.constant 0 : index
    %c0_61 = arith.constant 0 : index
    %157 = vector.load %arg14[%c0_59, %c0_60, %c0_61] : memref<1x128x32xbf16, #tpu.memory_space<vmem>>, vector<1x128x32xbf16>
    %158 = vector.shape_cast %157 : vector<1x128x32xbf16> to vector<128x32xbf16>
    %cst_62 = arith.constant dense<0.000000e+00> : vector<16x32xf32>
    %159 = tpu.matmul %156, %158, %cst_62 {dimension_numbers = #tpu.dot_dimension_numbers<[1], [0], [0], [1], [0, 0, 1, 1], [], []>} : vector<16x128xbf16>, vector<128x32xbf16>, vector<16x32xf32> -> vector<16x32xf32>
    %c0_63 = arith.constant 0 : index
    %c0_64 = arith.constant 0 : index
    %c0_65 = arith.constant 0 : index
    %160 = vector.load %arg15[%c0_63, %c0_64, %c0_65] : memref<1x1x32xf32, #tpu.memory_space<vmem>>, vector<1x1x32xf32>
    %161 = vector.shape_cast %160 : vector<1x1x32xf32> to vector<1x32xf32>
    %162 = vector.broadcast %161 : vector<1x32xf32> to vector<16x32xf32>
    %163 = arith.addf %159, %162 : vector<16x32xf32>
    %164 = arith.addf %113, %163 : vector<16x32xf32>
    %c0_66 = arith.constant 0 : index
    %c0_67 = arith.constant 0 : index
    %165 = vector.load %arg17[%c0_66, %c0_67] : memref<16x32xf32, #tpu.memory_space<vmem>>, vector<16x32xf32>
    tpu.vector_store %arg17[%c0_66, %c0_67], %164 {strides = array<i32>} : memref<16x32xf32, #tpu.memory_space<vmem>>, vector<16x32xf32>,
    %c1_i32 = arith.constant 1 : i32
    %166 = arith.cmpi eq, %arg1, %c1_i32 : i32
    %167 = arith.extui %166 : i1 to i32
    %c0_i32_68 = arith.constant 0 : i32
    %168 = arith.cmpi ne, %167, %c0_i32_68 : i32
    scf.if %168 {
      %c0_69 = arith.constant 0 : index
      %c0_70 = arith.constant 0 : index
      %169 = vector.load %arg16[%c0_69, %c0_70] : memref<16x32xf32, #tpu.memory_space<vmem>>, vector<16x32xf32>
      tpu.vector_store %arg16[%c0_69, %c0_70], %164 {strides = array<i32>} : memref<16x32xf32, #tpu.memory_space<vmem>>, vector<16x32xf32>,
    } else {
    }
    return
  }
  func.func @transform_0(%arg0: i32, %arg1: i32) -> (i32, i32) {
    %c0_i32 = arith.constant 0 : i32
    %c0_i32_0 = arith.constant 0 : i32
    return %arg0, %c0_i32 : i32, i32
  }
  func.func @transform_1(%arg0: i32, %arg1: i32) -> (i32, i32, i32) {
    %c0_i32 = arith.constant 0 : i32
    %c0_i32_0 = arith.constant 0 : i32
    %c0_i32_1 = arith.constant 0 : i32
    return %arg0, %c0_i32, %c0_i32_0 : i32, i32, i32
  }
  func.func @transform_2(%arg0: i32, %arg1: i32) -> (i32, i32, i32) {
    %c0_i32 = arith.constant 0 : i32
    %c0_i32_0 = arith.constant 0 : i32
    %c0_i32_1 = arith.constant 0 : i32
    return %arg1, %c0_i32, %c0_i32_0 : i32, i32, i32
  }
  func.func @transform_3(%arg0: i32, %arg1: i32) -> (i32, i32, i32) {
    %c0_i32 = arith.constant 0 : i32
    %c0_i32_0 = arith.constant 0 : i32
    %c0_i32_1 = arith.constant 0 : i32
    return %arg1, %c0_i32, %c0_i32_0 : i32, i32, i32
  }
  func.func @transform_4(%arg0: i32, %arg1: i32) -> (i32, i32, i32) {
    %c0_i32 = arith.constant 0 : i32
    %c0_i32_0 = arith.constant 0 : i32
    %c0_i32_1 = arith.constant 0 : i32
    return %arg1, %c0_i32, %c0_i32_0 : i32, i32, i32
  }
  func.func @transform_5(%arg0: i32, %arg1: i32) -> (i32, i32, i32) {
    %c0_i32 = arith.constant 0 : i32
    %c0_i32_0 = arith.constant 0 : i32
    %c0_i32_1 = arith.constant 0 : i32
    return %arg1, %c0_i32, %c0_i32_0 : i32, i32, i32
  }
  func.func @transform_6(%arg0: i32, %arg1: i32) -> (i32, i32, i32) {
    %c0_i32 = arith.constant 0 : i32
    %c0_i32_0 = arith.constant 0 : i32
    %c0_i32_1 = arith.constant 0 : i32
    return %arg1, %c0_i32, %c0_i32_0 : i32, i32, i32
  }
  func.func @transform_7(%arg0: i32, %arg1: i32) -> (i32, i32, i32) {
    %c0_i32 = arith.constant 0 : i32
    %c0_i32_0 = arith.constant 0 : i32
    %c0_i32_1 = arith.constant 0 : i32
    return %arg1, %c0_i32, %c0_i32_0 : i32, i32, i32
  }
  func.func @transform_8(%arg0: i32, %arg1: i32) -> (i32, i32, i32) {
    %c0_i32 = arith.constant 0 : i32
    %c0_i32_0 = arith.constant 0 : i32
    %c0_i32_1 = arith.constant 0 : i32
    return %arg1, %c0_i32, %c0_i32_0 : i32, i32, i32
  }
  func.func @transform_9(%arg0: i32, %arg1: i32) -> (i32, i32, i32) {
    %c0_i32 = arith.constant 0 : i32
    %c0_i32_0 = arith.constant 0 : i32
    %c0_i32_1 = arith.constant 0 : i32
    return %arg1, %c0_i32, %c0_i32_0 : i32, i32, i32
  }
  func.func @transform_10(%arg0: i32, %arg1: i32) -> (i32, i32, i32) {
    %c0_i32 = arith.constant 0 : i32
    %c0_i32_0 = arith.constant 0 : i32
    %c0_i32_1 = arith.constant 0 : i32
    return %arg1, %c0_i32, %c0_i32_0 : i32, i32, i32
  }
  func.func @transform_11(%arg0: i32, %arg1: i32) -> (i32, i32, i32) {
    %c0_i32 = arith.constant 0 : i32
    %c0_i32_0 = arith.constant 0 : i32
    %c0_i32_1 = arith.constant 0 : i32
    return %arg1, %c0_i32, %c0_i32_0 : i32, i32, i32
  }
  func.func @transform_12(%arg0: i32, %arg1: i32) -> (i32, i32, i32) {
    %c0_i32 = arith.constant 0 : i32
    %c0_i32_0 = arith.constant 0 : i32
    %c0_i32_1 = arith.constant 0 : i32
    return %arg1, %c0_i32, %c0_i32_0 : i32, i32, i32
  }
  func.func @transform_13(%arg0: i32, %arg1: i32) -> (i32, i32, i32) {
    %c0_i32 = arith.constant 0 : i32
    %c0_i32_0 = arith.constant 0 : i32
    %c0_i32_1 = arith.constant 0 : i32
    return %arg1, %c0_i32, %c0_i32_0 : i32, i32, i32
  }
  func.func @transform_14(%arg0: i32, %arg1: i32) -> (i32, i32) {
    %c0_i32 = arith.constant 0 : i32
    %c0_i32_0 = arith.constant 0 : i32
    return %arg0, %c0_i32 : i32, i32
  }
}

</mosaic_0001>

<llo_original>
// kernel: tpu_custom_call.1
$region0: #{tpu_custom_call.1}
  #allocation0 [shape = 'u32[]', space=smem, size = 0x4, offset = 0x4, fixed_abs, tag = 'smem constant byte address 0x4 - core index']
  #allocation1 [shape = 'u32[144,128]{1,0:T(1,128)}', space=vmem, size = 0x12000, scoped, tag = 'internal scratch']
  #allocation2 [shape = 'f32[16,32]{1,0:T(8,128)}', space=vmem, size = 0x2000, scoped, tag = 'scratch operand']
  %s0 = inlined_call_operand.vmem [shape: f32[16,32], index: 0, kind: input, shape index: {}]
  %s1 = inlined_call_operand.vmem [shape: f32[2,1,8], index: 1, kind: input, shape index: {}]
  %s2 = inlined_call_operand.vmem [shape: f32[2,1,32], index: 2, kind: input, shape index: {}]
  %s3 = inlined_call_operand.vmem [shape: f32[2,1,32], index: 3, kind: input, shape index: {}]
  %s4 = inlined_call_operand.vmem [shape: bf16[2,32,96], index: 4, kind: input, shape index: {}]
  %s5 = inlined_call_operand.vmem [shape: f32[2,1,96], index: 5, kind: input, shape index: {}]
  %s6 = inlined_call_operand.vmem [shape: bf16[2,32,32], index: 6, kind: input, shape index: {}]
  %s7 = inlined_call_operand.vmem [shape: f32[2,1,32], index: 7, kind: input, shape index: {}]
  %s8 = inlined_call_operand.vmem [shape: f32[2,1,32], index: 8, kind: input, shape index: {}]
  %s9 = inlined_call_operand.vmem [shape: f32[2,1,32], index: 9, kind: input, shape index: {}]
  %s10 = inlined_call_operand.vmem [shape: bf16[2,32,128], index: 10, kind: input, shape index: {}]
  %s11 = inlined_call_operand.vmem [shape: f32[2,1,128], index: 11, kind: input, shape index: {}]
  %s12 = inlined_call_operand.vmem [shape: bf16[2,128,32], index: 12, kind: input, shape index: {}]
  %s13 = inlined_call_operand.vmem [shape: f32[2,1,32], index: 13, kind: input, shape index: {}]
  %s14 = inlined_call_operand.hbm [shape: f32[16,32], index: 14, kind: output, shape index: {}]
  %s15 = sld [smem:[#allocation0]]
  $region97: #{tpu_custom_call.1} parent=0
    _
  %s17 = ssub.s32 1, %s15
  %s18 = scalar_select 0, %s17, %s15
  $region1: #{tpu_custom_call.1} parent=0
    #allocation3 [shape = 'u8[8192]{0}', space=vmem, size = 0x2000, scoped, tag = 'output window, operand 0, single buffered']
    #allocation4 [shape = 's32[2]{0}', space=sflag, size = 0x8, scoped, tag = 'scoped memory for tpu_custom_call.1']
    %19 = vsyncpa [#allocation4], 0
    loop: start=0, step=1, limit=4
    $region2: #{tpu_custom_call.1} parent=1 // loop_pre_header
      _
    $region3: #{tpu_custom_call.1} parent=1 // loop_header
      %s21 = sphi 0, %s25
      %p22 = scmp.ge.s32.totalorder %s21, 4
      %s28 = sphi 0, %s40
      %s29 = sphi 0, %s36
      %s30 = sphi 0, %s28
      %s31 = sphi 0, %s29
      %s32 = sphi 0, %s30
      %s33 = sphi 0, %s31
      %s43 = sphi 0, %s45
      %s46 = sphi 0, %s43
      %s47 = sphi 0, %s46
      %s63 = sphi 0, %s47
      %s69 = sphi 0, %s71
      %s72 = sphi 0, %s69
      %s73 = sphi 0, %s72
      %s89 = sphi 0, %s73
      %s95 = sphi 0, %s97
      %s98 = sphi 0, %s95
      %s99 = sphi 0, %s98
      %s115 = sphi 0, %s99
      %s121 = sphi 0, %s123
      %s124 = sphi 0, %s121
      %s125 = sphi 0, %s124
      %s141 = sphi 0, %s125
      %s147 = sphi 0, %s149
      %s150 = sphi 0, %s147
      %s151 = sphi 0, %s150
      %s167 = sphi 0, %s151
      %s173 = sphi 0, %s175
      %s176 = sphi 0, %s173
      %s177 = sphi 0, %s176
      %s193 = sphi 0, %s177
      %s199 = sphi 0, %s201
      %s202 = sphi 0, %s199
      %s203 = sphi 0, %s202
      %s219 = sphi 0, %s203
      %s225 = sphi 0, %s227
      %s228 = sphi 0, %s225
      %s229 = sphi 0, %s228
      %s245 = sphi 0, %s229
      %s251 = sphi 0, %s253
      %s254 = sphi 0, %s251
      %s255 = sphi 0, %s254
      %s271 = sphi 0, %s255
      %s277 = sphi 0, %s279
      %s280 = sphi 0, %s277
      %s281 = sphi 0, %s280
      %s297 = sphi 0, %s281
      %s303 = sphi 0, %s305
      %s306 = sphi 0, %s303
      %s307 = sphi 0, %s306
      %s323 = sphi 0, %s307
      %s329 = sphi 0, %s331
      %s332 = sphi 0, %s329
      %s333 = sphi 0, %s332
      %s349 = sphi 0, %s333
      %s355 = sphi 0, %s357
      %s358 = sphi 0, %s355
      %s359 = sphi 0, %s358
      %s375 = sphi 0, %s359
      %s381 = sphi 0, %s383
      %s384 = sphi 0, %s381
      %s385 = sphi 0, %s384
      %s401 = sphi 0, %s385
      %s407 = sphi 0, %s409
      %s410 = sphi 0, %s407
      %s411 = sphi 0, %s410
      %s427 = sphi 0, %s411
    $region4: #{tpu_custom_call.1} parent=1 // loop_header_branch
      %24 = sbr.rel (%p22) target = $region8
    $region5: #{tpu_custom_call.1} parent=1 // loop_body
      %s26 = ssub.s32 %s21, 1
      %s27 = ssub.s32 %s21, 2
      %s34 = sadd.s32 1, %s29
      %p35 = scmp.ge.s32.totalorder %s34, 2
      %s36 = scalar_select %p35, 0, %s34
      %s37 = sadd.s32 1, %s28
      %s38 = scalar_select %p35, %s37, %s28
      %p39 = scmp.ge.s32.totalorder %s38, 1
      %s40 = scalar_select %p39, 0, %s38
      %s41 = ssub.s32 %s28, %s40
      %p42 = scmp.eq.s32.totalorder %s41, 0
      %s44 = sadd.s32 %s43, 1
      %s45 = scalar_select %p42, %s43, %s44
      %p48 = pneg %p42
      %p49 = scmp.eq.s32.totalorder %s21, 1
      %p50 = por %p48, %p49
      %p51 = scmp.ne.s32.totalorder %s43, %s46
      %p52 = scmp.eq.s32.totalorder %s21, 0
      %p53 = por %p51, %p52
      %p54 = scmp.ne.s32.totalorder %s43, %s46
      %p55 = scmp.eq.s32.totalorder %s26, 1
      %p56 = por %p54, %p55
      %p57 = scmp.ne.s32.totalorder %s46, %s47
      %p58 = scmp.eq.s32.totalorder %s26, 0
      %p59 = por %p57, %p58
      %p60 = scmp.ne.s32.totalorder %s46, %s47
      %p61 = scmp.eq.s32.totalorder %s27, 1
      %p62 = por %p60, %p61
      %p64 = scmp.ne.s32.totalorder %s47, %s63
      %p65 = scmp.eq.s32.totalorder %s27, 0
      %p66 = por %p64, %p65
      %s67 = ssub.s32 %s28, %s40
      %p68 = scmp.eq.s32.totalorder %s67, 0
      %s70 = sadd.s32 %s69, 1
      %s71 = scalar_select %p68, %s69, %s70
      %p74 = pneg %p68
      %p75 = scmp.eq.s32.totalorder %s21, 1
      %p76 = por %p74, %p75
      %p77 = scmp.ne.s32.totalorder %s69, %s72
      %p78 = scmp.eq.s32.totalorder %s21, 0
      %p79 = por %p77, %p78
      %p80 = scmp.ne.s32.totalorder %s69, %s72
      %p81 = scmp.eq.s32.totalorder %s26, 1
      %p82 = por %p80, %p81
      %p83 = scmp.ne.s32.totalorder %s72, %s73
      %p84 = scmp.eq.s32.totalorder %s26, 0
      %p85 = por %p83, %p84
      %p86 = scmp.ne.s32.totalorder %s72, %s73
      %p87 = scmp.eq.s32.totalorder %s27, 1
      %p88 = por %p86, %p87
      %p90 = scmp.ne.s32.totalorder %s73, %s89
      %p91 = scmp.eq.s32.totalorder %s27, 0
      %p92 = por %p90, %p91
      %s93 = ssub.s32 %s29, %s36
      %p94 = scmp.eq.s32.totalorder %s93, 0
      %s96 = sadd.s32 %s95, 1
      %s97 = scalar_select %p94, %s95, %s96
      %p100 = pneg %p94
      %p101 = scmp.eq.s32.totalorder %s21, 1
      %p102 = por %p100, %p101
      %p103 = scmp.ne.s32.totalorder %s95, %s98
      %p104 = scmp.eq.s32.totalorder %s21, 0
      %p105 = por %p103, %p104
      %p106 = scmp.ne.s32.totalorder %s95, %s98
      %p107 = scmp.eq.s32.totalorder %s26, 1
      %p108 = por %p106, %p107
      %p109 = scmp.ne.s32.totalorder %s98, %s99
      %p110 = scmp.eq.s32.totalorder %s26, 0
      %p111 = por %p109, %p110
      %p112 = scmp.ne.s32.totalorder %s98, %s99
      %p113 = scmp.eq.s32.totalorder %s27, 1
      %p114 = por %p112, %p113
      %p116 = scmp.ne.s32.totalorder %s99, %s115
      %p117 = scmp.eq.s32.totalorder %s27, 0
      %p118 = por %p116, %p117
      %s119 = ssub.s32 %s29, %s36
      %p120 = scmp.eq.s32.totalorder %s119, 0
      %s122 = sadd.s32 %s121, 1
      %s123 = scalar_select %p120, %s121, %s122
      %p126 = pneg %p120
      %p127 = scmp.eq.s32.totalorder %s21, 1
      %p128 = por %p126, %p127
      %p129 = scmp.ne.s32.totalorder %s121, %s124
      %p130 = scmp.eq.s32.totalorder %s21, 0
      %p131 = por %p129, %p130
      %p132 = scmp.ne.s32.totalorder %s121, %s124
      %p133 = scmp.eq.s32.totalorder %s26, 1
      %p134 = por %p132, %p133
      %p135 = scmp.ne.s32.totalorder %s124, %s125
      %p136 = scmp.eq.s32.totalorder %s26, 0
      %p137 = por %p135, %p136
      %p138 = scmp.ne.s32.totalorder %s124, %s125
      %p139 = scmp.eq.s32.totalorder %s27, 1
      %p140 = por %p138, %p139
      %p142 = scmp.ne.s32.totalorder %s125, %s141
      %p143 = scmp.eq.s32.totalorder %s27, 0
      %p144 = por %p142, %p143
      %s145 = ssub.s32 %s29, %s36
      %p146 = scmp.eq.s32.totalorder %s145, 0
      %s148 = sadd.s32 %s147, 1
      %s149 = scalar_select %p146, %s147, %s148
      %p152 = pneg %p146
      %p153 = scmp.eq.s32.totalorder %s21, 1
      %p154 = por %p152, %p153
      %p155 = scmp.ne.s32.totalorder %s147, %s150
      %p156 = scmp.eq.s32.totalorder %s21, 0
      %p157 = por %p155, %p156
      %p158 = scmp.ne.s32.totalorder %s147, %s150
      %p159 = scmp.eq.s32.totalorder %s26, 1
      %p160 = por %p158, %p159
      %p161 = scmp.ne.s32.totalorder %s150, %s151
      %p162 = scmp.eq.s32.totalorder %s26, 0
      %p163 = por %p161, %p162
      %p164 = scmp.ne.s32.totalorder %s150, %s151
      %p165 = scmp.eq.s32.totalorder %s27, 1
      %p166 = por %p164, %p165
      %p168 = scmp.ne.s32.totalorder %s151, %s167
      %p169 = scmp.eq.s32.totalorder %s27, 0
      %p170 = por %p168, %p169
      %s171 = ssub.s32 %s29, %s36
      %p172 = scmp.eq.s32.totalorder %s171, 0
      %s174 = sadd.s32 %s173, 1
      %s175 = scalar_select %p172, %s173, %s174
      %p178 = pneg %p172
      %p179 = scmp.eq.s32.totalorder %s21, 1
      %p180 = por %p178, %p179
      %p181 = scmp.ne.s32.totalorder %s173, %s176
      %p182 = scmp.eq.s32.totalorder %s21, 0
      %p183 = por %p181, %p182
      %p184 = scmp.ne.s32.totalorder %s173, %s176
      %p185 = scmp.eq.s32.totalorder %s26, 1
      %p186 = por %p184, %p185
      %p187 = scmp.ne.s32.totalorder %s176, %s177
      %p188 = scmp.eq.s32.totalorder %s26, 0
      %p189 = por %p187, %p188
      %p190 = scmp.ne.s32.totalorder %s176, %s177
      %p191 = scmp.eq.s32.totalorder %s27, 1
      %p192 = por %p190, %p191
      %p194 = scmp.ne.s32.totalorder %s177, %s193
      %p195 = scmp.eq.s32.totalorder %s27, 0
      %p196 = por %p194, %p195
      %s197 = ssub.s32 %s29, %s36
      %p198 = scmp.eq.s32.totalorder %s197, 0
      %s200 = sadd.s32 %s199, 1
      %s201 = scalar_select %p198, %s199, %s200
      %p204 = pneg %p198
      %p205 = scmp.eq.s32.totalorder %s21, 1
      %p206 = por %p204, %p205
      %p207 = scmp.ne.s32.totalorder %s199, %s202
      %p208 = scmp.eq.s32.totalorder %s21, 0
      %p209 = por %p207, %p208
      %p210 = scmp.ne.s32.totalorder %s199, %s202
      %p211 = scmp.eq.s32.totalorder %s26, 1
      %p212 = por %p210, %p211
      %p213 = scmp.ne.s32.totalorder %s202, %s203
      %p214 = scmp.eq.s32.totalorder %s26, 0
      %p215 = por %p213, %p214
      %p216 = scmp.ne.s32.totalorder %s202, %s203
      %p217 = scmp.eq.s32.totalorder %s27, 1
      %p218 = por %p216, %p217
      %p220 = scmp.ne.s32.totalorder %s203, %s219
      %p221 = scmp.eq.s32.totalorder %s27, 0
      %p222 = por %p220, %p221
      %s223 = ssub.s32 %s29, %s36
      %p224 = scmp.eq.s32.totalorder %s223, 0
      %s226 = sadd.s32 %s225, 1
      %s227 = scalar_select %p224, %s225, %s226
      %p230 = pneg %p224
      %p231 = scmp.eq.s32.totalorder %s21, 1
      %p232 = por %p230, %p231
      %p233 = scmp.ne.s32.totalorder %s225, %s228
      %p234 = scmp.eq.s32.totalorder %s21, 0
      %p235 = por %p233, %p234
      %p236 = scmp.ne.s32.totalorder %s225, %s228
      %p237 = scmp.eq.s32.totalorder %s26, 1
      %p238 = por %p236, %p237
      %p239 = scmp.ne.s32.totalorder %s228, %s229
      %p240 = scmp.eq.s32.totalorder %s26, 0
      %p241 = por %p239, %p240
      %p242 = scmp.ne.s32.totalorder %s228, %s229
      %p243 = scmp.eq.s32.totalorder %s27, 1
      %p244 = por %p242, %p243
      %p246 = scmp.ne.s32.totalorder %s229, %s245
      %p247 = scmp.eq.s32.totalorder %s27, 0
      %p248 = por %p246, %p247
      %s249 = ssub.s32 %s29, %s36
      %p250 = scmp.eq.s32.totalorder %s249, 0
      %s252 = sadd.s32 %s251, 1
      %s253 = scalar_select %p250, %s251, %s252
      %p256 = pneg %p250
      %p257 = scmp.eq.s32.totalorder %s21, 1
      %p258 = por %p256, %p257
      %p259 = scmp.ne.s32.totalorder %s251, %s254
      %p260 = scmp.eq.s32.totalorder %s21, 0
      %p261 = por %p259, %p260
      %p262 = scmp.ne.s32.totalorder %s251, %s254
      %p263 = scmp.eq.s32.totalorder %s26, 1
      %p264 = por %p262, %p263
      %p265 = scmp.ne.s32.totalorder %s254, %s255
      %p266 = scmp.eq.s32.totalorder %s26, 0
      %p267 = por %p265, %p266
      %p268 = scmp.ne.s32.totalorder %s254, %s255
      %p269 = scmp.eq.s32.totalorder %s27, 1
      %p270 = por %p268, %p269
      %p272 = scmp.ne.s32.totalorder %s255, %s271
      %p273 = scmp.eq.s32.totalorder %s27, 0
      %p274 = por %p272, %p273
      %s275 = ssub.s32 %s29, %s36
      %p276 = scmp.eq.s32.totalorder %s275, 0
      %s278 = sadd.s32 %s277, 1
      %s279 = scalar_select %p276, %s277, %s278
      %p282 = pneg %p276
      %p283 = scmp.eq.s32.totalorder %s21, 1
      %p284 = por %p282, %p283
      %p285 = scmp.ne.s32.totalorder %s277, %s280
      %p286 = scmp.eq.s32.totalorder %s21, 0
      %p287 = por %p285, %p286
      %p288 = scmp.ne.s32.totalorder %s277, %s280
      %p289 = scmp.eq.s32.totalorder %s26, 1
      %p290 = por %p288, %p289
      %p291 = scmp.ne.s32.totalorder %s280, %s281
      %p292 = scmp.eq.s32.totalorder %s26, 0
      %p293 = por %p291, %p292
      %p294 = scmp.ne.s32.totalorder %s280, %s281
      %p295 = scmp.eq.s32.totalorder %s27, 1
      %p296 = por %p294, %p295
      %p298 = scmp.ne.s32.totalorder %s281, %s297
      %p299 = scmp.eq.s32.totalorder %s27, 0
      %p300 = por %p298, %p299
      %s301 = ssub.s32 %s29, %s36
      %p302 = scmp.eq.s32.totalorder %s301, 0
      %s304 = sadd.s32 %s303, 1
      %s305 = scalar_select %p302, %s303, %s304
      %p308 = pneg %p302
      %p309 = scmp.eq.s32.totalorder %s21, 1
      %p310 = por %p308, %p309
      %p311 = scmp.ne.s32.totalorder %s303, %s306
      %p312 = scmp.eq.s32.totalorder %s21, 0
      %p313 = por %p311, %p312
      %p314 = scmp.ne.s32.totalorder %s303, %s306
      %p315 = scmp.eq.s32.totalorder %s26, 1
      %p316 = por %p314, %p315
      %p317 = scmp.ne.s32.totalorder %s306, %s307
      %p318 = scmp.eq.s32.totalorder %s26, 0
      %p319 = por %p317, %p318
      %p320 = scmp.ne.s32.totalorder %s306, %s307
      %p321 = scmp.eq.s32.totalorder %s27, 1
      %p322 = por %p320, %p321
      %p324 = scmp.ne.s32.totalorder %s307, %s323
      %p325 = scmp.eq.s32.totalorder %s27, 0
      %p326 = por %p324, %p325
      %s327 = ssub.s32 %s29, %s36
      %p328 = scmp.eq.s32.totalorder %s327, 0
      %s330 = sadd.s32 %s329, 1
      %s331 = scalar_select %p328, %s329, %s330
      %p334 = pneg %p328
      %p335 = scmp.eq.s32.totalorder %s21, 1
      %p336 = por %p334, %p335
      %p337 = scmp.ne.s32.totalorder %s329, %s332
      %p338 = scmp.eq.s32.totalorder %s21, 0
      %p339 = por %p337, %p338
      %p340 = scmp.ne.s32.totalorder %s329, %s332
      %p341 = scmp.eq.s32.totalorder %s26, 1
      %p342 = por %p340, %p341
      %p343 = scmp.ne.s32.totalorder %s332, %s333
      %p344 = scmp.eq.s32.totalorder %s26, 0
      %p345 = por %p343, %p344
      %p346 = scmp.ne.s32.totalorder %s332, %s333
      %p347 = scmp.eq.s32.totalorder %s27, 1
      %p348 = por %p346, %p347
      %p350 = scmp.ne.s32.totalorder %s333, %s349
      %p351 = scmp.eq.s32.totalorder %s27, 0
      %p352 = por %p350, %p351
      %s353 = ssub.s32 %s29, %s36
      %p354 = scmp.eq.s32.totalorder %s353, 0
      %s356 = sadd.s32 %s355, 1
      %s357 = scalar_select %p354, %s355, %s356
      %p360 = pneg %p354
      %p361 = scmp.eq.s32.totalorder %s21, 1
      %p362 = por %p360, %p361
      %p363 = scmp.ne.s32.totalorder %s355, %s358
      %p364 = scmp.eq.s32.totalorder %s21, 0
      %p365 = por %p363, %p364
      %p366 = scmp.ne.s32.totalorder %s355, %s358
      %p367 = scmp.eq.s32.totalorder %s26, 1
      %p368 = por %p366, %p367
      %p369 = scmp.ne.s32.totalorder %s358, %s359
      %p370 = scmp.eq.s32.totalorder %s26, 0
      %p371 = por %p369, %p370
      %p372 = scmp.ne.s32.totalorder %s358, %s359
      %p373 = scmp.eq.s32.totalorder %s27, 1
      %p374 = por %p372, %p373
      %p376 = scmp.ne.s32.totalorder %s359, %s375
      %p377 = scmp.eq.s32.totalorder %s27, 0
      %p378 = por %p376, %p377
      %s379 = ssub.s32 %s29, %s36
      %p380 = scmp.eq.s32.totalorder %s379, 0
      %s382 = sadd.s32 %s381, 1
      %s383 = scalar_select %p380, %s381, %s382
      %p386 = pneg %p380
      %p387 = scmp.eq.s32.totalorder %s21, 1
      %p388 = por %p386, %p387
      %p389 = scmp.ne.s32.totalorder %s381, %s384
      %p390 = scmp.eq.s32.totalorder %s21, 0
      %p391 = por %p389, %p390
      %p392 = scmp.ne.s32.totalorder %s381, %s384
      %p393 = scmp.eq.s32.totalorder %s26, 1
      %p394 = por %p392, %p393
      %p395 = scmp.ne.s32.totalorder %s384, %s385
      %p396 = scmp.eq.s32.totalorder %s26, 0
      %p397 = por %p395, %p396
      %p398 = scmp.ne.s32.totalorder %s384, %s385
      %p399 = scmp.eq.s32.totalorder %s27, 1
      %p400 = por %p398, %p399
      %p402 = scmp.ne.s32.totalorder %s385, %s401
      %p403 = scmp.eq.s32.totalorder %s27, 0
      %p404 = por %p402, %p403
      %s405 = ssub.s32 %s28, %s40
      %p406 = scmp.eq.s32.totalorder %s405, 0
      %s408 = sadd.s32 %s407, 1
      %s409 = scalar_select %p406, %s407, %s408
      %p412 = pneg %p406
      %p413 = scmp.eq.s32.totalorder %s21, 1
      %p414 = por %p412, %p413
      %p415 = scmp.ne.s32.totalorder %s407, %s410
      %p416 = scmp.eq.s32.totalorder %s21, 0
      %p417 = por %p415, %p416
      %p418 = scmp.ne.s32.totalorder %s407, %s410
      %p419 = scmp.eq.s32.totalorder %s26, 1
      %p420 = por %p418, %p419
      %p421 = scmp.ne.s32.totalorder %s410, %s411
      %p422 = scmp.eq.s32.totalorder %s26, 0
      %p423 = por %p421, %p422
      %p424 = scmp.ne.s32.totalorder %s410, %s411
      %p425 = scmp.eq.s32.totalorder %s27, 1
      %p426 = por %p424, %p425
      %p428 = scmp.ne.s32.totalorder %s411, %s427
      %p429 = scmp.eq.s32.totalorder %s27, 0
      %p430 = por %p428, %p429
      %p431 = scmp.le.s32.totalorder 1, %s21
      %p432 = scmp.lt.s32.totalorder %s21, 3
      %p433 = pnand %p431, %p432
      %p434 = pneg %p433
      // Predicated region
      $region9: #{tpu_custom_call.1} parent=5 // pred_check
        _
      $region10: #{tpu_custom_call.1} parent=5 // pred_check_branch
        %436 = sbr.rel (%p433) target = $region12
      $region11: #{tpu_custom_call.1} parent=5 // pred_region
        %s437 = ssub.s32 %s21, 1
        // Predicated region
        $region13: #{tpu_custom_call.1} parent=11 // pred_check
          %p438 = pneg %p59
        $region14: #{tpu_custom_call.1} parent=11 // pred_check_branch
          %440 = sbr.rel (%p438) target = $region16
        $region15: #{tpu_custom_call.1} parent=11 // pred_region
          %s441 = smul.u32 2, %s30
          %p442 = scmp.lt.s32.totalorder %s441, 1
          %s443 = scalar_select %p442, %s441, 1
          %s444 = smul.addr %s443, 8
          %s445 = scalar_lea.vmem %s0, %s444
          %s446 = smul.u32 2, %s30
        $region16: #{tpu_custom_call.1} parent=11 // pred_fallthru
          _
        // Predicated region
        $region17: #{tpu_custom_call.1} parent=11 // pred_check
          %p447 = pneg %p85
        $region18: #{tpu_custom_call.1} parent=11 // pred_check_branch
          %449 = sbr.rel (%p447) target = $region20
        $region19: #{tpu_custom_call.1} parent=11 // pred_region
          %s450 = smul.u32 2, %s30
          %p451 = scmp.lt.s32.totalorder %s450, 1
          %s452 = scalar_select %p451, %s450, 1
          %s453 = scalar_lea.vmem %s1, %s452
          %s454 = smul.u32 2, %s30
        $region20: #{tpu_custom_call.1} parent=11 // pred_fallthru
          _
      $region12: #{tpu_custom_call.1} parent=5 // pred_fallthru
        _
      %p455 = scmp.lt.s32.totalorder %s21, 2
      // Predicated region
      $region21: #{tpu_custom_call.1} parent=5 // pred_check
        %p456 = pneg %p455
      $region22: #{tpu_custom_call.1} parent=5 // pred_check_branch
        %458 = sbr.rel (%p456) target = $region24
      $region23: #{tpu_custom_call.1} parent=5 // pred_region
        // Predicated region
        $region25: #{tpu_custom_call.1} parent=23 // pred_check
          %p459 = pneg %p105
        $region26: #{tpu_custom_call.1} parent=23 // pred_check_branch
          %461 = sbr.rel (%p459) target = $region28
        $region27: #{tpu_custom_call.1} parent=23 // pred_region
          %p462 = scmp.lt.s32.totalorder %s29, 1
          %s463 = scalar_select %p462, %s29, 1
          %s464 = scalar_lea.vmem %s2, %s463
        $region28: #{tpu_custom_call.1} parent=23 // pred_fallthru
          _
        // Predicated region
        $region29: #{tpu_custom_call.1} parent=23 // pred_check
          %p465 = pneg %p131
        $region30: #{tpu_custom_call.1} parent=23 // pred_check_branch
          %467 = sbr.rel (%p465) target = $region32
        $region31: #{tpu_custom_call.1} parent=23 // pred_region
          %p468 = scmp.lt.s32.totalorder %s29, 1
          %s469 = scalar_select %p468, %s29, 1
          %s470 = scalar_lea.vmem %s3, %s469
        $region32: #{tpu_custom_call.1} parent=23 // pred_fallthru
          _
        // Predicated region
        $region33: #{tpu_custom_call.1} parent=23 // pred_check
          %p471 = pneg %p157
        $region34: #{tpu_custom_call.1} parent=23 // pred_check_branch
          %473 = sbr.rel (%p471) target = $region36
        $region35: #{tpu_custom_call.1} parent=23 // pred_region
          %p474 = scmp.lt.s32.totalorder %s29, 1
          %s475 = scalar_select %p474, %s29, 1
          %s476 = smul.addr %s475, 4
          %s477 = smul.addr %s476, 4
          %s478 = scalar_lea.vmem %s4, %s477
        $region36: #{tpu_custom_call.1} parent=23 // pred_fallthru
          _
        // Predicated region
        $region37: #{tpu_custom_call.1} parent=23 // pred_check
          %p479 = pneg %p183
        $region38: #{tpu_custom_call.1} parent=23 // pred_check_branch
          %481 = sbr.rel (%p479) target = $region40
        $region39: #{tpu_custom_call.1} parent=23 // pred_region
          %p482 = scmp.lt.s32.totalorder %s29, 1
          %s483 = scalar_select %p482, %s29, 1
          %s484 = scalar_lea.vmem %s5, %s483
        $region40: #{tpu_custom_call.1} parent=23 // pred_fallthru
          _
        // Predicated region
        $region41: #{tpu_custom_call.1} parent=23 // pred_check
          %p485 = pneg %p209
        $region42: #{tpu_custom_call.1} parent=23 // pred_check_branch
          %487 = sbr.rel (%p485) target = $region44
        $region43: #{tpu_custom_call.1} parent=23 // pred_region
          %p488 = scmp.lt.s32.totalorder %s29, 1
          %s489 = scalar_select %p488, %s29, 1
          %s490 = smul.addr %s489, 4
          %s491 = smul.addr %s490, 4
          %s492 = scalar_lea.vmem %s6, %s491
        $region44: #{tpu_custom_call.1} parent=23 // pred_fallthru
          _
        // Predicated region
        $region45: #{tpu_custom_call.1} parent=23 // pred_check
          %p493 = pneg %p235
        $region46: #{tpu_custom_call.1} parent=23 // pred_check_branch
          %495 = sbr.rel (%p493) target = $region48
        $region47: #{tpu_custom_call.1} parent=23 // pred_region
          %p496 = scmp.lt.s32.totalorder %s29, 1
          %s497 = scalar_select %p496, %s29, 1
          %s498 = scalar_lea.vmem %s7, %s497
        $region48: #{tpu_custom_call.1} parent=23 // pred_fallthru
          _
        // Predicated region
        $region49: #{tpu_custom_call.1} parent=23 // pred_check
          %p499 = pneg %p261
        $region50: #{tpu_custom_call.1} parent=23 // pred_check_branch
          %501 = sbr.rel (%p499) target = $region52
        $region51: #{tpu_custom_call.1} parent=23 // pred_region
          %p502 = scmp.lt.s32.totalorder %s29, 1
          %s503 = scalar_select %p502, %s29, 1
          %s504 = scalar_lea.vmem %s8, %s503
        $region52: #{tpu_custom_call.1} parent=23 // pred_fallthru
          _
        // Predicated region
        $region53: #{tpu_custom_call.1} parent=23 // pred_check
          %p505 = pneg %p287
        $region54: #{tpu_custom_call.1} parent=23 // pred_check_branch
          %507 = sbr.rel (%p505) target = $region56
        $region55: #{tpu_custom_call.1} parent=23 // pred_region
          %p508 = scmp.lt.s32.totalorder %s29, 1
          %s509 = scalar_select %p508, %s29, 1
          %s510 = scalar_lea.vmem %s9, %s509
        $region56: #{tpu_custom_call.1} parent=23 // pred_fallthru
          _
        // Predicated region
        $region57: #{tpu_custom_call.1} parent=23 // pred_check
          %p511 = pneg %p313
        $region58: #{tpu_custom_call.1} parent=23 // pred_check_branch
          %513 = sbr.rel (%p511) target = $region60
        $region59: #{tpu_custom_call.1} parent=23 // pred_region
          %p514 = scmp.lt.s32.totalorder %s29, 1
          %s515 = scalar_select %p514, %s29, 1
          %s516 = smul.addr %s515, 4
          %s517 = smul.addr %s516, 4
          %s518 = scalar_lea.vmem %s10, %s517
        $region60: #{tpu_custom_call.1} parent=23 // pred_fallthru
          _
        // Predicated region
        $region61: #{tpu_custom_call.1} parent=23 // pred_check
          %p519 = pneg %p339
        $region62: #{tpu_custom_call.1} parent=23 // pred_check_branch
          %521 = sbr.rel (%p519) target = $region64
        $region63: #{tpu_custom_call.1} parent=23 // pred_region
          %p522 = scmp.lt.s32.totalorder %s29, 1
          %s523 = scalar_select %p522, %s29, 1
          %s524 = scalar_lea.vmem %s11, %s523
        $region64: #{tpu_custom_call.1} parent=23 // pred_fallthru
          _
        // Predicated region
        $region65: #{tpu_custom_call.1} parent=23 // pred_check
          %p525 = pneg %p365
        $region66: #{tpu_custom_call.1} parent=23 // pred_check_branch
          %527 = sbr.rel (%p525) target = $region68
        $region67: #{tpu_custom_call.1} parent=23 // pred_region
          %p528 = scmp.lt.s32.totalorder %s29, 1
          %s529 = scalar_select %p528, %s29, 1
          %s530 = smul.addr %s529, 16
          %s531 = smul.addr %s530, 4
          %s532 = scalar_lea.vmem %s12, %s531
        $region68: #{tpu_custom_call.1} parent=23 // pred_fallthru
          _
        // Predicated region
        $region69: #{tpu_custom_call.1} parent=23 // pred_check
          %p533 = pneg %p391
        $region70: #{tpu_custom_call.1} parent=23 // pred_check_branch
          %535 = sbr.rel (%p533) target = $region72
        $region71: #{tpu_custom_call.1} parent=23 // pred_region
          %p536 = scmp.lt.s32.totalorder %s29, 1
          %s537 = scalar_select %p536, %s29, 1
          %s538 = scalar_lea.vmem %s13, %s537
        $region72: #{tpu_custom_call.1} parent=23 // pred_fallthru
          _
      $region24: #{tpu_custom_call.1} parent=5 // pred_fallthru
        _
      %p539 = scmp.le.s32.totalorder 1, %s21
      %p540 = scmp.lt.s32.totalorder %s21, 3
      %p541 = pnand %p539, %p540
      %p542 = pneg %p541
      // Predicated region
      $region73: #{tpu_custom_call.1} parent=5 // pred_check
        _
      $region74: #{tpu_custom_call.1} parent=5 // pred_check_branch
        %544 = sbr.rel (%p541) target = $region76
      $region75: #{tpu_custom_call.1} parent=5 // pred_region
        %s545 = ssub.s32 %s21, 1
        %s546 = smul.u32 2, %s30
        %p547 = scmp.lt.s32.totalorder %s546, 1
        %s548 = scalar_select %p547, %s546, 1
        %s549 = smul.addr %s548, 8
        %s550 = scalar_lea.vmem %s0, %s549
        %p551 = pneg %p59
        %p552 = pneg %p56
        %s553 = smul.u32 2, %s30
        %p554 = scmp.lt.s32.totalorder %s553, 1
        %s555 = scalar_select %p554, %s553, 1
        %s556 = scalar_lea.vmem %s1, %s555
        %p557 = pneg %p85
        %p558 = pneg %p82
        %p559 = scmp.lt.s32.totalorder %s31, 1
        %s560 = scalar_select %p559, %s31, 1
        %s561 = scalar_lea.vmem %s2, %s560
        %p562 = pneg %p111
        %p563 = pneg %p108
        %p564 = scmp.lt.s32.totalorder %s31, 1
        %s565 = scalar_select %p564, %s31, 1
        %s566 = scalar_lea.vmem %s3, %s565
        %p567 = pneg %p137
        %p568 = pneg %p134
        %p569 = scmp.lt.s32.totalorder %s31, 1
        %s570 = scalar_select %p569, %s31, 1
        %s571 = smul.addr %s570, 4
        %s572 = smul.addr %s571, 4
        %s573 = scalar_lea.vmem %s4, %s572
        %p574 = pneg %p163
        %p575 = pneg %p160
        %p576 = scmp.lt.s32.totalorder %s31, 1
        %s577 = scalar_select %p576, %s31, 1
        %s578 = scalar_lea.vmem %s5, %s577
        %p579 = pneg %p189
        %p580 = pneg %p186
        %p581 = scmp.lt.s32.totalorder %s31, 1
        %s582 = scalar_select %p581, %s31, 1
        %s583 = smul.addr %s582, 4
        %s584 = smul.addr %s583, 4
        %s585 = scalar_lea.vmem %s6, %s584
        %p586 = pneg %p215
        %p587 = pneg %p212
        %p588 = scmp.lt.s32.totalorder %s31, 1
        %s589 = scalar_select %p588, %s31, 1
        %s590 = scalar_lea.vmem %s7, %s589
        %p591 = pneg %p241
        %p592 = pneg %p238
        %p593 = scmp.lt.s32.totalorder %s31, 1
        %s594 = scalar_select %p593, %s31, 1
        %s595 = scalar_lea.vmem %s8, %s594
        %p596 = pneg %p267
        %p597 = pneg %p264
        %p598 = scmp.lt.s32.totalorder %s31, 1
        %s599 = scalar_select %p598, %s31, 1
        %s600 = scalar_lea.vmem %s9, %s599
        %p601 = pneg %p293
        %p602 = pneg %p290
        %p603 = scmp.lt.s32.totalorder %s31, 1
        %s604 = scalar_select %p603, %s31, 1
        %s605 = smul.addr %s604, 4
        %s606 = smul.addr %s605, 4
        %s607 = scalar_lea.vmem %s10, %s606
        %p608 = pneg %p319
        %p609 = pneg %p316
        %p610 = scmp.lt.s32.totalorder %s31, 1
        %s611 = scalar_select %p610, %s31, 1
        %s612 = scalar_lea.vmem %s11, %s611
        %p613 = pneg %p345
        %p614 = pneg %p342
        %p615 = scmp.lt.s32.totalorder %s31, 1
        %s616 = scalar_select %p615, %s31, 1
        %s617 = smul.addr %s616, 16
        %s618 = smul.addr %s617, 4
        %s619 = scalar_lea.vmem %s12, %s618
        %p620 = pneg %p371
        %p621 = pneg %p368
        %p622 = scmp.lt.s32.totalorder %s31, 1
        %s623 = scalar_select %p622, %s31, 1
        %s624 = scalar_lea.vmem %s13, %s623
        %p625 = pneg %p397
        %p626 = pneg %p394
        %p627 = pneg %p423
        %p628 = pneg %p420
        %s629 = smul.u32 2, %s30
        %p630 = scmp.lt.s32.totalorder %s629, 1
        %s631 = scalar_select %p630, %s629, 1
        %s632 = smul.addr %s631, 8
        %s633 = scalar_lea.vmem %s0, %s632
        %s634 = smul.u32 2, %s30
        %s635 = smul.u32 2, %s30
        %p636 = scmp.lt.s32.totalorder %s635, 1
        %s637 = scalar_select %p636, %s635, 1
        %s638 = scalar_lea.vmem %s1, %s637
        %s639 = smul.u32 2, %s30
        %p640 = scmp.lt.s32.totalorder %s31, 1
        %s641 = scalar_select %p640, %s31, 1
        %s642 = scalar_lea.vmem %s2, %s641
        %p643 = scmp.lt.s32.totalorder %s31, 1
        %s644 = scalar_select %p643, %s31, 1
        %s645 = scalar_lea.vmem %s3, %s644
        %p646 = scmp.lt.s32.totalorder %s31, 1
        %s647 = scalar_select %p646, %s31, 1
        %s648 = smul.addr %s647, 4
        %s649 = smul.addr %s648, 4
        %s650 = scalar_lea.vmem %s4, %s649
        %p651 = scmp.lt.s32.totalorder %s31, 1
        %s652 = scalar_select %p651, %s31, 1
        %s653 = scalar_lea.vmem %s5, %s652
        %p654 = scmp.lt.s32.totalorder %s31, 1
        %s655 = scalar_select %p654, %s31, 1
        %s656 = smul.addr %s655, 4
        %s657 = smul.addr %s656, 4
        %s658 = scalar_lea.vmem %s6, %s657
        %p659 = scmp.lt.s32.totalorder %s31, 1
        %s660 = scalar_select %p659, %s31, 1
        %s661 = scalar_lea.vmem %s7, %s660
        %p662 = scmp.lt.s32.totalorder %s31, 1
        %s663 = scalar_select %p662, %s31, 1
        %s664 = scalar_lea.vmem %s8, %s663
        %p665 = scmp.lt.s32.totalorder %s31, 1
        %s666 = scalar_select %p665, %s31, 1
        %s667 = scalar_lea.vmem %s9, %s666
        %p668 = scmp.lt.s32.totalorder %s31, 1
        %s669 = scalar_select %p668, %s31, 1
        %s670 = smul.addr %s669, 4
        %s671 = smul.addr %s670, 4
        %s672 = scalar_lea.vmem %s10, %s671
        %p673 = scmp.lt.s32.totalorder %s31, 1
        %s674 = scalar_select %p673, %s31, 1
        %s675 = scalar_lea.vmem %s11, %s674
        %p676 = scmp.lt.s32.totalorder %s31, 1
        %s677 = scalar_select %p676, %s31, 1
        %s678 = smul.addr %s677, 16
        %s679 = smul.addr %s678, 4
        %s680 = scalar_lea.vmem %s12, %s679
        %p681 = scmp.lt.s32.totalorder %s31, 1
        %s682 = scalar_select %p681, %s31, 1
        %s683 = scalar_lea.vmem %s13, %s682
        %s684 = smul.u32 2, %s30
        %p686 = scmp.eq.s32.totalorder %s31, 0
        // Predicated region
        $region77: #{tpu_custom_call.1} parent=75 // pred_check
          %p687 = pneg %p686
        $region78: #{tpu_custom_call.1} parent=75 // pred_check_branch
          %689 = sbr.rel (%p687) target = $region80
        $region79: #{tpu_custom_call.1} parent=75 // pred_region
          %v690 = vld [vmem:[%s633] sm:$0xff]
          %v691 = vld [vmem:[%s633 + $0x8] sm:$0xff]
          %vm692 = vcmask 261120
          %693 = vst.msk [vmem:[#allocation2] sm:$0xff] %vm692, %v690
          %694 = vst.msk [vmem:[#allocation2 + $0x8] sm:$0xff] %vm692, %v691
        $region80: #{tpu_custom_call.1} parent=75 // pred_fallthru
          _
        %v695 = vld [vmem:[#allocation2] sm:$0xff]
        %v696 = vld [vmem:[#allocation2 + $0x8] sm:$0xff]
        %v697 = vld [vmem:[%s642] sm:$0x1]
        %v698 = vld [vmem:[%s645] sm:$0x1]
        %vm699 = vcmask 261120
        %v700 = vsel %vm699, %v695, 0.0
        %701 = vadd.xlane.f32.xlu0 %v700
        %v702 = vpop.xlane.xlu0 %701
        %v703 = vsel %vm699, %v696, 0.0
        %704 = vadd.xlane.f32.xlu0 %v703
        %v705 = vpop.xlane.xlu0 %704
        %v706 = vrcp.pop 32.0
        %v707 = vmul.f32 %v702, %v706
        %v708 = vmul.f32 %v705, %v706
        %v709 = vsub.f32 %v695, %v707
        %v710 = vsub.f32 %v696, %v708
        %v711 = vmul.f32 %v709, %v709
        %v712 = vmul.f32 %v710, %v710
        %v713 = vsel %vm699, %v711, 0.0
        %714 = vadd.xlane.f32.xlu0 %v713
        %v715 = vpop.xlane.xlu0 %714
        %v716 = vsel %vm699, %v712, 0.0
        %717 = vadd.xlane.f32.xlu0 %v716
        %v718 = vpop.xlane.xlu0 %717
        %v719 = vmul.f32 %v715, %v706
        %v720 = vmul.f32 %v718, %v706
        %v721 = vadd.f32 %v719, 1e-05
        %v722 = vadd.f32 %v720, 1e-05
        %v723 = vrsqrt.pop %v721
        %v724 = vrsqrt.pop %v722
        %v725 = vmul.f32 %v709, %v723
        %v726 = vmul.f32 %v710, %v724
        %v728 = vlaneseq
        %v729 = vshrl.u32 %v728, 7
        %v730 = vsub.s32 0, %v729
        %v731 = vrot.slane %v697, %v730
        %v733 = vmul.f32 %v725, %v731
        %v734 = vmul.f32 %v726, %v731
        %v736 = vlaneseq
        %v737 = vshrl.u32 %v736, 7
        %v738 = vsub.s32 0, %v737
        %v739 = vrot.slane %v698, %v738
        %v741 = vadd.f32 %v733, %v739
        %v742 = vadd.f32 %v734, %v739
        %v743 = vpack.c.bf16 %v742, %v741
        %v744 = vld [vmem:[%s650] sm:$0xf]
        %v745 = vld [vmem:[%s650 + $0x4] sm:$0xf]
        %v746 = vld [vmem:[%s650 + $0x8] sm:$0xf]
        %v747 = vld [vmem:[%s650 + $0xc] sm:$0xf]
        %v748 = vld [vmem:[%s653] sm:$0x1]
        %v750 = vlaneseq
        %v751 = vshrl.u32 %v750, 7
        %v752 = vsub.s32 0, %v751
        %v753 = vrot.slane %v748, %v752
        %v759 = vunpack.c.l.b16 %v744
        %v760 = vunpack.c.l.b16 %v745
        %v761 = vunpack.c.l.b16 %v746
        %v762 = vunpack.c.l.b16 %v747
        %v763 = vpack.c.b16 %v760, %v759
        %v764 = vpack.c.b16 %v762, %v761
        %v768 = vsel %vm699, %v743, 0
        %770 = vmatprep.subr.bf16.mxu0 0
        %771 = vmatpush1.bf16.msra.mxu0 %v763
        %772 = vmatprep.subr.bf16.mxu0 0
        %773 = vmatpush1.bf16.msra.mxu0 %v764
        %774 = vmatprep.subr.bf16.mxu0 0
        %775 = vmatpush1.bf16.msra.mxu0 0
        %776 = vmatprep.subr.bf16.mxu0 0
        %777 = vmatpush1.bf16.msra.mxu0 0
        %778 = vmatprep.subr.bf16.mxu0 0
        %779 = vmatpush1.bf16.msra.mxu0 0
        %780 = vmatprep.subr.bf16.mxu0 0
        %781 = vmatpush1.bf16.msra.mxu0 0
        %782 = vmatprep.subr.bf16.mxu0 0
        %783 = vmatpush1.bf16.msra.mxu0 0
        %784 = vmatprep.subr.bf16.mxu0 0
        %785 = vmatpush1.bf16.msra.mxu0 0
        %786 = vmatprep.subr.bf16.mxu0 0
        %787 = vmatpush1.bf16.msra.mxu0 0
        %788 = vmatprep.subr.bf16.mxu0 0
        %789 = vmatpush1.bf16.msra.mxu0 0
        %790 = vmatprep.subr.bf16.mxu0 0
        %791 = vmatpush1.bf16.msra.mxu0 0
        %792 = vmatprep.subr.bf16.mxu0 0
        %793 = vmatpush1.bf16.msra.mxu0 0
        %794 = vmatprep.subr.bf16.mxu0 0
        %795 = vmatpush1.bf16.msra.mxu0 0
        %796 = vmatprep.subr.bf16.mxu0 0
        %797 = vmatpush1.bf16.msra.mxu0 0
        %798 = vmatprep.subr.bf16.mxu0 0
        %799 = vmatpush1.bf16.msra.mxu0 0
        %800 = vmatprep.subr.bf16.mxu0 0
        %801 = vmatpush1.bf16.msra.mxu0 0
        %802 = vmatprep.mubr.bf16.mxu0 0
        %803 = vmatmul.mubr.bf16.gmra.mrb[0].mxu0 %v768
        %v804 = vpop.f32.mrb[0].mxu0
        %v805 = vadd.f32 %v753, %v804
        %v806 = vpop.f32.mrb[0].mxu0
        %v807 = vpop.f32.mrb[0].mxu0
        %v808 = vadd.f32 %v753, %v807
        %v809 = vpop.f32.mrb[0].mxu0
        %810 = vdwg.mxu0
        %812 = vrot.lane.b32.xlu0 %v805, 120
        %v813 = vpop.permute.xlu0 %812
        %815 = vrot.lane.b32.xlu0 %v805, 112
        %v816 = vpop.permute.xlu0 %815
        %818 = vrot.lane.b32.xlu0 %v805, 104
        %v819 = vpop.permute.xlu0 %818
        %v821 = vcombine.low %v805, %v816
        %v822 = vcombine.high %v805, %v816
        %v824 = vunpack.c.l.s4 1983009808
        %v825 = vunpack.c.0.s8 %v824
        %v826 = vlaneseq
        %v827 = vshrl.u32 %v826, 7
        %v828 = vsub.s32 %v825, %v827
        %v829 = vrot.slane %v821, %v828
        %v831 = vunpack.c.l.s4 1983009808
        %v832 = vunpack.c.0.s8 %v831
        %v833 = vlaneseq
        %v834 = vshrl.u32 %v833, 7
        %v835 = vsub.s32 %v832, %v834
        %v836 = vrot.slane %v822, %v835
        %v837 = vcombine.low %v813, %v819
        %v838 = vcombine.high %v813, %v819
        %v840 = vunpack.c.l.s4 1983009808
        %v841 = vunpack.c.0.s8 %v840
        %v842 = vlaneseq
        %v843 = vshrl.u32 %v842, 7
        %v844 = vsub.s32 %v841, %v843
        %v845 = vrot.slane %v837, %v844
        %v847 = vunpack.c.l.s4 1983009808
        %v848 = vunpack.c.0.s8 %v847
        %v849 = vlaneseq
        %v850 = vshrl.u32 %v849, 7
        %v851 = vsub.s32 %v848, %v850
        %v852 = vrot.slane %v838, %v851
        %v853 = vcombine.low %v829, %v845
        %v854 = vcombine.high %v829, %v845
        %v856 = vunpack.c.l.s4 1934713408
        %v857 = vunpack.c.0.s8 %v856
        %v858 = vlaneseq
        %v859 = vshrl.u32 %v858, 7
        %v860 = vsub.s32 %v857, %v859
        %v861 = vrot.slane %v853, %v860
        %v863 = vunpack.c.l.s4 1934713408
        %v864 = vunpack.c.0.s8 %v863
        %v865 = vlaneseq
        %v866 = vshrl.u32 %v865, 7
        %v867 = vsub.s32 %v864, %v866
        %v868 = vrot.slane %v854, %v867
        %v869 = vcombine.low %v836, %v852
        %v870 = vcombine.high %v836, %v852
        %v872 = vunpack.c.l.s4 1934713408
        %v873 = vunpack.c.0.s8 %v872
        %v874 = vlaneseq
        %v875 = vshrl.u32 %v874, 7
        %v876 = vsub.s32 %v873, %v875
        %v877 = vrot.slane %v869, %v876
        %v879 = vunpack.c.l.s4 1934713408
        %v880 = vunpack.c.0.s8 %v879
        %v881 = vlaneseq
        %v882 = vshrl.u32 %v881, 7
        %v883 = vsub.s32 %v880, %v882
        %v884 = vrot.slane %v870, %v883
        %v885 = vcombine.high %v861, 0.0
        %v886 = vcombine.high %v868, 0.0
        %v887 = vcombine.high %v877, 0.0
        %v888 = vcombine.high %v884, 0.0
        %v889 = vcombine.low %v861, %v868
        %v891 = vunpack.c.l.s4 1983009808
        %v892 = vunpack.c.0.s8 %v891
        %v893 = vlaneseq
        %v894 = vshrl.u32 %v893, 7
        %v895 = vsub.s32 %v892, %v894
        %v896 = vrot.slane %v889, %v895
        %v897 = vcombine.low %v885, %v886
        %v899 = vunpack.c.l.s4 1983009808
        %v900 = vunpack.c.0.s8 %v899
        %v901 = vlaneseq
        %v902 = vshrl.u32 %v901, 7
        %v903 = vsub.s32 %v900, %v902
        %v904 = vrot.slane %v897, %v903
        %v905 = vcombine.low %v877, %v884
        %v907 = vunpack.c.l.s4 1983009808
        %v908 = vunpack.c.0.s8 %v907
        %v909 = vlaneseq
        %v910 = vshrl.u32 %v909, 7
        %v911 = vsub.s32 %v908, %v910
        %v912 = vrot.slane %v905, %v911
        %v913 = vcombine.low %v887, %v888
        %v915 = vunpack.c.l.s4 1983009808
        %v916 = vunpack.c.0.s8 %v915
        %v917 = vlaneseq
        %v918 = vshrl.u32 %v917, 7
        %v919 = vsub.s32 %v916, %v918
        %v920 = vrot.slane %v913, %v919
        %v921 = vcombine.low %v896, %v904
        %v922 = vcombine.high %v896, %v904
        %v924 = vunpack.c.l.s4 1934713408
        %v925 = vunpack.c.0.s8 %v924
        %v926 = vlaneseq
        %v927 = vshrl.u32 %v926, 7
        %v928 = vsub.s32 %v925, %v927
        %v929 = vrot.slane %v921, %v928
        %v931 = vunpack.c.l.s4 1934713408
        %v932 = vunpack.c.0.s8 %v931
        %v933 = vlaneseq
        %v934 = vshrl.u32 %v933, 7
        %v935 = vsub.s32 %v932, %v934
        %v936 = vrot.slane %v922, %v935
        %v937 = vcombine.low %v912, %v920
        %v938 = vcombine.high %v912, %v920
        %v940 = vunpack.c.l.s4 1934713408
        %v941 = vunpack.c.0.s8 %v940
        %v942 = vlaneseq
        %v943 = vshrl.u32 %v942, 7
        %v944 = vsub.s32 %v941, %v943
        %v945 = vrot.slane %v937, %v944
        %v947 = vunpack.c.l.s4 1934713408
        %v948 = vunpack.c.0.s8 %v947
        %v949 = vlaneseq
        %v950 = vshrl.u32 %v949, 7
        %v951 = vsub.s32 %v948, %v950
        %v952 = vrot.slane %v938, %v951
        %v953 = vcombine.low %v929, %v945
        %v954 = vcombine.high %v929, %v945
        %v955 = vcombine.low %v936, %v952
        %v956 = vcombine.high %v936, %v952
        %957 = vrot.lane.b32.xlu0 %v805, 96
        %v958 = vpop.permute.xlu0 %957
        %959 = vrot.lane.b32.xlu0 %v813, 96
        %v960 = vpop.permute.xlu0 %959
        %961 = vrot.lane.b32.xlu0 %v816, 96
        %v962 = vpop.permute.xlu0 %961
        %963 = vrot.lane.b32.xlu0 %v819, 96
        %v964 = vpop.permute.xlu0 %963
        %v969 = vcombine.low %v958, %v962
        %v970 = vcombine.high %v958, %v962
        %v972 = vunpack.c.l.s4 1983009808
        %v973 = vunpack.c.0.s8 %v972
        %v974 = vlaneseq
        %v975 = vshrl.u32 %v974, 7
        %v976 = vsub.s32 %v973, %v975
        %v977 = vrot.slane %v969, %v976
        %v979 = vunpack.c.l.s4 1983009808
        %v980 = vunpack.c.0.s8 %v979
        %v981 = vlaneseq
        %v982 = vshrl.u32 %v981, 7
        %v983 = vsub.s32 %v980, %v982
        %v984 = vrot.slane %v970, %v983
        %v985 = vcombine.low %v960, %v964
        %v986 = vcombine.high %v960, %v964
        %v988 = vunpack.c.l.s4 1983009808
        %v989 = vunpack.c.0.s8 %v988
        %v990 = vlaneseq
        %v991 = vshrl.u32 %v990, 7
        %v992 = vsub.s32 %v989, %v991
        %v993 = vrot.slane %v985, %v992
        %v995 = vunpack.c.l.s4 1983009808
        %v996 = vunpack.c.0.s8 %v995
        %v997 = vlaneseq
        %v998 = vshrl.u32 %v997, 7
        %v999 = vsub.s32 %v996, %v998
        %v1000 = vrot.slane %v986, %v999
        %v1001 = vcombine.low %v977, %v993
        %v1002 = vcombine.high %v977, %v993
        %v1004 = vunpack.c.l.s4 1934713408
        %v1005 = vunpack.c.0.s8 %v1004
        %v1006 = vlaneseq
        %v1007 = vshrl.u32 %v1006, 7
        %v1008 = vsub.s32 %v1005, %v1007
        %v1009 = vrot.slane %v1001, %v1008
        %v1011 = vunpack.c.l.s4 1934713408
        %v1012 = vunpack.c.0.s8 %v1011
        %v1013 = vlaneseq
        %v1014 = vshrl.u32 %v1013, 7
        %v1015 = vsub.s32 %v1012, %v1014
        %v1016 = vrot.slane %v1002, %v1015
        %v1017 = vcombine.low %v984, %v1000
        %v1018 = vcombine.high %v984, %v1000
        %v1020 = vunpack.c.l.s4 1934713408
        %v1021 = vunpack.c.0.s8 %v1020
        %v1022 = vlaneseq
        %v1023 = vshrl.u32 %v1022, 7
        %v1024 = vsub.s32 %v1021, %v1023
        %v1025 = vrot.slane %v1017, %v1024
        %v1027 = vunpack.c.l.s4 1934713408
        %v1028 = vunpack.c.0.s8 %v1027
        %v1029 = vlaneseq
        %v1030 = vshrl.u32 %v1029, 7
        %v1031 = vsub.s32 %v1028, %v1030
        %v1032 = vrot.slane %v1018, %v1031
        %v1033 = vcombine.high %v1009, 0.0
        %v1034 = vcombine.high %v1016, 0.0
        %v1035 = vcombine.high %v1025, 0.0
        %v1036 = vcombine.high %v1032, 0.0
        %v1037 = vcombine.low %v1009, %v1016
        %v1039 = vunpack.c.l.s4 1983009808
        %v1040 = vunpack.c.0.s8 %v1039
        %v1041 = vlaneseq
        %v1042 = vshrl.u32 %v1041, 7
        %v1043 = vsub.s32 %v1040, %v1042
        %v1044 = vrot.slane %v1037, %v1043
        %v1045 = vcombine.low %v1033, %v1034
        %v1047 = vunpack.c.l.s4 1983009808
        %v1048 = vunpack.c.0.s8 %v1047
        %v1049 = vlaneseq
        %v1050 = vshrl.u32 %v1049, 7
        %v1051 = vsub.s32 %v1048, %v1050
        %v1052 = vrot.slane %v1045, %v1051
        %v1053 = vcombine.low %v1025, %v1032
        %v1055 = vunpack.c.l.s4 1983009808
        %v1056 = vunpack.c.0.s8 %v1055
        %v1057 = vlaneseq
        %v1058 = vshrl.u32 %v1057, 7
        %v1059 = vsub.s32 %v1056, %v1058
        %v1060 = vrot.slane %v1053, %v1059
        %v1061 = vcombine.low %v1035, %v1036
        %v1063 = vunpack.c.l.s4 1983009808
        %v1064 = vunpack.c.0.s8 %v1063
        %v1065 = vlaneseq
        %v1066 = vshrl.u32 %v1065, 7
        %v1067 = vsub.s32 %v1064, %v1066
        %v1068 = vrot.slane %v1061, %v1067
        %v1069 = vcombine.low %v1044, %v1052
        %v1070 = vcombine.high %v1044, %v1052
        %v1072 = vunpack.c.l.s4 1934713408
        %v1073 = vunpack.c.0.s8 %v1072
        %v1074 = vlaneseq
        %v1075 = vshrl.u32 %v1074, 7
        %v1076 = vsub.s32 %v1073, %v1075
        %v1077 = vrot.slane %v1069, %v1076
        %v1079 = vunpack.c.l.s4 1934713408
        %v1080 = vunpack.c.0.s8 %v1079
        %v1081 = vlaneseq
        %v1082 = vshrl.u32 %v1081, 7
        %v1083 = vsub.s32 %v1080, %v1082
        %v1084 = vrot.slane %v1070, %v1083
        %v1085 = vcombine.low %v1060, %v1068
        %v1086 = vcombine.high %v1060, %v1068
        %v1088 = vunpack.c.l.s4 1934713408
        %v1089 = vunpack.c.0.s8 %v1088
        %v1090 = vlaneseq
        %v1091 = vshrl.u32 %v1090, 7
        %v1092 = vsub.s32 %v1089, %v1091
        %v1093 = vrot.slane %v1085, %v1092
        %v1095 = vunpack.c.l.s4 1934713408
        %v1096 = vunpack.c.0.s8 %v1095
        %v1097 = vlaneseq
        %v1098 = vshrl.u32 %v1097, 7
        %v1099 = vsub.s32 %v1096, %v1098
        %v1100 = vrot.slane %v1086, %v1099
        %v1101 = vcombine.low %v1077, %v1093
        %v1102 = vcombine.high %v1077, %v1093
        %v1103 = vcombine.low %v1084, %v1100
        %v1104 = vcombine.high %v1084, %v1100
        %1105 = vrot.lane.b32.xlu0 %v805, 64
        %v1106 = vpop.permute.xlu0 %1105
        %1107 = vrot.lane.b32.xlu0 %v813, 64
        %v1108 = vpop.permute.xlu0 %1107
        %1109 = vrot.lane.b32.xlu0 %v816, 64
        %v1110 = vpop.permute.xlu0 %1109
        %1111 = vrot.lane.b32.xlu0 %v819, 64
        %v1112 = vpop.permute.xlu0 %1111
        %v1117 = vcombine.low %v1106, %v1110
        %v1118 = vcombine.high %v1106, %v1110
        %v1120 = vunpack.c.l.s4 1983009808
        %v1121 = vunpack.c.0.s8 %v1120
        %v1122 = vlaneseq
        %v1123 = vshrl.u32 %v1122, 7
        %v1124 = vsub.s32 %v1121, %v1123
        %v1125 = vrot.slane %v1117, %v1124
        %v1127 = vunpack.c.l.s4 1983009808
        %v1128 = vunpack.c.0.s8 %v1127
        %v1129 = vlaneseq
        %v1130 = vshrl.u32 %v1129, 7
        %v1131 = vsub.s32 %v1128, %v1130
        %v1132 = vrot.slane %v1118, %v1131
        %v1133 = vcombine.low %v1108, %v1112
        %v1134 = vcombine.high %v1108, %v1112
        %v1136 = vunpack.c.l.s4 1983009808
        %v1137 = vunpack.c.0.s8 %v1136
        %v1138 = vlaneseq
        %v1139 = vshrl.u32 %v1138, 7
        %v1140 = vsub.s32 %v1137, %v1139
        %v1141 = vrot.slane %v1133, %v1140
        %v1143 = vunpack.c.l.s4 1983009808
        %v1144 = vunpack.c.0.s8 %v1143
        %v1145 = vlaneseq
        %v1146 = vshrl.u32 %v1145, 7
        %v1147 = vsub.s32 %v1144, %v1146
        %v1148 = vrot.slane %v1134, %v1147
        %v1149 = vcombine.low %v1125, %v1141
        %v1150 = vcombine.high %v1125, %v1141
        %v1152 = vunpack.c.l.s4 1934713408
        %v1153 = vunpack.c.0.s8 %v1152
        %v1154 = vlaneseq
        %v1155 = vshrl.u32 %v1154, 7
        %v1156 = vsub.s32 %v1153, %v1155
        %v1157 = vrot.slane %v1149, %v1156
        %v1159 = vunpack.c.l.s4 1934713408
        %v1160 = vunpack.c.0.s8 %v1159
        %v1161 = vlaneseq
        %v1162 = vshrl.u32 %v1161, 7
        %v1163 = vsub.s32 %v1160, %v1162
        %v1164 = vrot.slane %v1150, %v1163
        %v1165 = vcombine.low %v1132, %v1148
        %v1166 = vcombine.high %v1132, %v1148
        %v1168 = vunpack.c.l.s4 1934713408
        %v1169 = vunpack.c.0.s8 %v1168
        %v1170 = vlaneseq
        %v1171 = vshrl.u32 %v1170, 7
        %v1172 = vsub.s32 %v1169, %v1171
        %v1173 = vrot.slane %v1165, %v1172
        %v1175 = vunpack.c.l.s4 1934713408
        %v1176 = vunpack.c.0.s8 %v1175
        %v1177 = vlaneseq
        %v1178 = vshrl.u32 %v1177, 7
        %v1179 = vsub.s32 %v1176, %v1178
        %v1180 = vrot.slane %v1166, %v1179
        %v1181 = vcombine.high %v1157, 0.0
        %v1182 = vcombine.high %v1164, 0.0
        %v1183 = vcombine.high %v1173, 0.0
        %v1184 = vcombine.high %v1180, 0.0
        %v1185 = vcombine.low %v1157, %v1164
        %v1187 = vunpack.c.l.s4 1983009808
        %v1188 = vunpack.c.0.s8 %v1187
        %v1189 = vlaneseq
        %v1190 = vshrl.u32 %v1189, 7
        %v1191 = vsub.s32 %v1188, %v1190
        %v1192 = vrot.slane %v1185, %v1191
        %v1193 = vcombine.low %v1181, %v1182
        %v1195 = vunpack.c.l.s4 1983009808
        %v1196 = vunpack.c.0.s8 %v1195
        %v1197 = vlaneseq
        %v1198 = vshrl.u32 %v1197, 7
        %v1199 = vsub.s32 %v1196, %v1198
        %v1200 = vrot.slane %v1193, %v1199
        %v1201 = vcombine.low %v1173, %v1180
        %v1203 = vunpack.c.l.s4 1983009808
        %v1204 = vunpack.c.0.s8 %v1203
        %v1205 = vlaneseq
        %v1206 = vshrl.u32 %v1205, 7
        %v1207 = vsub.s32 %v1204, %v1206
        %v1208 = vrot.slane %v1201, %v1207
        %v1209 = vcombine.low %v1183, %v1184
        %v1211 = vunpack.c.l.s4 1983009808
        %v1212 = vunpack.c.0.s8 %v1211
        %v1213 = vlaneseq
        %v1214 = vshrl.u32 %v1213, 7
        %v1215 = vsub.s32 %v1212, %v1214
        %v1216 = vrot.slane %v1209, %v1215
        %v1217 = vcombine.low %v1192, %v1200
        %v1218 = vcombine.high %v1192, %v1200
        %v1220 = vunpack.c.l.s4 1934713408
        %v1221 = vunpack.c.0.s8 %v1220
        %v1222 = vlaneseq
        %v1223 = vshrl.u32 %v1222, 7
        %v1224 = vsub.s32 %v1221, %v1223
        %v1225 = vrot.slane %v1217, %v1224
        %v1227 = vunpack.c.l.s4 1934713408
        %v1228 = vunpack.c.0.s8 %v1227
        %v1229 = vlaneseq
        %v1230 = vshrl.u32 %v1229, 7
        %v1231 = vsub.s32 %v1228, %v1230
        %v1232 = vrot.slane %v1218, %v1231
        %v1233 = vcombine.low %v1208, %v1216
        %v1234 = vcombine.high %v1208, %v1216
        %v1236 = vunpack.c.l.s4 1934713408
        %v1237 = vunpack.c.0.s8 %v1236
        %v1238 = vlaneseq
        %v1239 = vshrl.u32 %v1238, 7
        %v1240 = vsub.s32 %v1237, %v1239
        %v1241 = vrot.slane %v1233, %v1240
        %v1243 = vunpack.c.l.s4 1934713408
        %v1244 = vunpack.c.0.s8 %v1243
        %v1245 = vlaneseq
        %v1246 = vshrl.u32 %v1245, 7
        %v1247 = vsub.s32 %v1244, %v1246
        %v1248 = vrot.slane %v1234, %v1247
        %v1249 = vcombine.low %v1225, %v1241
        %v1250 = vcombine.high %v1225, %v1241
        %v1251 = vcombine.low %v1232, %v1248
        %v1252 = vcombine.high %v1232, %v1248
        %v1253 = vpack.c.bf16 %v953, %v953
        %v1254 = vpack.c.bf16 %v954, %v954
        %v1255 = vpack.c.bf16 %v955, %v955
        %v1256 = vpack.c.bf16 %v956, %v956
        %v1257 = vpack.c.bf16 %v1101, %v1101
        %v1258 = vpack.c.bf16 %v1102, %v1102
        %v1259 = vpack.c.bf16 %v1103, %v1103
        %v1260 = vpack.c.bf16 %v1104, %v1104
        %v1261 = vld [vmem:[%s638] sm:$0x1]
        %v1263 = vlaneseq
        %v1264 = vshrl.u32 %v1263, 7
        %v1265 = vsub.s32 0, %v1264
        %v1266 = vrot.slane %v1261, %v1265
        %vm1268 = vcmask 64512
        %v1270 = vsel %vm1268, %v1253, 0
        %v1273 = vsel %vm1268, %v1257, 0
        %1275 = vmatprep.subr.bf16.mxu0 0
        %1276 = vmatpush1.bf16.xpose.msra.mxu0 %v1273
        %1277 = vmatprep.subr.bf16.mxu0 0
        %1278 = vmatpush1.bf16.xpose.msra.mxu0 0
        %1279 = vmatprep.subr.bf16.mxu0 0
        %1280 = vmatpush1.bf16.xpose.msra.mxu0 0
        %1281 = vmatprep.subr.bf16.mxu0 0
        %1282 = vmatpush1.bf16.xpose.msra.mxu0 0
        %1283 = vmatprep.subr.bf16.mxu0 0
        %1284 = vmatpush1.bf16.xpose.msra.mxu0 0
        %1285 = vmatprep.subr.bf16.mxu0 0
        %1286 = vmatpush1.bf16.xpose.msra.mxu0 0
        %1287 = vmatprep.subr.bf16.mxu0 0
        %1288 = vmatpush1.bf16.xpose.msra.mxu0 0
        %1289 = vmatprep.subr.bf16.mxu0 0
        %1290 = vmatpush1.bf16.xpose.msra.mxu0 0
        %1291 = vmatprep.subr.bf16.mxu0 0
        %1292 = vmatpush1.bf16.xpose.msra.mxu0 0
        %1293 = vmatprep.subr.bf16.mxu0 0
        %1294 = vmatpush1.bf16.xpose.msra.mxu0 0
        %1295 = vmatprep.subr.bf16.mxu0 0
        %1296 = vmatpush1.bf16.xpose.msra.mxu0 0
        %1297 = vmatprep.subr.bf16.mxu0 0
        %1298 = vmatpush1.bf16.xpose.msra.mxu0 0
        %1299 = vmatprep.subr.bf16.mxu0 0
        %1300 = vmatpush1.bf16.xpose.msra.mxu0 0
        %1301 = vmatprep.subr.bf16.mxu0 0
        %1302 = vmatpush1.bf16.xpose.msra.mxu0 0
        %1303 = vmatprep.subr.bf16.mxu0 0
        %1304 = vmatpush1.bf16.xpose.msra.mxu0 0
        %1305 = vmatprep.subr.bf16.mxu0 0
        %1306 = vmatpush1.bf16.xpose.msra.mxu0 0
        %1307 = vmatprep.mubr.bf16.mxu0 0
        %1308 = vmatmul.mubr.bf16.gmra.mrb[0].mxu0 %v1270
        %v1309 = vpop.f32.mrb[0].mxu0
        %v1310 = vadd.f32 %v1266, %v1309
        %v1311 = vpop.f32.mrb[0].mxu0
        %v1312 = vpop.f32.mrb[0].mxu0
        %v1313 = vpop.f32.mrb[0].mxu0
        %1314 = vdwg.mxu0
        %v1316 = vsel %vm1268, %v1254, 0
        %v1319 = vsel %vm1268, %v1258, 0
        %1321 = vmatprep.subr.bf16.mxu0 0
        %1322 = vmatpush1.bf16.xpose.msra.mxu0 %v1319
        %1323 = vmatprep.subr.bf16.mxu0 0
        %1324 = vmatpush1.bf16.xpose.msra.mxu0 0
        %1325 = vmatprep.subr.bf16.mxu0 0
        %1326 = vmatpush1.bf16.xpose.msra.mxu0 0
        %1327 = vmatprep.subr.bf16.mxu0 0
        %1328 = vmatpush1.bf16.xpose.msra.mxu0 0
        %1329 = vmatprep.subr.bf16.mxu0 0
        %1330 = vmatpush1.bf16.xpose.msra.mxu0 0
        %1331 = vmatprep.subr.bf16.mxu0 0
        %1332 = vmatpush1.bf16.xpose.msra.mxu0 0
        %1333 = vmatprep.subr.bf16.mxu0 0
        %1334 = vmatpush1.bf16.xpose.msra.mxu0 0
        %1335 = vmatprep.subr.bf16.mxu0 0
        %1336 = vmatpush1.bf16.xpose.msra.mxu0 0
        %1337 = vmatprep.subr.bf16.mxu0 0
        %1338 = vmatpush1.bf16.xpose.msra.mxu0 0
        %1339 = vmatprep.subr.bf16.mxu0 0
        %1340 = vmatpush1.bf16.xpose.msra.mxu0 0
        %1341 = vmatprep.subr.bf16.mxu0 0
        %1342 = vmatpush1.bf16.xpose.msra.mxu0 0
        %1343 = vmatprep.subr.bf16.mxu0 0
        %1344 = vmatpush1.bf16.xpose.msra.mxu0 0
        %1345 = vmatprep.subr.bf16.mxu0 0
        %1346 = vmatpush1.bf16.xpose.msra.mxu0 0
        %1347 = vmatprep.subr.bf16.mxu0 0
        %1348 = vmatpush1.bf16.xpose.msra.mxu0 0
        %1349 = vmatprep.subr.bf16.mxu0 0
        %1350 = vmatpush1.bf16.xpose.msra.mxu0 0
        %1351 = vmatprep.subr.bf16.mxu0 0
        %1352 = vmatpush1.bf16.xpose.msra.mxu0 0
        %1353 = vmatprep.mubr.bf16.mxu0 0
        %1354 = vmatmul.mubr.bf16.gmra.mrb[0].mxu0 %v1316
        %v1355 = vpop.f32.mrb[0].mxu0
        %v1356 = vadd.f32 %v1266, %v1355
        %v1357 = vpop.f32.mrb[0].mxu0
        %v1358 = vpop.f32.mrb[0].mxu0
        %v1359 = vpop.f32.mrb[0].mxu0
        %1360 = vdwg.mxu0
        %v1362 = vsel %vm1268, %v1255, 0
        %v1365 = vsel %vm1268, %v1259, 0
        %1367 = vmatprep.subr.bf16.mxu0 0
        %1368 = vmatpush1.bf16.xpose.msra.mxu0 %v1365
        %1369 = vmatprep.subr.bf16.mxu0 0
        %1370 = vmatpush1.bf16.xpose.msra.mxu0 0
        %1371 = vmatprep.subr.bf16.mxu0 0
        %1372 = vmatpush1.bf16.xpose.msra.mxu0 0
        %1373 = vmatprep.subr.bf16.mxu0 0
        %1374 = vmatpush1.bf16.xpose.msra.mxu0 0
        %1375 = vmatprep.subr.bf16.mxu0 0
        %1376 = vmatpush1.bf16.xpose.msra.mxu0 0
        %1377 = vmatprep.subr.bf16.mxu0 0
        %1378 = vmatpush1.bf16.xpose.msra.mxu0 0
        %1379 = vmatprep.subr.bf16.mxu0 0
        %1380 = vmatpush1.bf16.xpose.msra.mxu0 0
        %1381 = vmatprep.subr.bf16.mxu0 0
        %1382 = vmatpush1.bf16.xpose.msra.mxu0 0
        %1383 = vmatprep.subr.bf16.mxu0 0
        %1384 = vmatpush1.bf16.xpose.msra.mxu0 0
        %1385 = vmatprep.subr.bf16.mxu0 0
        %1386 = vmatpush1.bf16.xpose.msra.mxu0 0
        %1387 = vmatprep.subr.bf16.mxu0 0
        %1388 = vmatpush1.bf16.xpose.msra.mxu0 0
        %1389 = vmatprep.subr.bf16.mxu0 0
        %1390 = vmatpush1.bf16.xpose.msra.mxu0 0
        %1391 = vmatprep.subr.bf16.mxu0 0
        %1392 = vmatpush1.bf16.xpose.msra.mxu0 0
        %1393 = vmatprep.subr.bf16.mxu0 0
        %1394 = vmatpush1.bf16.xpose.msra.mxu0 0
        %1395 = vmatprep.subr.bf16.mxu0 0
        %1396 = vmatpush1.bf16.xpose.msra.mxu0 0
        %1397 = vmatprep.subr.bf16.mxu0 0
        %1398 = vmatpush1.bf16.xpose.msra.mxu0 0
        %1399 = vmatprep.mubr.bf16.mxu0 0
        %1400 = vmatmul.mubr.bf16.gmra.mrb[0].mxu0 %v1362
        %v1401 = vpop.f32.mrb[0].mxu0
        %v1402 = vadd.f32 %v1266, %v1401
        %v1403 = vpop.f32.mrb[0].mxu0
        %v1404 = vpop.f32.mrb[0].mxu0
        %v1405 = vpop.f32.mrb[0].mxu0
        %1406 = vdwg.mxu0
        %v1408 = vsel %vm1268, %v1256, 0
        %v1411 = vsel %vm1268, %v1260, 0
        %1413 = vmatprep.subr.bf16.mxu0 0
        %1414 = vmatpush1.bf16.xpose.msra.mxu0 %v1411
        %1415 = vmatprep.subr.bf16.mxu0 0
        %1416 = vmatpush1.bf16.xpose.msra.mxu0 0
        %1417 = vmatprep.subr.bf16.mxu0 0
        %1418 = vmatpush1.bf16.xpose.msra.mxu0 0
        %1419 = vmatprep.subr.bf16.mxu0 0
        %1420 = vmatpush1.bf16.xpose.msra.mxu0 0
        %1421 = vmatprep.subr.bf16.mxu0 0
        %1422 = vmatpush1.bf16.xpose.msra.mxu0 0
        %1423 = vmatprep.subr.bf16.mxu0 0
        %1424 = vmatpush1.bf16.xpose.msra.mxu0 0
        %1425 = vmatprep.subr.bf16.mxu0 0
        %1426 = vmatpush1.bf16.xpose.msra.mxu0 0
        %1427 = vmatprep.subr.bf16.mxu0 0
        %1428 = vmatpush1.bf16.xpose.msra.mxu0 0
        %1429 = vmatprep.subr.bf16.mxu0 0
        %1430 = vmatpush1.bf16.xpose.msra.mxu0 0
        %1431 = vmatprep.subr.bf16.mxu0 0
        %1432 = vmatpush1.bf16.xpose.msra.mxu0 0
        %1433 = vmatprep.subr.bf16.mxu0 0
        %1434 = vmatpush1.bf16.xpose.msra.mxu0 0
        %1435 = vmatprep.subr.bf16.mxu0 0
        %1436 = vmatpush1.bf16.xpose.msra.mxu0 0
        %1437 = vmatprep.subr.bf16.mxu0 0
        %1438 = vmatpush1.bf16.xpose.msra.mxu0 0
        %1439 = vmatprep.subr.bf16.mxu0 0
        %1440 = vmatpush1.bf16.xpose.msra.mxu0 0
        %1441 = vmatprep.subr.bf16.mxu0 0
        %1442 = vmatpush1.bf16.xpose.msra.mxu0 0
        %1443 = vmatprep.subr.bf16.mxu0 0
        %1444 = vmatpush1.bf16.xpose.msra.mxu0 0
        %1445 = vmatprep.mubr.bf16.mxu0 0
        %1446 = vmatmul.mubr.bf16.gmra.mrb[0].mxu0 %v1408
        %v1447 = vpop.f32.mrb[0].mxu0
        %v1448 = vadd.f32 %v1266, %v1447
        %v1449 = vpop.f32.mrb[0].mxu0
        %v1450 = vpop.f32.mrb[0].mxu0
        %v1451 = vpop.f32.mrb[0].mxu0
        %1452 = vdwg.mxu0
        %v1453 = vsel %vm1268, %v1310, -inf
        %1454 = vmax.xlane.f32.xlu0 %v1453
        %v1455 = vpop.xlane.xlu0 %1454
        %v1456 = vsel %vm1268, %v1356, -inf
        %1457 = vmax.xlane.f32.xlu0 %v1456
        %v1458 = vpop.xlane.xlu0 %1457
        %v1459 = vsel %vm1268, %v1402, -inf
        %1460 = vmax.xlane.f32.xlu0 %v1459
        %v1461 = vpop.xlane.xlu0 %1460
        %v1462 = vsel %vm1268, %v1448, -inf
        %1463 = vmax.xlane.f32.xlu0 %v1462
        %v1464 = vpop.xlane.xlu0 %1463
        %v1465 = vsub.f32 %v1310, %v1455
        %v1466 = vsub.f32 %v1356, %v1458
        %v1467 = vsub.f32 %v1402, %v1461
        %v1468 = vsub.f32 %v1448, %v1464
        %v1469 = vmul.f32 %v1465, 1.442695
        %v1470 = vpow.pop %v1469
        %v1471 = vmul.f32 %v1466, 1.442695
        %v1472 = vpow.pop %v1471
        %v1473 = vmul.f32 %v1467, 1.442695
        %v1474 = vpow.pop %v1473
        %v1475 = vmul.f32 %v1468, 1.442695
        %v1476 = vpow.pop %v1475
        %v1477 = vsel %vm1268, %v1470, 0.0
        %1478 = vadd.xlane.f32.xlu0 %v1477
        %v1479 = vpop.xlane.xlu0 %1478
        %v1480 = vsel %vm1268, %v1472, 0.0
        %1481 = vadd.xlane.f32.xlu0 %v1480
        %v1482 = vpop.xlane.xlu0 %1481
        %v1483 = vsel %vm1268, %v1474, 0.0
        %1484 = vadd.xlane.f32.xlu0 %v1483
        %v1485 = vpop.xlane.xlu0 %1484
        %v1486 = vsel %vm1268, %v1476, 0.0
        %1487 = vadd.xlane.f32.xlu0 %v1486
        %v1488 = vpop.xlane.xlu0 %1487
        %v1489 = vrcp.pop %v1479
        %v1490 = vrcp.pop %v1482
        %v1491 = vrcp.pop %v1485
        %v1492 = vrcp.pop %v1488
        %v1493 = vmul.f32 %v1470, %v1489
        %v1494 = vmul.f32 %v1472, %v1490
        %v1495 = vmul.f32 %v1474, %v1491
        %v1496 = vmul.f32 %v1476, %v1492
        %v1497 = vpack.c.bf16 %v1493, %v1493
        %v1498 = vpack.c.bf16 %v1494, %v1494
        %v1499 = vpack.c.bf16 %v1495, %v1495
        %v1500 = vpack.c.bf16 %v1496, %v1496
        %v1501 = vpack.c.bf16 %v1249, %v1249
        %v1502 = vpack.c.bf16 %v1250, %v1250
        %v1503 = vpack.c.bf16 %v1251, %v1251
        %v1504 = vpack.c.bf16 %v1252, %v1252
        %v1506 = vsel %vm1268, %v1497, 0
        %vm1508 = vcmask 1043456
        %v1510 = vsel %vm1508, %v1501, 0
        %1512 = vmatprep.subr.bf16.mxu0 0
        %1513 = vmatpush1.bf16.msra.mxu0 %v1510
        %1514 = vmatprep.subr.bf16.mxu0 0
        %1515 = vmatpush1.bf16.msra.mxu0 0
        %1516 = vmatprep.subr.bf16.mxu0 0
        %1517 = vmatpush1.bf16.msra.mxu0 0
        %1518 = vmatprep.subr.bf16.mxu0 0
        %1519 = vmatpush1.bf16.msra.mxu0 0
        %1520 = vmatprep.subr.bf16.mxu0 0
        %1521 = vmatpush1.bf16.msra.mxu0 0
        %1522 = vmatprep.subr.bf16.mxu0 0
        %1523 = vmatpush1.bf16.msra.mxu0 0
        %1524 = vmatprep.subr.bf16.mxu0 0
        %1525 = vmatpush1.bf16.msra.mxu0 0
        %1526 = vmatprep.subr.bf16.mxu0 0
        %1527 = vmatpush1.bf16.msra.mxu0 0
        %1528 = vmatprep.subr.bf16.mxu0 0
        %1529 = vmatpush1.bf16.msra.mxu0 0
        %1530 = vmatprep.subr.bf16.mxu0 0
        %1531 = vmatpush1.bf16.msra.mxu0 0
        %1532 = vmatprep.subr.bf16.mxu0 0
        %1533 = vmatpush1.bf16.msra.mxu0 0
        %1534 = vmatprep.subr.bf16.mxu0 0
        %1535 = vmatpush1.bf16.msra.mxu0 0
        %1536 = vmatprep.subr.bf16.mxu0 0
        %1537 = vmatpush1.bf16.msra.mxu0 0
        %1538 = vmatprep.subr.bf16.mxu0 0
        %1539 = vmatpush1.bf16.msra.mxu0 0
        %1540 = vmatprep.subr.bf16.mxu0 0
        %1541 = vmatpush1.bf16.msra.mxu0 0
        %1542 = vmatprep.subr.bf16.mxu0 0
        %1543 = vmatpush1.bf16.msra.mxu0 0
        %1544 = vmatprep.mubr.bf16.mxu0 0
        %1545 = vmatmul.mubr.bf16.gmra.mrb[0].mxu0 %v1506
        %v1546 = vpop.f32.mrb[0].mxu0
        %v1547 = vadd.f32 0.0, %v1546
        %v1548 = vpop.f32.mrb[0].mxu0
        %v1549 = vpop.f32.mrb[0].mxu0
        %v1550 = vpop.f32.mrb[0].mxu0
        %1551 = vdwg.mxu0
        %v1553 = vsel %vm1268, %v1498, 0
        %v1556 = vsel %vm1508, %v1502, 0
        %1558 = vmatprep.subr.bf16.mxu0 0
        %1559 = vmatpush1.bf16.msra.mxu0 %v1556
        %1560 = vmatprep.subr.bf16.mxu0 0
        %1561 = vmatpush1.bf16.msra.mxu0 0
        %1562 = vmatprep.subr.bf16.mxu0 0
        %1563 = vmatpush1.bf16.msra.mxu0 0
        %1564 = vmatprep.subr.bf16.mxu0 0
        %1565 = vmatpush1.bf16.msra.mxu0 0
        %1566 = vmatprep.subr.bf16.mxu0 0
        %1567 = vmatpush1.bf16.msra.mxu0 0
        %1568 = vmatprep.subr.bf16.mxu0 0
        %1569 = vmatpush1.bf16.msra.mxu0 0
        %1570 = vmatprep.subr.bf16.mxu0 0
        %1571 = vmatpush1.bf16.msra.mxu0 0
        %1572 = vmatprep.subr.bf16.mxu0 0
        %1573 = vmatpush1.bf16.msra.mxu0 0
        %1574 = vmatprep.subr.bf16.mxu0 0
        %1575 = vmatpush1.bf16.msra.mxu0 0
        %1576 = vmatprep.subr.bf16.mxu0 0
        %1577 = vmatpush1.bf16.msra.mxu0 0
        %1578 = vmatprep.subr.bf16.mxu0 0
        %1579 = vmatpush1.bf16.msra.mxu0 0
        %1580 = vmatprep.subr.bf16.mxu0 0
        %1581 = vmatpush1.bf16.msra.mxu0 0
        %1582 = vmatprep.subr.bf16.mxu0 0
        %1583 = vmatpush1.bf16.msra.mxu0 0
        %1584 = vmatprep.subr.bf16.mxu0 0
        %1585 = vmatpush1.bf16.msra.mxu0 0
        %1586 = vmatprep.subr.bf16.mxu0 0
        %1587 = vmatpush1.bf16.msra.mxu0 0
        %1588 = vmatprep.subr.bf16.mxu0 0
        %1589 = vmatpush1.bf16.msra.mxu0 0
        %1590 = vmatprep.mubr.bf16.mxu0 0
        %1591 = vmatmul.mubr.bf16.gmra.mrb[0].mxu0 %v1553
        %v1592 = vpop.f32.mrb[0].mxu0
        %v1593 = vadd.f32 0.0, %v1592
        %v1594 = vpop.f32.mrb[0].mxu0
        %v1595 = vpop.f32.mrb[0].mxu0
        %v1596 = vpop.f32.mrb[0].mxu0
        %1597 = vdwg.mxu0
        %v1599 = vsel %vm1268, %v1499, 0
        %v1602 = vsel %vm1508, %v1503, 0
        %1604 = vmatprep.subr.bf16.mxu0 0
        %1605 = vmatpush1.bf16.msra.mxu0 %v1602
        %1606 = vmatprep.subr.bf16.mxu0 0
        %1607 = vmatpush1.bf16.msra.mxu0 0
        %1608 = vmatprep.subr.bf16.mxu0 0
        %1609 = vmatpush1.bf16.msra.mxu0 0
        %1610 = vmatprep.subr.bf16.mxu0 0
        %1611 = vmatpush1.bf16.msra.mxu0 0
        %1612 = vmatprep.subr.bf16.mxu0 0
        %1613 = vmatpush1.bf16.msra.mxu0 0
        %1614 = vmatprep.subr.bf16.mxu0 0
        %1615 = vmatpush1.bf16.msra.mxu0 0
        %1616 = vmatprep.subr.bf16.mxu0 0
        %1617 = vmatpush1.bf16.msra.mxu0 0
        %1618 = vmatprep.subr.bf16.mxu0 0
        %1619 = vmatpush1.bf16.msra.mxu0 0
        %1620 = vmatprep.subr.bf16.mxu0 0
        %1621 = vmatpush1.bf16.msra.mxu0 0
        %1622 = vmatprep.subr.bf16.mxu0 0
        %1623 = vmatpush1.bf16.msra.mxu0 0
        %1624 = vmatprep.subr.bf16.mxu0 0
        %1625 = vmatpush1.bf16.msra.mxu0 0
        %1626 = vmatprep.subr.bf16.mxu0 0
        %1627 = vmatpush1.bf16.msra.mxu0 0
        %1628 = vmatprep.subr.bf16.mxu0 0
        %1629 = vmatpush1.bf16.msra.mxu0 0
        %1630 = vmatprep.subr.bf16.mxu0 0
        %1631 = vmatpush1.bf16.msra.mxu0 0
        %1632 = vmatprep.subr.bf16.mxu0 0
        %1633 = vmatpush1.bf16.msra.mxu0 0
        %1634 = vmatprep.subr.bf16.mxu0 0
        %1635 = vmatpush1.bf16.msra.mxu0 0
        %1636 = vmatprep.mubr.bf16.mxu0 0
        %1637 = vmatmul.mubr.bf16.gmra.mrb[0].mxu0 %v1599
        %v1638 = vpop.f32.mrb[0].mxu0
        %v1639 = vadd.f32 0.0, %v1638
        %v1640 = vpop.f32.mrb[0].mxu0
        %v1641 = vpop.f32.mrb[0].mxu0
        %v1642 = vpop.f32.mrb[0].mxu0
        %1643 = vdwg.mxu0
        %v1645 = vsel %vm1268, %v1500, 0
        %v1648 = vsel %vm1508, %v1504, 0
        %1650 = vmatprep.subr.bf16.mxu0 0
        %1651 = vmatpush1.bf16.msra.mxu0 %v1648
        %1652 = vmatprep.subr.bf16.mxu0 0
        %1653 = vmatpush1.bf16.msra.mxu0 0
        %1654 = vmatprep.subr.bf16.mxu0 0
        %1655 = vmatpush1.bf16.msra.mxu0 0
        %1656 = vmatprep.subr.bf16.mxu0 0
        %1657 = vmatpush1.bf16.msra.mxu0 0
        %1658 = vmatprep.subr.bf16.mxu0 0
        %1659 = vmatpush1.bf16.msra.mxu0 0
        %1660 = vmatprep.subr.bf16.mxu0 0
        %1661 = vmatpush1.bf16.msra.mxu0 0
        %1662 = vmatprep.subr.bf16.mxu0 0
        %1663 = vmatpush1.bf16.msra.mxu0 0
        %1664 = vmatprep.subr.bf16.mxu0 0
        %1665 = vmatpush1.bf16.msra.mxu0 0
        %1666 = vmatprep.subr.bf16.mxu0 0
        %1667 = vmatpush1.bf16.msra.mxu0 0
        %1668 = vmatprep.subr.bf16.mxu0 0
        %1669 = vmatpush1.bf16.msra.mxu0 0
        %1670 = vmatprep.subr.bf16.mxu0 0
        %1671 = vmatpush1.bf16.msra.mxu0 0
        %1672 = vmatprep.subr.bf16.mxu0 0
        %1673 = vmatpush1.bf16.msra.mxu0 0
        %1674 = vmatprep.subr.bf16.mxu0 0
        %1675 = vmatpush1.bf16.msra.mxu0 0
        %1676 = vmatprep.subr.bf16.mxu0 0
        %1677 = vmatpush1.bf16.msra.mxu0 0
        %1678 = vmatprep.subr.bf16.mxu0 0
        %1679 = vmatpush1.bf16.msra.mxu0 0
        %1680 = vmatprep.subr.bf16.mxu0 0
        %1681 = vmatpush1.bf16.msra.mxu0 0
        %1682 = vmatprep.mubr.bf16.mxu0 0
        %1683 = vmatmul.mubr.bf16.gmra.mrb[0].mxu0 %v1645
        %v1684 = vpop.f32.mrb[0].mxu0
        %v1685 = vadd.f32 0.0, %v1684
        %v1686 = vpop.f32.mrb[0].mxu0
        %v1687 = vpop.f32.mrb[0].mxu0
        %v1688 = vpop.f32.mrb[0].mxu0
        %1689 = vdwg.mxu0
        %v1690 = vcombine.low %v1547, %v1639
        %v1691 = vcombine.high %v1547, %v1639
        %v1693 = vunpack.c.l.s4 1983009808
        %v1694 = vunpack.c.0.s8 %v1693
        %v1695 = vlaneseq
        %v1696 = vshrl.u32 %v1695, 7
        %v1697 = vsub.s32 %v1694, %v1696
        %v1698 = vrot.slane %v1690, %v1697
        %v1700 = vunpack.c.l.s4 1983009808
        %v1701 = vunpack.c.0.s8 %v1700
        %v1702 = vlaneseq
        %v1703 = vshrl.u32 %v1702, 7
        %v1704 = vsub.s32 %v1701, %v1703
        %v1705 = vrot.slane %v1691, %v1704
        %v1706 = vcombine.low %v1593, %v1685
        %v1707 = vcombine.high %v1593, %v1685
        %v1709 = vunpack.c.l.s4 1983009808
        %v1710 = vunpack.c.0.s8 %v1709
        %v1711 = vlaneseq
        %v1712 = vshrl.u32 %v1711, 7
        %v1713 = vsub.s32 %v1710, %v1712
        %v1714 = vrot.slane %v1706, %v1713
        %v1716 = vunpack.c.l.s4 1983009808
        %v1717 = vunpack.c.0.s8 %v1716
        %v1718 = vlaneseq
        %v1719 = vshrl.u32 %v1718, 7
        %v1720 = vsub.s32 %v1717, %v1719
        %v1721 = vrot.slane %v1707, %v1720
        %v1722 = vcombine.low %v1698, %v1714
        %v1723 = vcombine.high %v1698, %v1714
        %v1725 = vunpack.c.l.s4 1934713408
        %v1726 = vunpack.c.0.s8 %v1725
        %v1727 = vlaneseq
        %v1728 = vshrl.u32 %v1727, 7
        %v1729 = vsub.s32 %v1726, %v1728
        %v1730 = vrot.slane %v1722, %v1729
        %v1732 = vunpack.c.l.s4 1934713408
        %v1733 = vunpack.c.0.s8 %v1732
        %v1734 = vlaneseq
        %v1735 = vshrl.u32 %v1734, 7
        %v1736 = vsub.s32 %v1733, %v1735
        %v1737 = vrot.slane %v1723, %v1736
        %v1738 = vcombine.low %v1705, %v1721
        %v1739 = vcombine.high %v1705, %v1721
        %v1741 = vunpack.c.l.s4 1934713408
        %v1742 = vunpack.c.0.s8 %v1741
        %v1743 = vlaneseq
        %v1744 = vshrl.u32 %v1743, 7
        %v1745 = vsub.s32 %v1742, %v1744
        %v1746 = vrot.slane %v1738, %v1745
        %v1748 = vunpack.c.l.s4 1934713408
        %v1749 = vunpack.c.0.s8 %v1748
        %v1750 = vlaneseq
        %v1751 = vshrl.u32 %v1750, 7
        %v1752 = vsub.s32 %v1749, %v1751
        %v1753 = vrot.slane %v1739, %v1752
        %v1754 = vcombine.high %v1730, 0.0
        %v1755 = vcombine.high %v1737, 0.0
        %v1756 = vcombine.high %v1746, 0.0
        %v1757 = vcombine.high %v1753, 0.0
        %v1758 = vcombine.low %v1730, %v1737
        %v1760 = vunpack.c.l.s4 1983009808
        %v1761 = vunpack.c.0.s8 %v1760
        %v1762 = vlaneseq
        %v1763 = vshrl.u32 %v1762, 7
        %v1764 = vsub.s32 %v1761, %v1763
        %v1765 = vrot.slane %v1758, %v1764
        %v1766 = vcombine.low %v1754, %v1755
        %v1768 = vunpack.c.l.s4 1983009808
        %v1769 = vunpack.c.0.s8 %v1768
        %v1770 = vlaneseq
        %v1771 = vshrl.u32 %v1770, 7
        %v1772 = vsub.s32 %v1769, %v1771
        %v1773 = vrot.slane %v1766, %v1772
        %v1774 = vcombine.low %v1746, %v1753
        %v1776 = vunpack.c.l.s4 1983009808
        %v1777 = vunpack.c.0.s8 %v1776
        %v1778 = vlaneseq
        %v1779 = vshrl.u32 %v1778, 7
        %v1780 = vsub.s32 %v1777, %v1779
        %v1781 = vrot.slane %v1774, %v1780
        %v1782 = vcombine.low %v1756, %v1757
        %v1784 = vunpack.c.l.s4 1983009808
        %v1785 = vunpack.c.0.s8 %v1784
        %v1786 = vlaneseq
        %v1787 = vshrl.u32 %v1786, 7
        %v1788 = vsub.s32 %v1785, %v1787
        %v1789 = vrot.slane %v1782, %v1788
        %v1790 = vcombine.low %v1765, %v1773
        %v1791 = vcombine.high %v1765, %v1773
        %v1793 = vunpack.c.l.s4 1934713408
        %v1794 = vunpack.c.0.s8 %v1793
        %v1795 = vlaneseq
        %v1796 = vshrl.u32 %v1795, 7
        %v1797 = vsub.s32 %v1794, %v1796
        %v1798 = vrot.slane %v1790, %v1797
        %v1800 = vunpack.c.l.s4 1934713408
        %v1801 = vunpack.c.0.s8 %v1800
        %v1802 = vlaneseq
        %v1803 = vshrl.u32 %v1802, 7
        %v1804 = vsub.s32 %v1801, %v1803
        %v1805 = vrot.slane %v1791, %v1804
        %v1806 = vcombine.low %v1781, %v1789
        %v1807 = vcombine.high %v1781, %v1789
        %v1809 = vunpack.c.l.s4 1934713408
        %v1810 = vunpack.c.0.s8 %v1809
        %v1811 = vlaneseq
        %v1812 = vshrl.u32 %v1811, 7
        %v1813 = vsub.s32 %v1810, %v1812
        %v1814 = vrot.slane %v1806, %v1813
        %v1816 = vunpack.c.l.s4 1934713408
        %v1817 = vunpack.c.0.s8 %v1816
        %v1818 = vlaneseq
        %v1819 = vshrl.u32 %v1818, 7
        %v1820 = vsub.s32 %v1817, %v1819
        %v1821 = vrot.slane %v1807, %v1820
        %v1822 = vcombine.low %v1798, %v1814
        %v1823 = vcombine.high %v1798, %v1814
        %v1824 = vcombine.low %v1805, %v1821
        %v1825 = vcombine.high %v1805, %v1821
        %1827 = vrot.lane.b32.xlu0 %v1823, 8
        %v1828 = vpop.permute.xlu0 %1827
        %1831 = vrot.lane.b32.xlu0 %v1824, 16
        %v1832 = vpop.permute.xlu0 %1831
        %1835 = vrot.lane.b32.xlu0 %v1825, 24
        %v1836 = vpop.permute.xlu0 %1835
        %v1838 = vsel %vm1268, %v1822, %v1828
        %vm1839 = vcmask 130048
        %v1840 = vsel %vm1839, %v1838, %v1832
        %vm1841 = vcmask 195584
        %v1842 = vsel %vm1841, %v1840, %v1836
        %1844 = vrot.lane.b32.xlu0 %v808, 120
        %v1845 = vpop.permute.xlu0 %1844
        %1847 = vrot.lane.b32.xlu0 %v808, 112
        %v1848 = vpop.permute.xlu0 %1847
        %1850 = vrot.lane.b32.xlu0 %v808, 104
        %v1851 = vpop.permute.xlu0 %1850
        %v1853 = vcombine.low %v808, %v1848
        %v1854 = vcombine.high %v808, %v1848
        %v1856 = vunpack.c.l.s4 1983009808
        %v1857 = vunpack.c.0.s8 %v1856
        %v1858 = vlaneseq
        %v1859 = vshrl.u32 %v1858, 7
        %v1860 = vsub.s32 %v1857, %v1859
        %v1861 = vrot.slane %v1853, %v1860
        %v1863 = vunpack.c.l.s4 1983009808
        %v1864 = vunpack.c.0.s8 %v1863
        %v1865 = vlaneseq
        %v1866 = vshrl.u32 %v1865, 7
        %v1867 = vsub.s32 %v1864, %v1866
        %v1868 = vrot.slane %v1854, %v1867
        %v1869 = vcombine.low %v1845, %v1851
        %v1870 = vcombine.high %v1845, %v1851
        %v1872 = vunpack.c.l.s4 1983009808
        %v1873 = vunpack.c.0.s8 %v1872
        %v1874 = vlaneseq
        %v1875 = vshrl.u32 %v1874, 7
        %v1876 = vsub.s32 %v1873, %v1875
        %v1877 = vrot.slane %v1869, %v1876
        %v1879 = vunpack.c.l.s4 1983009808
        %v1880 = vunpack.c.0.s8 %v1879
        %v1881 = vlaneseq
        %v1882 = vshrl.u32 %v1881, 7
        %v1883 = vsub.s32 %v1880, %v1882
        %v1884 = vrot.slane %v1870, %v1883
        %v1885 = vcombine.low %v1861, %v1877
        %v1886 = vcombine.high %v1861, %v1877
        %v1888 = vunpack.c.l.s4 1934713408
        %v1889 = vunpack.c.0.s8 %v1888
        %v1890 = vlaneseq
        %v1891 = vshrl.u32 %v1890, 7
        %v1892 = vsub.s32 %v1889, %v1891
        %v1893 = vrot.slane %v1885, %v1892
        %v1895 = vunpack.c.l.s4 1934713408
        %v1896 = vunpack.c.0.s8 %v1895
        %v1897 = vlaneseq
        %v1898 = vshrl.u32 %v1897, 7
        %v1899 = vsub.s32 %v1896, %v1898
        %v1900 = vrot.slane %v1886, %v1899
        %v1901 = vcombine.low %v1868, %v1884
        %v1902 = vcombine.high %v1868, %v1884
        %v1904 = vunpack.c.l.s4 1934713408
        %v1905 = vunpack.c.0.s8 %v1904
        %v1906 = vlaneseq
        %v1907 = vshrl.u32 %v1906, 7
        %v1908 = vsub.s32 %v1905, %v1907
        %v1909 = vrot.slane %v1901, %v1908
        %v1911 = vunpack.c.l.s4 1934713408
        %v1912 = vunpack.c.0.s8 %v1911
        %v1913 = vlaneseq
        %v1914 = vshrl.u32 %v1913, 7
        %v1915 = vsub.s32 %v1912, %v1914
        %v1916 = vrot.slane %v1902, %v1915
        %v1917 = vcombine.high %v1893, 0.0
        %v1918 = vcombine.high %v1900, 0.0
        %v1919 = vcombine.high %v1909, 0.0
        %v1920 = vcombine.high %v1916, 0.0
        %v1921 = vcombine.low %v1893, %v1900
        %v1923 = vunpack.c.l.s4 1983009808
        %v1924 = vunpack.c.0.s8 %v1923
        %v1925 = vlaneseq
        %v1926 = vshrl.u32 %v1925, 7
        %v1927 = vsub.s32 %v1924, %v1926
        %v1928 = vrot.slane %v1921, %v1927
        %v1929 = vcombine.low %v1917, %v1918
        %v1931 = vunpack.c.l.s4 1983009808
        %v1932 = vunpack.c.0.s8 %v1931
        %v1933 = vlaneseq
        %v1934 = vshrl.u32 %v1933, 7
        %v1935 = vsub.s32 %v1932, %v1934
        %v1936 = vrot.slane %v1929, %v1935
        %v1937 = vcombine.low %v1909, %v1916
        %v1939 = vunpack.c.l.s4 1983009808
        %v1940 = vunpack.c.0.s8 %v1939
        %v1941 = vlaneseq
        %v1942 = vshrl.u32 %v1941, 7
        %v1943 = vsub.s32 %v1940, %v1942
        %v1944 = vrot.slane %v1937, %v1943
        %v1945 = vcombine.low %v1919, %v1920
        %v1947 = vunpack.c.l.s4 1983009808
        %v1948 = vunpack.c.0.s8 %v1947
        %v1949 = vlaneseq
        %v1950 = vshrl.u32 %v1949, 7
        %v1951 = vsub.s32 %v1948, %v1950
        %v1952 = vrot.slane %v1945, %v1951
        %v1953 = vcombine.low %v1928, %v1936
        %v1954 = vcombine.high %v1928, %v1936
        %v1956 = vunpack.c.l.s4 1934713408
        %v1957 = vunpack.c.0.s8 %v1956
        %v1958 = vlaneseq
        %v1959 = vshrl.u32 %v1958, 7
        %v1960 = vsub.s32 %v1957, %v1959
        %v1961 = vrot.slane %v1953, %v1960
        %v1963 = vunpack.c.l.s4 1934713408
        %v1964 = vunpack.c.0.s8 %v1963
        %v1965 = vlaneseq
        %v1966 = vshrl.u32 %v1965, 7
        %v1967 = vsub.s32 %v1964, %v1966
        %v1968 = vrot.slane %v1954, %v1967
        %v1969 = vcombine.low %v1944, %v1952
        %v1970 = vcombine.high %v1944, %v1952
        %v1972 = vunpack.c.l.s4 1934713408
        %v1973 = vunpack.c.0.s8 %v1972
        %v1974 = vlaneseq
        %v1975 = vshrl.u32 %v1974, 7
        %v1976 = vsub.s32 %v1973, %v1975
        %v1977 = vrot.slane %v1969, %v1976
        %v1979 = vunpack.c.l.s4 1934713408
        %v1980 = vunpack.c.0.s8 %v1979
        %v1981 = vlaneseq
        %v1982 = vshrl.u32 %v1981, 7
        %v1983 = vsub.s32 %v1980, %v1982
        %v1984 = vrot.slane %v1970, %v1983
        %v1985 = vcombine.low %v1961, %v1977
        %v1986 = vcombine.high %v1961, %v1977
        %v1987 = vcombine.low %v1968, %v1984
        %v1988 = vcombine.high %v1968, %v1984
        %1989 = vrot.lane.b32.xlu0 %v808, 96
        %v1990 = vpop.permute.xlu0 %1989
        %1991 = vrot.lane.b32.xlu0 %v1845, 96
        %v1992 = vpop.permute.xlu0 %1991
        %1993 = vrot.lane.b32.xlu0 %v1848, 96
        %v1994 = vpop.permute.xlu0 %1993
        %1995 = vrot.lane.b32.xlu0 %v1851, 96
        %v1996 = vpop.permute.xlu0 %1995
        %v2001 = vcombine.low %v1990, %v1994
        %v2002 = vcombine.high %v1990, %v1994
        %v2004 = vunpack.c.l.s4 1983009808
        %v2005 = vunpack.c.0.s8 %v2004
        %v2006 = vlaneseq
        %v2007 = vshrl.u32 %v2006, 7
        %v2008 = vsub.s32 %v2005, %v2007
        %v2009 = vrot.slane %v2001, %v2008
        %v2011 = vunpack.c.l.s4 1983009808
        %v2012 = vunpack.c.0.s8 %v2011
        %v2013 = vlaneseq
        %v2014 = vshrl.u32 %v2013, 7
        %v2015 = vsub.s32 %v2012, %v2014
        %v2016 = vrot.slane %v2002, %v2015
        %v2017 = vcombine.low %v1992, %v1996
        %v2018 = vcombine.high %v1992, %v1996
        %v2020 = vunpack.c.l.s4 1983009808
        %v2021 = vunpack.c.0.s8 %v2020
        %v2022 = vlaneseq
        %v2023 = vshrl.u32 %v2022, 7
        %v2024 = vsub.s32 %v2021, %v2023
        %v2025 = vrot.slane %v2017, %v2024
        %v2027 = vunpack.c.l.s4 1983009808
        %v2028 = vunpack.c.0.s8 %v2027
        %v2029 = vlaneseq
        %v2030 = vshrl.u32 %v2029, 7
        %v2031 = vsub.s32 %v2028, %v2030
        %v2032 = vrot.slane %v2018, %v2031
        %v2033 = vcombine.low %v2009, %v2025
        %v2034 = vcombine.high %v2009, %v2025
        %v2036 = vunpack.c.l.s4 1934713408
        %v2037 = vunpack.c.0.s8 %v2036
        %v2038 = vlaneseq
        %v2039 = vshrl.u32 %v2038, 7
        %v2040 = vsub.s32 %v2037, %v2039
        %v2041 = vrot.slane %v2033, %v2040
        %v2043 = vunpack.c.l.s4 1934713408
        %v2044 = vunpack.c.0.s8 %v2043
        %v2045 = vlaneseq
        %v2046 = vshrl.u32 %v2045, 7
        %v2047 = vsub.s32 %v2044, %v2046
        %v2048 = vrot.slane %v2034, %v2047
        %v2049 = vcombine.low %v2016, %v2032
        %v2050 = vcombine.high %v2016, %v2032
        %v2052 = vunpack.c.l.s4 1934713408
        %v2053 = vunpack.c.0.s8 %v2052
        %v2054 = vlaneseq
        %v2055 = vshrl.u32 %v2054, 7
        %v2056 = vsub.s32 %v2053, %v2055
        %v2057 = vrot.slane %v2049, %v2056
        %v2059 = vunpack.c.l.s4 1934713408
        %v2060 = vunpack.c.0.s8 %v2059
        %v2061 = vlaneseq
        %v2062 = vshrl.u32 %v2061, 7
        %v2063 = vsub.s32 %v2060, %v2062
        %v2064 = vrot.slane %v2050, %v2063
        %v2065 = vcombine.high %v2041, 0.0
        %v2066 = vcombine.high %v2048, 0.0
        %v2067 = vcombine.high %v2057, 0.0
        %v2068 = vcombine.high %v2064, 0.0
        %v2069 = vcombine.low %v2041, %v2048
        %v2071 = vunpack.c.l.s4 1983009808
        %v2072 = vunpack.c.0.s8 %v2071
        %v2073 = vlaneseq
        %v2074 = vshrl.u32 %v2073, 7
        %v2075 = vsub.s32 %v2072, %v2074
        %v2076 = vrot.slane %v2069, %v2075
        %v2077 = vcombine.low %v2065, %v2066
        %v2079 = vunpack.c.l.s4 1983009808
        %v2080 = vunpack.c.0.s8 %v2079
        %v2081 = vlaneseq
        %v2082 = vshrl.u32 %v2081, 7
        %v2083 = vsub.s32 %v2080, %v2082
        %v2084 = vrot.slane %v2077, %v2083
        %v2085 = vcombine.low %v2057, %v2064
        %v2087 = vunpack.c.l.s4 1983009808
        %v2088 = vunpack.c.0.s8 %v2087
        %v2089 = vlaneseq
        %v2090 = vshrl.u32 %v2089, 7
        %v2091 = vsub.s32 %v2088, %v2090
        %v2092 = vrot.slane %v2085, %v2091
        %v2093 = vcombine.low %v2067, %v2068
        %v2095 = vunpack.c.l.s4 1983009808
        %v2096 = vunpack.c.0.s8 %v2095
        %v2097 = vlaneseq
        %v2098 = vshrl.u32 %v2097, 7
        %v2099 = vsub.s32 %v2096, %v2098
        %v2100 = vrot.slane %v2093, %v2099
        %v2101 = vcombine.low %v2076, %v2084
        %v2102 = vcombine.high %v2076, %v2084
        %v2104 = vunpack.c.l.s4 1934713408
        %v2105 = vunpack.c.0.s8 %v2104
        %v2106 = vlaneseq
        %v2107 = vshrl.u32 %v2106, 7
        %v2108 = vsub.s32 %v2105, %v2107
        %v2109 = vrot.slane %v2101, %v2108
        %v2111 = vunpack.c.l.s4 1934713408
        %v2112 = vunpack.c.0.s8 %v2111
        %v2113 = vlaneseq
        %v2114 = vshrl.u32 %v2113, 7
        %v2115 = vsub.s32 %v2112, %v2114
        %v2116 = vrot.slane %v2102, %v2115
        %v2117 = vcombine.low %v2092, %v2100
        %v2118 = vcombine.high %v2092, %v2100
        %v2120 = vunpack.c.l.s4 1934713408
        %v2121 = vunpack.c.0.s8 %v2120
        %v2122 = vlaneseq
        %v2123 = vshrl.u32 %v2122, 7
        %v2124 = vsub.s32 %v2121, %v2123
        %v2125 = vrot.slane %v2117, %v2124
        %v2127 = vunpack.c.l.s4 1934713408
        %v2128 = vunpack.c.0.s8 %v2127
        %v2129 = vlaneseq
        %v2130 = vshrl.u32 %v2129, 7
        %v2131 = vsub.s32 %v2128, %v2130
        %v2132 = vrot.slane %v2118, %v2131
        %v2133 = vcombine.low %v2109, %v2125
        %v2134 = vcombine.high %v2109, %v2125
        %v2135 = vcombine.low %v2116, %v2132
        %v2136 = vcombine.high %v2116, %v2132
        %2137 = vrot.lane.b32.xlu0 %v808, 64
        %v2138 = vpop.permute.xlu0 %2137
        %2139 = vrot.lane.b32.xlu0 %v1845, 64
        %v2140 = vpop.permute.xlu0 %2139
        %2141 = vrot.lane.b32.xlu0 %v1848, 64
        %v2142 = vpop.permute.xlu0 %2141
        %2143 = vrot.lane.b32.xlu0 %v1851, 64
        %v2144 = vpop.permute.xlu0 %2143
        %v2149 = vcombine.low %v2138, %v2142
        %v2150 = vcombine.high %v2138, %v2142
        %v2152 = vunpack.c.l.s4 1983009808
        %v2153 = vunpack.c.0.s8 %v2152
        %v2154 = vlaneseq
        %v2155 = vshrl.u32 %v2154, 7
        %v2156 = vsub.s32 %v2153, %v2155
        %v2157 = vrot.slane %v2149, %v2156
        %v2159 = vunpack.c.l.s4 1983009808
        %v2160 = vunpack.c.0.s8 %v2159
        %v2161 = vlaneseq
        %v2162 = vshrl.u32 %v2161, 7
        %v2163 = vsub.s32 %v2160, %v2162
        %v2164 = vrot.slane %v2150, %v2163
        %v2165 = vcombine.low %v2140, %v2144
        %v2166 = vcombine.high %v2140, %v2144
        %v2168 = vunpack.c.l.s4 1983009808
        %v2169 = vunpack.c.0.s8 %v2168
        %v2170 = vlaneseq
        %v2171 = vshrl.u32 %v2170, 7
        %v2172 = vsub.s32 %v2169, %v2171
        %v2173 = vrot.slane %v2165, %v2172
        %v2175 = vunpack.c.l.s4 1983009808
        %v2176 = vunpack.c.0.s8 %v2175
        %v2177 = vlaneseq
        %v2178 = vshrl.u32 %v2177, 7
        %v2179 = vsub.s32 %v2176, %v2178
        %v2180 = vrot.slane %v2166, %v2179
        %v2181 = vcombine.low %v2157, %v2173
        %v2182 = vcombine.high %v2157, %v2173
        %v2184 = vunpack.c.l.s4 1934713408
        %v2185 = vunpack.c.0.s8 %v2184
        %v2186 = vlaneseq
        %v2187 = vshrl.u32 %v2186, 7
        %v2188 = vsub.s32 %v2185, %v2187
        %v2189 = vrot.slane %v2181, %v2188
        %v2191 = vunpack.c.l.s4 1934713408
        %v2192 = vunpack.c.0.s8 %v2191
        %v2193 = vlaneseq
        %v2194 = vshrl.u32 %v2193, 7
        %v2195 = vsub.s32 %v2192, %v2194
        %v2196 = vrot.slane %v2182, %v2195
        %v2197 = vcombine.low %v2164, %v2180
        %v2198 = vcombine.high %v2164, %v2180
        %v2200 = vunpack.c.l.s4 1934713408
        %v2201 = vunpack.c.0.s8 %v2200
        %v2202 = vlaneseq
        %v2203 = vshrl.u32 %v2202, 7
        %v2204 = vsub.s32 %v2201, %v2203
        %v2205 = vrot.slane %v2197, %v2204
        %v2207 = vunpack.c.l.s4 1934713408
        %v2208 = vunpack.c.0.s8 %v2207
        %v2209 = vlaneseq
        %v2210 = vshrl.u32 %v2209, 7
        %v2211 = vsub.s32 %v2208, %v2210
        %v2212 = vrot.slane %v2198, %v2211
        %v2213 = vcombine.high %v2189, 0.0
        %v2214 = vcombine.high %v2196, 0.0
        %v2215 = vcombine.high %v2205, 0.0
        %v2216 = vcombine.high %v2212, 0.0
        %v2217 = vcombine.low %v2189, %v2196
        %v2219 = vunpack.c.l.s4 1983009808
        %v2220 = vunpack.c.0.s8 %v2219
        %v2221 = vlaneseq
        %v2222 = vshrl.u32 %v2221, 7
        %v2223 = vsub.s32 %v2220, %v2222
        %v2224 = vrot.slane %v2217, %v2223
        %v2225 = vcombine.low %v2213, %v2214
        %v2227 = vunpack.c.l.s4 1983009808
        %v2228 = vunpack.c.0.s8 %v2227
        %v2229 = vlaneseq
        %v2230 = vshrl.u32 %v2229, 7
        %v2231 = vsub.s32 %v2228, %v2230
        %v2232 = vrot.slane %v2225, %v2231
        %v2233 = vcombine.low %v2205, %v2212
        %v2235 = vunpack.c.l.s4 1983009808
        %v2236 = vunpack.c.0.s8 %v2235
        %v2237 = vlaneseq
        %v2238 = vshrl.u32 %v2237, 7
        %v2239 = vsub.s32 %v2236, %v2238
        %v2240 = vrot.slane %v2233, %v2239
        %v2241 = vcombine.low %v2215, %v2216
        %v2243 = vunpack.c.l.s4 1983009808
        %v2244 = vunpack.c.0.s8 %v2243
        %v2245 = vlaneseq
        %v2246 = vshrl.u32 %v2245, 7
        %v2247 = vsub.s32 %v2244, %v2246
        %v2248 = vrot.slane %v2241, %v2247
        %v2249 = vcombine.low %v2224, %v2232
        %v2250 = vcombine.high %v2224, %v2232
        %v2252 = vunpack.c.l.s4 1934713408
        %v2253 = vunpack.c.0.s8 %v2252
        %v2254 = vlaneseq
        %v2255 = vshrl.u32 %v2254, 7
        %v2256 = vsub.s32 %v2253, %v2255
        %v2257 = vrot.slane %v2249, %v2256
        %v2259 = vunpack.c.l.s4 1934713408
        %v2260 = vunpack.c.0.s8 %v2259
        %v2261 = vlaneseq
        %v2262 = vshrl.u32 %v2261, 7
        %v2263 = vsub.s32 %v2260, %v2262
        %v2264 = vrot.slane %v2250, %v2263
        %v2265 = vcombine.low %v2240, %v2248
        %v2266 = vcombine.high %v2240, %v2248
        %v2268 = vunpack.c.l.s4 1934713408
        %v2269 = vunpack.c.0.s8 %v2268
        %v2270 = vlaneseq
        %v2271 = vshrl.u32 %v2270, 7
        %v2272 = vsub.s32 %v2269, %v2271
        %v2273 = vrot.slane %v2265, %v2272
        %v2275 = vunpack.c.l.s4 1934713408
        %v2276 = vunpack.c.0.s8 %v2275
        %v2277 = vlaneseq
        %v2278 = vshrl.u32 %v2277, 7
        %v2279 = vsub.s32 %v2276, %v2278
        %v2280 = vrot.slane %v2266, %v2279
        %v2281 = vcombine.low %v2257, %v2273
        %v2282 = vcombine.high %v2257, %v2273
        %v2283 = vcombine.low %v2264, %v2280
        %v2284 = vcombine.high %v2264, %v2280
        %v2285 = vpack.c.bf16 %v1985, %v1985
        %v2286 = vpack.c.bf16 %v1986, %v1986
        %v2287 = vpack.c.bf16 %v1987, %v1987
        %v2288 = vpack.c.bf16 %v1988, %v1988
        %v2289 = vpack.c.bf16 %v2133, %v2133
        %v2290 = vpack.c.bf16 %v2134, %v2134
        %v2291 = vpack.c.bf16 %v2135, %v2135
        %v2292 = vpack.c.bf16 %v2136, %v2136
        %s2293 = scalar_lea.vmem %s638, 1
        %v2294 = vld [vmem:[%s2293] sm:$0x1]
        %v2296 = vlaneseq
        %v2297 = vshrl.u32 %v2296, 7
        %v2298 = vsub.s32 0, %v2297
        %v2299 = vrot.slane %v2294, %v2298
        %v2302 = vsel %vm1268, %v2285, 0
        %v2305 = vsel %vm1268, %v2289, 0
        %2307 = vmatprep.subr.bf16.mxu0 0
        %2308 = vmatpush1.bf16.xpose.msra.mxu0 %v2305
        %2309 = vmatprep.subr.bf16.mxu0 0
        %2310 = vmatpush1.bf16.xpose.msra.mxu0 0
        %2311 = vmatprep.subr.bf16.mxu0 0
        %2312 = vmatpush1.bf16.xpose.msra.mxu0 0
        %2313 = vmatprep.subr.bf16.mxu0 0
        %2314 = vmatpush1.bf16.xpose.msra.mxu0 0
        %2315 = vmatprep.subr.bf16.mxu0 0
        %2316 = vmatpush1.bf16.xpose.msra.mxu0 0
        %2317 = vmatprep.subr.bf16.mxu0 0
        %2318 = vmatpush1.bf16.xpose.msra.mxu0 0
        %2319 = vmatprep.subr.bf16.mxu0 0
        %2320 = vmatpush1.bf16.xpose.msra.mxu0 0
        %2321 = vmatprep.subr.bf16.mxu0 0
        %2322 = vmatpush1.bf16.xpose.msra.mxu0 0
        %2323 = vmatprep.subr.bf16.mxu0 0
        %2324 = vmatpush1.bf16.xpose.msra.mxu0 0
        %2325 = vmatprep.subr.bf16.mxu0 0
        %2326 = vmatpush1.bf16.xpose.msra.mxu0 0
        %2327 = vmatprep.subr.bf16.mxu0 0
        %2328 = vmatpush1.bf16.xpose.msra.mxu0 0
        %2329 = vmatprep.subr.bf16.mxu0 0
        %2330 = vmatpush1.bf16.xpose.msra.mxu0 0
        %2331 = vmatprep.subr.bf16.mxu0 0
        %2332 = vmatpush1.bf16.xpose.msra.mxu0 0
        %2333 = vmatprep.subr.bf16.mxu0 0
        %2334 = vmatpush1.bf16.xpose.msra.mxu0 0
        %2335 = vmatprep.subr.bf16.mxu0 0
        %2336 = vmatpush1.bf16.xpose.msra.mxu0 0
        %2337 = vmatprep.subr.bf16.mxu0 0
        %2338 = vmatpush1.bf16.xpose.msra.mxu0 0
        %2339 = vmatprep.mubr.bf16.mxu0 0
        %2340 = vmatmul.mubr.bf16.gmra.mrb[0].mxu0 %v2302
        %v2341 = vpop.f32.mrb[0].mxu0
        %v2342 = vadd.f32 %v2299, %v2341
        %v2343 = vpop.f32.mrb[0].mxu0
        %v2344 = vpop.f32.mrb[0].mxu0
        %v2345 = vpop.f32.mrb[0].mxu0
        %2346 = vdwg.mxu0
        %v2348 = vsel %vm1268, %v2286, 0
        %v2351 = vsel %vm1268, %v2290, 0
        %2353 = vmatprep.subr.bf16.mxu0 0
        %2354 = vmatpush1.bf16.xpose.msra.mxu0 %v2351
        %2355 = vmatprep.subr.bf16.mxu0 0
        %2356 = vmatpush1.bf16.xpose.msra.mxu0 0
        %2357 = vmatprep.subr.bf16.mxu0 0
        %2358 = vmatpush1.bf16.xpose.msra.mxu0 0
        %2359 = vmatprep.subr.bf16.mxu0 0
        %2360 = vmatpush1.bf16.xpose.msra.mxu0 0
        %2361 = vmatprep.subr.bf16.mxu0 0
        %2362 = vmatpush1.bf16.xpose.msra.mxu0 0
        %2363 = vmatprep.subr.bf16.mxu0 0
        %2364 = vmatpush1.bf16.xpose.msra.mxu0 0
        %2365 = vmatprep.subr.bf16.mxu0 0
        %2366 = vmatpush1.bf16.xpose.msra.mxu0 0
        %2367 = vmatprep.subr.bf16.mxu0 0
        %2368 = vmatpush1.bf16.xpose.msra.mxu0 0
        %2369 = vmatprep.subr.bf16.mxu0 0
        %2370 = vmatpush1.bf16.xpose.msra.mxu0 0
        %2371 = vmatprep.subr.bf16.mxu0 0
        %2372 = vmatpush1.bf16.xpose.msra.mxu0 0
        %2373 = vmatprep.subr.bf16.mxu0 0
        %2374 = vmatpush1.bf16.xpose.msra.mxu0 0
        %2375 = vmatprep.subr.bf16.mxu0 0
        %2376 = vmatpush1.bf16.xpose.msra.mxu0 0
        %2377 = vmatprep.subr.bf16.mxu0 0
        %2378 = vmatpush1.bf16.xpose.msra.mxu0 0
        %2379 = vmatprep.subr.bf16.mxu0 0
        %2380 = vmatpush1.bf16.xpose.msra.mxu0 0
        %2381 = vmatprep.subr.bf16.mxu0 0
        %2382 = vmatpush1.bf16.xpose.msra.mxu0 0
        %2383 = vmatprep.subr.bf16.mxu0 0
        %2384 = vmatpush1.bf16.xpose.msra.mxu0 0
        %2385 = vmatprep.mubr.bf16.mxu0 0
        %2386 = vmatmul.mubr.bf16.gmra.mrb[0].mxu0 %v2348
        %v2387 = vpop.f32.mrb[0].mxu0
        %v2388 = vadd.f32 %v2299, %v2387
        %v2389 = vpop.f32.mrb[0].mxu0
        %v2390 = vpop.f32.mrb[0].mxu0
        %v2391 = vpop.f32.mrb[0].mxu0
        %2392 = vdwg.mxu0
        %v2394 = vsel %vm1268, %v2287, 0
        %v2397 = vsel %vm1268, %v2291, 0
        %2399 = vmatprep.subr.bf16.mxu0 0
        %2400 = vmatpush1.bf16.xpose.msra.mxu0 %v2397
        %2401 = vmatprep.subr.bf16.mxu0 0
        %2402 = vmatpush1.bf16.xpose.msra.mxu0 0
        %2403 = vmatprep.subr.bf16.mxu0 0
        %2404 = vmatpush1.bf16.xpose.msra.mxu0 0
        %2405 = vmatprep.subr.bf16.mxu0 0
        %2406 = vmatpush1.bf16.xpose.msra.mxu0 0
        %2407 = vmatprep.subr.bf16.mxu0 0
        %2408 = vmatpush1.bf16.xpose.msra.mxu0 0
        %2409 = vmatprep.subr.bf16.mxu0 0
        %2410 = vmatpush1.bf16.xpose.msra.mxu0 0
        %2411 = vmatprep.subr.bf16.mxu0 0
        %2412 = vmatpush1.bf16.xpose.msra.mxu0 0
        %2413 = vmatprep.subr.bf16.mxu0 0
        %2414 = vmatpush1.bf16.xpose.msra.mxu0 0
        %2415 = vmatprep.subr.bf16.mxu0 0
        %2416 = vmatpush1.bf16.xpose.msra.mxu0 0
        %2417 = vmatprep.subr.bf16.mxu0 0
        %2418 = vmatpush1.bf16.xpose.msra.mxu0 0
        %2419 = vmatprep.subr.bf16.mxu0 0
        %2420 = vmatpush1.bf16.xpose.msra.mxu0 0
        %2421 = vmatprep.subr.bf16.mxu0 0
        %2422 = vmatpush1.bf16.xpose.msra.mxu0 0
        %2423 = vmatprep.subr.bf16.mxu0 0
        %2424 = vmatpush1.bf16.xpose.msra.mxu0 0
        %2425 = vmatprep.subr.bf16.mxu0 0
        %2426 = vmatpush1.bf16.xpose.msra.mxu0 0
        %2427 = vmatprep.subr.bf16.mxu0 0
        %2428 = vmatpush1.bf16.xpose.msra.mxu0 0
        %2429 = vmatprep.subr.bf16.mxu0 0
        %2430 = vmatpush1.bf16.xpose.msra.mxu0 0
        %2431 = vmatprep.mubr.bf16.mxu0 0
        %2432 = vmatmul.mubr.bf16.gmra.mrb[0].mxu0 %v2394
        %v2433 = vpop.f32.mrb[0].mxu0
        %v2434 = vadd.f32 %v2299, %v2433
        %v2435 = vpop.f32.mrb[0].mxu0
        %v2436 = vpop.f32.mrb[0].mxu0
        %v2437 = vpop.f32.mrb[0].mxu0
        %2438 = vdwg.mxu0
        %v2440 = vsel %vm1268, %v2288, 0
        %v2443 = vsel %vm1268, %v2292, 0
        %2445 = vmatprep.subr.bf16.mxu0 0
        %2446 = vmatpush1.bf16.xpose.msra.mxu0 %v2443
        %2447 = vmatprep.subr.bf16.mxu0 0
        %2448 = vmatpush1.bf16.xpose.msra.mxu0 0
        %2449 = vmatprep.subr.bf16.mxu0 0
        %2450 = vmatpush1.bf16.xpose.msra.mxu0 0
        %2451 = vmatprep.subr.bf16.mxu0 0
        %2452 = vmatpush1.bf16.xpose.msra.mxu0 0
        %2453 = vmatprep.subr.bf16.mxu0 0
        %2454 = vmatpush1.bf16.xpose.msra.mxu0 0
        %2455 = vmatprep.subr.bf16.mxu0 0
        %2456 = vmatpush1.bf16.xpose.msra.mxu0 0
        %2457 = vmatprep.subr.bf16.mxu0 0
        %2458 = vmatpush1.bf16.xpose.msra.mxu0 0
        %2459 = vmatprep.subr.bf16.mxu0 0
        %2460 = vmatpush1.bf16.xpose.msra.mxu0 0
        %2461 = vmatprep.subr.bf16.mxu0 0
        %2462 = vmatpush1.bf16.xpose.msra.mxu0 0
        %2463 = vmatprep.subr.bf16.mxu0 0
        %2464 = vmatpush1.bf16.xpose.msra.mxu0 0
        %2465 = vmatprep.subr.bf16.mxu0 0
        %2466 = vmatpush1.bf16.xpose.msra.mxu0 0
        %2467 = vmatprep.subr.bf16.mxu0 0
        %2468 = vmatpush1.bf16.xpose.msra.mxu0 0
        %2469 = vmatprep.subr.bf16.mxu0 0
        %2470 = vmatpush1.bf16.xpose.msra.mxu0 0
        %2471 = vmatprep.subr.bf16.mxu0 0
        %2472 = vmatpush1.bf16.xpose.msra.mxu0 0
        %2473 = vmatprep.subr.bf16.mxu0 0
        %2474 = vmatpush1.bf16.xpose.msra.mxu0 0
        %2475 = vmatprep.subr.bf16.mxu0 0
        %2476 = vmatpush1.bf16.xpose.msra.mxu0 0
        %2477 = vmatprep.mubr.bf16.mxu0 0
        %2478 = vmatmul.mubr.bf16.gmra.mrb[0].mxu0 %v2440
        %v2479 = vpop.f32.mrb[0].mxu0
        %v2480 = vadd.f32 %v2299, %v2479
        %v2481 = vpop.f32.mrb[0].mxu0
        %v2482 = vpop.f32.mrb[0].mxu0
        %v2483 = vpop.f32.mrb[0].mxu0
        %2484 = vdwg.mxu0
        %v2485 = vsel %vm1268, %v2342, -inf
        %2486 = vmax.xlane.f32.xlu0 %v2485
        %v2487 = vpop.xlane.xlu0 %2486
        %v2488 = vsel %vm1268, %v2388, -inf
        %2489 = vmax.xlane.f32.xlu0 %v2488
        %v2490 = vpop.xlane.xlu0 %2489
        %v2491 = vsel %vm1268, %v2434, -inf
        %2492 = vmax.xlane.f32.xlu0 %v2491
        %v2493 = vpop.xlane.xlu0 %2492
        %v2494 = vsel %vm1268, %v2480, -inf
        %2495 = vmax.xlane.f32.xlu0 %v2494
        %v2496 = vpop.xlane.xlu0 %2495
        %v2497 = vsub.f32 %v2342, %v2487
        %v2498 = vsub.f32 %v2388, %v2490
        %v2499 = vsub.f32 %v2434, %v2493
        %v2500 = vsub.f32 %v2480, %v2496
        %v2501 = vmul.f32 %v2497, 1.442695
        %v2502 = vpow.pop %v2501
        %v2503 = vmul.f32 %v2498, 1.442695
        %v2504 = vpow.pop %v2503
        %v2505 = vmul.f32 %v2499, 1.442695
        %v2506 = vpow.pop %v2505
        %v2507 = vmul.f32 %v2500, 1.442695
        %v2508 = vpow.pop %v2507
        %v2509 = vsel %vm1268, %v2502, 0.0
        %2510 = vadd.xlane.f32.xlu0 %v2509
        %v2511 = vpop.xlane.xlu0 %2510
        %v2512 = vsel %vm1268, %v2504, 0.0
        %2513 = vadd.xlane.f32.xlu0 %v2512
        %v2514 = vpop.xlane.xlu0 %2513
        %v2515 = vsel %vm1268, %v2506, 0.0
        %2516 = vadd.xlane.f32.xlu0 %v2515
        %v2517 = vpop.xlane.xlu0 %2516
        %v2518 = vsel %vm1268, %v2508, 0.0
        %2519 = vadd.xlane.f32.xlu0 %v2518
        %v2520 = vpop.xlane.xlu0 %2519
        %v2521 = vrcp.pop %v2511
        %v2522 = vrcp.pop %v2514
        %v2523 = vrcp.pop %v2517
        %v2524 = vrcp.pop %v2520
        %v2525 = vmul.f32 %v2502, %v2521
        %v2526 = vmul.f32 %v2504, %v2522
        %v2527 = vmul.f32 %v2506, %v2523
        %v2528 = vmul.f32 %v2508, %v2524
        %v2529 = vpack.c.bf16 %v2525, %v2525
        %v2530 = vpack.c.bf16 %v2526, %v2526
        %v2531 = vpack.c.bf16 %v2527, %v2527
        %v2532 = vpack.c.bf16 %v2528, %v2528
        %v2533 = vpack.c.bf16 %v2281, %v2281
        %v2534 = vpack.c.bf16 %v2282, %v2282
        %v2535 = vpack.c.bf16 %v2283, %v2283
        %v2536 = vpack.c.bf16 %v2284, %v2284
        %v2538 = vsel %vm1268, %v2529, 0
        %v2541 = vsel %vm1508, %v2533, 0
        %2543 = vmatprep.subr.bf16.mxu0 0
        %2544 = vmatpush1.bf16.msra.mxu0 %v2541
        %2545 = vmatprep.subr.bf16.mxu0 0
        %2546 = vmatpush1.bf16.msra.mxu0 0
        %2547 = vmatprep.subr.bf16.mxu0 0
        %2548 = vmatpush1.bf16.msra.mxu0 0
        %2549 = vmatprep.subr.bf16.mxu0 0
        %2550 = vmatpush1.bf16.msra.mxu0 0
        %2551 = vmatprep.subr.bf16.mxu0 0
        %2552 = vmatpush1.bf16.msra.mxu0 0
        %2553 = vmatprep.subr.bf16.mxu0 0
        %2554 = vmatpush1.bf16.msra.mxu0 0
        %2555 = vmatprep.subr.bf16.mxu0 0
        %2556 = vmatpush1.bf16.msra.mxu0 0
        %2557 = vmatprep.subr.bf16.mxu0 0
        %2558 = vmatpush1.bf16.msra.mxu0 0
        %2559 = vmatprep.subr.bf16.mxu0 0
        %2560 = vmatpush1.bf16.msra.mxu0 0
        %2561 = vmatprep.subr.bf16.mxu0 0
        %2562 = vmatpush1.bf16.msra.mxu0 0
        %2563 = vmatprep.subr.bf16.mxu0 0
        %2564 = vmatpush1.bf16.msra.mxu0 0
        %2565 = vmatprep.subr.bf16.mxu0 0
        %2566 = vmatpush1.bf16.msra.mxu0 0
        %2567 = vmatprep.subr.bf16.mxu0 0
        %2568 = vmatpush1.bf16.msra.mxu0 0
        %2569 = vmatprep.subr.bf16.mxu0 0
        %2570 = vmatpush1.bf16.msra.mxu0 0
        %2571 = vmatprep.subr.bf16.mxu0 0
        %2572 = vmatpush1.bf16.msra.mxu0 0
        %2573 = vmatprep.subr.bf16.mxu0 0
        %2574 = vmatpush1.bf16.msra.mxu0 0
        %2575 = vmatprep.mubr.bf16.mxu0 0
        %2576 = vmatmul.mubr.bf16.gmra.mrb[0].mxu0 %v2538
        %v2577 = vpop.f32.mrb[0].mxu0
        %v2578 = vadd.f32 0.0, %v2577
        %v2579 = vpop.f32.mrb[0].mxu0
        %v2580 = vpop.f32.mrb[0].mxu0
        %v2581 = vpop.f32.mrb[0].mxu0
        %2582 = vdwg.mxu0
        %v2584 = vsel %vm1268, %v2530, 0
        %v2587 = vsel %vm1508, %v2534, 0
        %2589 = vmatprep.subr.bf16.mxu0 0
        %2590 = vmatpush1.bf16.msra.mxu0 %v2587
        %2591 = vmatprep.subr.bf16.mxu0 0
        %2592 = vmatpush1.bf16.msra.mxu0 0
        %2593 = vmatprep.subr.bf16.mxu0 0
        %2594 = vmatpush1.bf16.msra.mxu0 0
        %2595 = vmatprep.subr.bf16.mxu0 0
        %2596 = vmatpush1.bf16.msra.mxu0 0
        %2597 = vmatprep.subr.bf16.mxu0 0
        %2598 = vmatpush1.bf16.msra.mxu0 0
        %2599 = vmatprep.subr.bf16.mxu0 0
        %2600 = vmatpush1.bf16.msra.mxu0 0
        %2601 = vmatprep.subr.bf16.mxu0 0
        %2602 = vmatpush1.bf16.msra.mxu0 0
        %2603 = vmatprep.subr.bf16.mxu0 0
        %2604 = vmatpush1.bf16.msra.mxu0 0
        %2605 = vmatprep.subr.bf16.mxu0 0
        %2606 = vmatpush1.bf16.msra.mxu0 0
        %2607 = vmatprep.subr.bf16.mxu0 0
        %2608 = vmatpush1.bf16.msra.mxu0 0
        %2609 = vmatprep.subr.bf16.mxu0 0
        %2610 = vmatpush1.bf16.msra.mxu0 0
        %2611 = vmatprep.subr.bf16.mxu0 0
        %2612 = vmatpush1.bf16.msra.mxu0 0
        %2613 = vmatprep.subr.bf16.mxu0 0
        %2614 = vmatpush1.bf16.msra.mxu0 0
        %2615 = vmatprep.subr.bf16.mxu0 0
        %2616 = vmatpush1.bf16.msra.mxu0 0
        %2617 = vmatprep.subr.bf16.mxu0 0
        %2618 = vmatpush1.bf16.msra.mxu0 0
        %2619 = vmatprep.subr.bf16.mxu0 0
        %2620 = vmatpush1.bf16.msra.mxu0 0
        %2621 = vmatprep.mubr.bf16.mxu0 0
        %2622 = vmatmul.mubr.bf16.gmra.mrb[0].mxu0 %v2584
        %v2623 = vpop.f32.mrb[0].mxu0
        %v2624 = vadd.f32 0.0, %v2623
        %v2625 = vpop.f32.mrb[0].mxu0
        %v2626 = vpop.f32.mrb[0].mxu0
        %v2627 = vpop.f32.mrb[0].mxu0
        %2628 = vdwg.mxu0
        %v2630 = vsel %vm1268, %v2531, 0
        %v2633 = vsel %vm1508, %v2535, 0
        %2635 = vmatprep.subr.bf16.mxu0 0
        %2636 = vmatpush1.bf16.msra.mxu0 %v2633
        %2637 = vmatprep.subr.bf16.mxu0 0
        %2638 = vmatpush1.bf16.msra.mxu0 0
        %2639 = vmatprep.subr.bf16.mxu0 0
        %2640 = vmatpush1.bf16.msra.mxu0 0
        %2641 = vmatprep.subr.bf16.mxu0 0
        %2642 = vmatpush1.bf16.msra.mxu0 0
        %2643 = vmatprep.subr.bf16.mxu0 0
        %2644 = vmatpush1.bf16.msra.mxu0 0
        %2645 = vmatprep.subr.bf16.mxu0 0
        %2646 = vmatpush1.bf16.msra.mxu0 0
        %2647 = vmatprep.subr.bf16.mxu0 0
        %2648 = vmatpush1.bf16.msra.mxu0 0
        %2649 = vmatprep.subr.bf16.mxu0 0
        %2650 = vmatpush1.bf16.msra.mxu0 0
        %2651 = vmatprep.subr.bf16.mxu0 0
        %2652 = vmatpush1.bf16.msra.mxu0 0
        %2653 = vmatprep.subr.bf16.mxu0 0
        %2654 = vmatpush1.bf16.msra.mxu0 0
        %2655 = vmatprep.subr.bf16.mxu0 0
        %2656 = vmatpush1.bf16.msra.mxu0 0
        %2657 = vmatprep.subr.bf16.mxu0 0
        %2658 = vmatpush1.bf16.msra.mxu0 0
        %2659 = vmatprep.subr.bf16.mxu0 0
        %2660 = vmatpush1.bf16.msra.mxu0 0
        %2661 = vmatprep.subr.bf16.mxu0 0
        %2662 = vmatpush1.bf16.msra.mxu0 0
        %2663 = vmatprep.subr.bf16.mxu0 0
        %2664 = vmatpush1.bf16.msra.mxu0 0
        %2665 = vmatprep.subr.bf16.mxu0 0
        %2666 = vmatpush1.bf16.msra.mxu0 0
        %2667 = vmatprep.mubr.bf16.mxu0 0
        %2668 = vmatmul.mubr.bf16.gmra.mrb[0].mxu0 %v2630
        %v2669 = vpop.f32.mrb[0].mxu0
        %v2670 = vadd.f32 0.0, %v2669
        %v2671 = vpop.f32.mrb[0].mxu0
        %v2672 = vpop.f32.mrb[0].mxu0
        %v2673 = vpop.f32.mrb[0].mxu0
        %2674 = vdwg.mxu0
        %v2676 = vsel %vm1268, %v2532, 0
        %v2679 = vsel %vm1508, %v2536, 0
        %2681 = vmatprep.subr.bf16.mxu0 0
        %2682 = vmatpush1.bf16.msra.mxu0 %v2679
        %2683 = vmatprep.subr.bf16.mxu0 0
        %2684 = vmatpush1.bf16.msra.mxu0 0
        %2685 = vmatprep.subr.bf16.mxu0 0
        %2686 = vmatpush1.bf16.msra.mxu0 0
        %2687 = vmatprep.subr.bf16.mxu0 0
        %2688 = vmatpush1.bf16.msra.mxu0 0
        %2689 = vmatprep.subr.bf16.mxu0 0
        %2690 = vmatpush1.bf16.msra.mxu0 0
        %2691 = vmatprep.subr.bf16.mxu0 0
        %2692 = vmatpush1.bf16.msra.mxu0 0
        %2693 = vmatprep.subr.bf16.mxu0 0
        %2694 = vmatpush1.bf16.msra.mxu0 0
        %2695 = vmatprep.subr.bf16.mxu0 0
        %2696 = vmatpush1.bf16.msra.mxu0 0
        %2697 = vmatprep.subr.bf16.mxu0 0
        %2698 = vmatpush1.bf16.msra.mxu0 0
        %2699 = vmatprep.subr.bf16.mxu0 0
        %2700 = vmatpush1.bf16.msra.mxu0 0
        %2701 = vmatprep.subr.bf16.mxu0 0
        %2702 = vmatpush1.bf16.msra.mxu0 0
        %2703 = vmatprep.subr.bf16.mxu0 0
        %2704 = vmatpush1.bf16.msra.mxu0 0
        %2705 = vmatprep.subr.bf16.mxu0 0
        %2706 = vmatpush1.bf16.msra.mxu0 0
        %2707 = vmatprep.subr.bf16.mxu0 0
        %2708 = vmatpush1.bf16.msra.mxu0 0
        %2709 = vmatprep.subr.bf16.mxu0 0
        %2710 = vmatpush1.bf16.msra.mxu0 0
        %2711 = vmatprep.subr.bf16.mxu0 0
        %2712 = vmatpush1.bf16.msra.mxu0 0
        %2713 = vmatprep.mubr.bf16.mxu0 0
        %2714 = vmatmul.mubr.bf16.gmra.mrb[0].mxu0 %v2676
        %v2715 = vpop.f32.mrb[0].mxu0
        %v2716 = vadd.f32 0.0, %v2715
        %v2717 = vpop.f32.mrb[0].mxu0
        %v2718 = vpop.f32.mrb[0].mxu0
        %v2719 = vpop.f32.mrb[0].mxu0
        %2720 = vdwg.mxu0
        %v2721 = vcombine.low %v2578, %v2670
        %v2722 = vcombine.high %v2578, %v2670
        %v2724 = vunpack.c.l.s4 1983009808
        %v2725 = vunpack.c.0.s8 %v2724
        %v2726 = vlaneseq
        %v2727 = vshrl.u32 %v2726, 7
        %v2728 = vsub.s32 %v2725, %v2727
        %v2729 = vrot.slane %v2721, %v2728
        %v2731 = vunpack.c.l.s4 1983009808
        %v2732 = vunpack.c.0.s8 %v2731
        %v2733 = vlaneseq
        %v2734 = vshrl.u32 %v2733, 7
        %v2735 = vsub.s32 %v2732, %v2734
        %v2736 = vrot.slane %v2722, %v2735
        %v2737 = vcombine.low %v2624, %v2716
        %v2738 = vcombine.high %v2624, %v2716
        %v2740 = vunpack.c.l.s4 1983009808
        %v2741 = vunpack.c.0.s8 %v2740
        %v2742 = vlaneseq
        %v2743 = vshrl.u32 %v2742, 7
        %v2744 = vsub.s32 %v2741, %v2743
        %v2745 = vrot.slane %v2737, %v2744
        %v2747 = vunpack.c.l.s4 1983009808
        %v2748 = vunpack.c.0.s8 %v2747
        %v2749 = vlaneseq
        %v2750 = vshrl.u32 %v2749, 7
        %v2751 = vsub.s32 %v2748, %v2750
        %v2752 = vrot.slane %v2738, %v2751
        %v2753 = vcombine.low %v2729, %v2745
        %v2754 = vcombine.high %v2729, %v2745
        %v2756 = vunpack.c.l.s4 1934713408
        %v2757 = vunpack.c.0.s8 %v2756
        %v2758 = vlaneseq
        %v2759 = vshrl.u32 %v2758, 7
        %v2760 = vsub.s32 %v2757, %v2759
        %v2761 = vrot.slane %v2753, %v2760
        %v2763 = vunpack.c.l.s4 1934713408
        %v2764 = vunpack.c.0.s8 %v2763
        %v2765 = vlaneseq
        %v2766 = vshrl.u32 %v2765, 7
        %v2767 = vsub.s32 %v2764, %v2766
        %v2768 = vrot.slane %v2754, %v2767
        %v2769 = vcombine.low %v2736, %v2752
        %v2770 = vcombine.high %v2736, %v2752
        %v2772 = vunpack.c.l.s4 1934713408
        %v2773 = vunpack.c.0.s8 %v2772
        %v2774 = vlaneseq
        %v2775 = vshrl.u32 %v2774, 7
        %v2776 = vsub.s32 %v2773, %v2775
        %v2777 = vrot.slane %v2769, %v2776
        %v2779 = vunpack.c.l.s4 1934713408
        %v2780 = vunpack.c.0.s8 %v2779
        %v2781 = vlaneseq
        %v2782 = vshrl.u32 %v2781, 7
        %v2783 = vsub.s32 %v2780, %v2782
        %v2784 = vrot.slane %v2770, %v2783
        %v2785 = vcombine.high %v2761, 0.0
        %v2786 = vcombine.high %v2768, 0.0
        %v2787 = vcombine.high %v2777, 0.0
        %v2788 = vcombine.high %v2784, 0.0
        %v2789 = vcombine.low %v2761, %v2768
        %v2791 = vunpack.c.l.s4 1983009808
        %v2792 = vunpack.c.0.s8 %v2791
        %v2793 = vlaneseq
        %v2794 = vshrl.u32 %v2793, 7
        %v2795 = vsub.s32 %v2792, %v2794
        %v2796 = vrot.slane %v2789, %v2795
        %v2797 = vcombine.low %v2785, %v2786
        %v2799 = vunpack.c.l.s4 1983009808
        %v2800 = vunpack.c.0.s8 %v2799
        %v2801 = vlaneseq
        %v2802 = vshrl.u32 %v2801, 7
        %v2803 = vsub.s32 %v2800, %v2802
        %v2804 = vrot.slane %v2797, %v2803
        %v2805 = vcombine.low %v2777, %v2784
        %v2807 = vunpack.c.l.s4 1983009808
        %v2808 = vunpack.c.0.s8 %v2807
        %v2809 = vlaneseq
        %v2810 = vshrl.u32 %v2809, 7
        %v2811 = vsub.s32 %v2808, %v2810
        %v2812 = vrot.slane %v2805, %v2811
        %v2813 = vcombine.low %v2787, %v2788
        %v2815 = vunpack.c.l.s4 1983009808
        %v2816 = vunpack.c.0.s8 %v2815
        %v2817 = vlaneseq
        %v2818 = vshrl.u32 %v2817, 7
        %v2819 = vsub.s32 %v2816, %v2818
        %v2820 = vrot.slane %v2813, %v2819
        %v2821 = vcombine.low %v2796, %v2804
        %v2822 = vcombine.high %v2796, %v2804
        %v2824 = vunpack.c.l.s4 1934713408
        %v2825 = vunpack.c.0.s8 %v2824
        %v2826 = vlaneseq
        %v2827 = vshrl.u32 %v2826, 7
        %v2828 = vsub.s32 %v2825, %v2827
        %v2829 = vrot.slane %v2821, %v2828
        %v2831 = vunpack.c.l.s4 1934713408
        %v2832 = vunpack.c.0.s8 %v2831
        %v2833 = vlaneseq
        %v2834 = vshrl.u32 %v2833, 7
        %v2835 = vsub.s32 %v2832, %v2834
        %v2836 = vrot.slane %v2822, %v2835
        %v2837 = vcombine.low %v2812, %v2820
        %v2838 = vcombine.high %v2812, %v2820
        %v2840 = vunpack.c.l.s4 1934713408
        %v2841 = vunpack.c.0.s8 %v2840
        %v2842 = vlaneseq
        %v2843 = vshrl.u32 %v2842, 7
        %v2844 = vsub.s32 %v2841, %v2843
        %v2845 = vrot.slane %v2837, %v2844
        %v2847 = vunpack.c.l.s4 1934713408
        %v2848 = vunpack.c.0.s8 %v2847
        %v2849 = vlaneseq
        %v2850 = vshrl.u32 %v2849, 7
        %v2851 = vsub.s32 %v2848, %v2850
        %v2852 = vrot.slane %v2838, %v2851
        %v2853 = vcombine.low %v2829, %v2845
        %v2854 = vcombine.high %v2829, %v2845
        %v2855 = vcombine.low %v2836, %v2852
        %v2856 = vcombine.high %v2836, %v2852
        %2858 = vrot.lane.b32.xlu0 %v2854, 8
        %v2859 = vpop.permute.xlu0 %2858
        %2862 = vrot.lane.b32.xlu0 %v2855, 16
        %v2863 = vpop.permute.xlu0 %2862
        %2866 = vrot.lane.b32.xlu0 %v2856, 24
        %v2867 = vpop.permute.xlu0 %2866
        %v2869 = vsel %vm1268, %v2853, %v2859
        %v2870 = vsel %vm1839, %v2869, %v2863
        %v2871 = vsel %vm1841, %v2870, %v2867
        %v2872 = vpack.c.bf16 %v2871, %v1842
        %v2873 = vld [vmem:[%s658] sm:$0xf]
        %v2874 = vld [vmem:[%s658 + $0x4] sm:$0xf]
        %v2875 = vld [vmem:[%s658 + $0x8] sm:$0xf]
        %v2876 = vld [vmem:[%s658 + $0xc] sm:$0xf]
        %v2877 = vld [vmem:[%s661] sm:$0x1]
        %v2879 = vlaneseq
        %v2880 = vshrl.u32 %v2879, 7
        %v2881 = vsub.s32 0, %v2880
        %v2882 = vrot.slane %v2877, %v2881
        %v2888 = vunpack.c.l.b16 %v2873
        %v2889 = vunpack.c.l.b16 %v2874
        %v2890 = vunpack.c.l.b16 %v2875
        %v2891 = vunpack.c.l.b16 %v2876
        %v2892 = vpack.c.b16 %v2889, %v2888
        %v2893 = vpack.c.b16 %v2891, %v2890
        %v2897 = vsel %vm699, %v2872, 0
        %2899 = vmatprep.subr.bf16.mxu0 0
        %2900 = vmatpush1.bf16.msra.mxu0 %v2892
        %2901 = vmatprep.subr.bf16.mxu0 0
        %2902 = vmatpush1.bf16.msra.mxu0 %v2893
        %2903 = vmatprep.subr.bf16.mxu0 0
        %2904 = vmatpush1.bf16.msra.mxu0 0
        %2905 = vmatprep.subr.bf16.mxu0 0
        %2906 = vmatpush1.bf16.msra.mxu0 0
        %2907 = vmatprep.subr.bf16.mxu0 0
        %2908 = vmatpush1.bf16.msra.mxu0 0
        %2909 = vmatprep.subr.bf16.mxu0 0
        %2910 = vmatpush1.bf16.msra.mxu0 0
        %2911 = vmatprep.subr.bf16.mxu0 0
        %2912 = vmatpush1.bf16.msra.mxu0 0
        %2913 = vmatprep.subr.bf16.mxu0 0
        %2914 = vmatpush1.bf16.msra.mxu0 0
        %2915 = vmatprep.subr.bf16.mxu0 0
        %2916 = vmatpush1.bf16.msra.mxu0 0
        %2917 = vmatprep.subr.bf16.mxu0 0
        %2918 = vmatpush1.bf16.msra.mxu0 0
        %2919 = vmatprep.subr.bf16.mxu0 0
        %2920 = vmatpush1.bf16.msra.mxu0 0
        %2921 = vmatprep.subr.bf16.mxu0 0
        %2922 = vmatpush1.bf16.msra.mxu0 0
        %2923 = vmatprep.subr.bf16.mxu0 0
        %2924 = vmatpush1.bf16.msra.mxu0 0
        %2925 = vmatprep.subr.bf16.mxu0 0
        %2926 = vmatpush1.bf16.msra.mxu0 0
        %2927 = vmatprep.subr.bf16.mxu0 0
        %2928 = vmatpush1.bf16.msra.mxu0 0
        %2929 = vmatprep.subr.bf16.mxu0 0
        %2930 = vmatpush1.bf16.msra.mxu0 0
        %2931 = vmatprep.mubr.bf16.mxu0 0
        %2932 = vmatmul.mubr.bf16.gmra.mrb[0].mxu0 %v2897
        %v2933 = vpop.f32.mrb[0].mxu0
        %v2934 = vadd.f32 %v2882, %v2933
        %v2935 = vpop.f32.mrb[0].mxu0
        %v2936 = vpop.f32.mrb[0].mxu0
        %v2937 = vadd.f32 %v2882, %v2936
        %v2938 = vpop.f32.mrb[0].mxu0
        %2939 = vdwg.mxu0
        %v2940 = vadd.f32 %v695, %v2934
        %v2941 = vadd.f32 %v696, %v2937
        %v2942 = vld [vmem:[%s664] sm:$0x1]
        %v2943 = vld [vmem:[%s667] sm:$0x1]
        %v2944 = vsel %vm699, %v2940, 0.0
        %2945 = vadd.xlane.f32.xlu0 %v2944
        %v2946 = vpop.xlane.xlu0 %2945
        %v2947 = vsel %vm699, %v2941, 0.0
        %2948 = vadd.xlane.f32.xlu0 %v2947
        %v2949 = vpop.xlane.xlu0 %2948
        %v2950 = vmul.f32 %v2946, %v706
        %v2951 = vmul.f32 %v2949, %v706
        %v2952 = vsub.f32 %v2940, %v2950
        %v2953 = vsub.f32 %v2941, %v2951
        %v2954 = vmul.f32 %v2952, %v2952
        %v2955 = vmul.f32 %v2953, %v2953
        %v2956 = vsel %vm699, %v2954, 0.0
        %2957 = vadd.xlane.f32.xlu0 %v2956
        %v2958 = vpop.xlane.xlu0 %2957
        %v2959 = vsel %vm699, %v2955, 0.0
        %2960 = vadd.xlane.f32.xlu0 %v2959
        %v2961 = vpop.xlane.xlu0 %2960
        %v2962 = vmul.f32 %v2958, %v706
        %v2963 = vmul.f32 %v2961, %v706
        %v2964 = vadd.f32 %v2962, 1e-05
        %v2965 = vadd.f32 %v2963, 1e-05
        %v2966 = vrsqrt.pop %v2964
        %v2967 = vrsqrt.pop %v2965
        %v2968 = vmul.f32 %v2952, %v2966
        %v2969 = vmul.f32 %v2953, %v2967
        %v2971 = vlaneseq
        %v2972 = vshrl.u32 %v2971, 7
        %v2973 = vsub.s32 0, %v2972
        %v2974 = vrot.slane %v2942, %v2973
        %v2976 = vmul.f32 %v2968, %v2974
        %v2977 = vmul.f32 %v2969, %v2974
        %v2979 = vlaneseq
        %v2980 = vshrl.u32 %v2979, 7
        %v2981 = vsub.s32 0, %v2980
        %v2982 = vrot.slane %v2943, %v2981
        %v2984 = vadd.f32 %v2976, %v2982
        %v2985 = vadd.f32 %v2977, %v2982
        %v2986 = vpack.c.bf16 %v2985, %v2984
        %v2987 = vld [vmem:[%s672] sm:$0xf]
        %v2988 = vld [vmem:[%s672 + $0x4] sm:$0xf]
        %v2989 = vld [vmem:[%s672 + $0x8] sm:$0xf]
        %v2990 = vld [vmem:[%s672 + $0xc] sm:$0xf]
        %v2991 = vld [vmem:[%s675] sm:$0x1]
        %v2993 = vlaneseq
        %v2994 = vshrl.u32 %v2993, 7
        %v2995 = vsub.s32 0, %v2994
        %v2996 = vrot.slane %v2991, %v2995
        %v3002 = vunpack.c.l.b16 %v2987
        %v3003 = vunpack.c.l.b16 %v2988
        %v3004 = vunpack.c.l.b16 %v2989
        %v3005 = vunpack.c.l.b16 %v2990
        %v3006 = vpack.c.b16 %v3003, %v3002
        %v3007 = vpack.c.b16 %v3005, %v3004
        %v3011 = vsel %vm699, %v2986, 0
        %3013 = vmatprep.subr.bf16.mxu0 0
        %3014 = vmatpush1.bf16.msra.mxu0 %v3006
        %3015 = vmatprep.subr.bf16.mxu0 0
        %3016 = vmatpush1.bf16.msra.mxu0 %v3007
        %3017 = vmatprep.subr.bf16.mxu0 0
        %3018 = vmatpush1.bf16.msra.mxu0 0
        %3019 = vmatprep.subr.bf16.mxu0 0
        %3020 = vmatpush1.bf16.msra.mxu0 0
        %3021 = vmatprep.subr.bf16.mxu0 0
        %3022 = vmatpush1.bf16.msra.mxu0 0
        %3023 = vmatprep.subr.bf16.mxu0 0
        %3024 = vmatpush1.bf16.msra.mxu0 0
        %3025 = vmatprep.subr.bf16.mxu0 0
        %3026 = vmatpush1.bf16.msra.mxu0 0
        %3027 = vmatprep.subr.bf16.mxu0 0
        %3028 = vmatpush1.bf16.msra.mxu0 0
        %3029 = vmatprep.subr.bf16.mxu0 0
        %3030 = vmatpush1.bf16.msra.mxu0 0
        %3031 = vmatprep.subr.bf16.mxu0 0
        %3032 = vmatpush1.bf16.msra.mxu0 0
        %3033 = vmatprep.subr.bf16.mxu0 0
        %3034 = vmatpush1.bf16.msra.mxu0 0
        %3035 = vmatprep.subr.bf16.mxu0 0
        %3036 = vmatpush1.bf16.msra.mxu0 0
        %3037 = vmatprep.subr.bf16.mxu0 0
        %3038 = vmatpush1.bf16.msra.mxu0 0
        %3039 = vmatprep.subr.bf16.mxu0 0
        %3040 = vmatpush1.bf16.msra.mxu0 0
        %3041 = vmatprep.subr.bf16.mxu0 0
        %3042 = vmatpush1.bf16.msra.mxu0 0
        %3043 = vmatprep.subr.bf16.mxu0 0
        %3044 = vmatpush1.bf16.msra.mxu0 0
        %3045 = vmatprep.mubr.bf16.mxu0 0
        %3046 = vmatmul.mubr.bf16.gmra.mrb[0].mxu0 %v3011
        %v3047 = vpop.f32.mrb[0].mxu0
        %v3048 = vadd.f32 %v2996, %v3047
        %v3049 = vpop.f32.mrb[0].mxu0
        %v3050 = vpop.f32.mrb[0].mxu0
        %v3051 = vadd.f32 %v2996, %v3050
        %v3052 = vpop.f32.mrb[0].mxu0
        %3053 = vdwg.mxu0
        %v3054 = vmul.f32 %v3048, 1.702
        %v3055 = vmul.f32 %v3051, 1.702
        %v3056 = vxor.u32 %v3054, 2147483648
        %v3057 = vxor.u32 %v3055, 2147483648
        %v3058 = vmul.f32 %v3056, 1.442695
        %v3059 = vpow.pop %v3058
        %v3060 = vmul.f32 %v3057, 1.442695
        %v3061 = vpow.pop %v3060
        %v3062 = vadd.f32 %v3059, 1.0
        %v3063 = vadd.f32 %v3061, 1.0
        %v3064 = vrcp.pop %v3062
        %v3065 = vmul.f32 1.0, %v3064
        %v3066 = vrcp.pop %v3063
        %v3067 = vmul.f32 1.0, %v3066
        %v3068 = vmul.f32 %v3048, %v3065
        %v3069 = vmul.f32 %v3051, %v3067
        %v3070 = vpack.c.bf16 %v3069, %v3068
        %v3071 = vld [vmem:[%s680] sm:$0xf]
        %v3072 = vld [vmem:[%s680 + $0x4] sm:$0xf]
        %v3073 = vld [vmem:[%s680 + $0x8] sm:$0xf]
        %v3074 = vld [vmem:[%s680 + $0xc] sm:$0xf]
        %v3075 = vld [vmem:[%s680 + $0x10] sm:$0xf]
        %v3076 = vld [vmem:[%s680 + $0x14] sm:$0xf]
        %v3077 = vld [vmem:[%s680 + $0x18] sm:$0xf]
        %v3078 = vld [vmem:[%s680 + $0x1c] sm:$0xf]
        %v3079 = vld [vmem:[%s680 + $0x20] sm:$0xf]
        %v3080 = vld [vmem:[%s680 + $0x24] sm:$0xf]
        %v3081 = vld [vmem:[%s680 + $0x28] sm:$0xf]
        %v3082 = vld [vmem:[%s680 + $0x2c] sm:$0xf]
        %v3083 = vld [vmem:[%s680 + $0x30] sm:$0xf]
        %v3084 = vld [vmem:[%s680 + $0x34] sm:$0xf]
        %v3085 = vld [vmem:[%s680 + $0x38] sm:$0xf]
        %v3086 = vld [vmem:[%s680 + $0x3c] sm:$0xf]
        %v3087 = vld [vmem:[%s683] sm:$0x1]
        %v3089 = vlaneseq
        %v3090 = vshrl.u32 %v3089, 7
        %v3091 = vsub.s32 0, %v3090
        %v3092 = vrot.slane %v3087, %v3091
        %v3110 = vunpack.c.l.b16 %v3071
        %v3111 = vunpack.c.l.b16 %v3072
        %v3112 = vunpack.c.l.b16 %v3073
        %v3113 = vunpack.c.l.b16 %v3074
        %v3114 = vunpack.c.l.b16 %v3075
        %v3115 = vunpack.c.l.b16 %v3076
        %v3116 = vunpack.c.l.b16 %v3077
        %v3117 = vunpack.c.l.b16 %v3078
        %v3118 = vunpack.c.l.b16 %v3079
        %v3119 = vunpack.c.l.b16 %v3080
        %v3120 = vunpack.c.l.b16 %v3081
        %v3121 = vunpack.c.l.b16 %v3082
        %v3122 = vunpack.c.l.b16 %v3083
        %v3123 = vunpack.c.l.b16 %v3084
        %v3124 = vunpack.c.l.b16 %v3085
        %v3125 = vunpack.c.l.b16 %v3086
        %v3126 = vpack.c.b16 %v3111, %v3110
        %v3127 = vpack.c.b16 %v3113, %v3112
        %v3128 = vpack.c.b16 %v3115, %v3114
        %v3129 = vpack.c.b16 %v3117, %v3116
        %v3130 = vpack.c.b16 %v3119, %v3118
        %v3131 = vpack.c.b16 %v3121, %v3120
        %v3132 = vpack.c.b16 %v3123, %v3122
        %v3133 = vpack.c.b16 %v3125, %v3124
        %3142 = vmatprep.subr.bf16.mxu0 0
        %3143 = vmatpush1.bf16.msra.mxu0 %v3126
        %3144 = vmatprep.subr.bf16.mxu0 0
        %3145 = vmatpush1.bf16.msra.mxu0 %v3127
        %3146 = vmatprep.subr.bf16.mxu0 0
        %3147 = vmatpush1.bf16.msra.mxu0 %v3128
        %3148 = vmatprep.subr.bf16.mxu0 0
        %3149 = vmatpush1.bf16.msra.mxu0 %v3129
        %3150 = vmatprep.subr.bf16.mxu0 0
        %3151 = vmatpush1.bf16.msra.mxu0 %v3130
        %3152 = vmatprep.subr.bf16.mxu0 0
        %3153 = vmatpush1.bf16.msra.mxu0 %v3131
        %3154 = vmatprep.subr.bf16.mxu0 0
        %3155 = vmatpush1.bf16.msra.mxu0 %v3132
        %3156 = vmatprep.subr.bf16.mxu0 0
        %3157 = vmatpush1.bf16.msra.mxu0 %v3133
        %3158 = vmatprep.subr.bf16.mxu0 0
        %3159 = vmatpush1.bf16.msra.mxu0 0
        %3160 = vmatprep.subr.bf16.mxu0 0
        %3161 = vmatpush1.bf16.msra.mxu0 0
        %3162 = vmatprep.subr.bf16.mxu0 0
        %3163 = vmatpush1.bf16.msra.mxu0 0
        %3164 = vmatprep.subr.bf16.mxu0 0
        %3165 = vmatpush1.bf16.msra.mxu0 0
        %3166 = vmatprep.subr.bf16.mxu0 0
        %3167 = vmatpush1.bf16.msra.mxu0 0
        %3168 = vmatprep.subr.bf16.mxu0 0
        %3169 = vmatpush1.bf16.msra.mxu0 0
        %3170 = vmatprep.subr.bf16.mxu0 0
        %3171 = vmatpush1.bf16.msra.mxu0 0
        %3172 = vmatprep.subr.bf16.mxu0 0
        %3173 = vmatpush1.bf16.msra.mxu0 0
        %3174 = vmatprep.mubr.bf16.mxu0 0
        %3175 = vmatmul.mubr.bf16.gmra.mrb[0].mxu0 %v3070
        %v3176 = vpop.f32.mrb[0].mxu0
        %v3177 = vadd.f32 %v3092, %v3176
        %v3178 = vpop.f32.mrb[0].mxu0
        %v3179 = vpop.f32.mrb[0].mxu0
        %v3180 = vadd.f32 %v3092, %v3179
        %v3181 = vpop.f32.mrb[0].mxu0
        %3182 = vdwg.mxu0
        %v3183 = vadd.f32 %v2940, %v3177
        %v3184 = vadd.f32 %v2941, %v3180
        %3185 = vst.msk [vmem:[#allocation2] sm:$0xff] %vm699, %v3183
        %3186 = vst.msk [vmem:[#allocation2 + $0x8] sm:$0xff] %vm699, %v3184
        %p3187 = scmp.eq.s32.totalorder %s31, 1
        // Predicated region
        $region81: #{tpu_custom_call.1} parent=75 // pred_check
          %p3188 = pneg %p3187
        $region82: #{tpu_custom_call.1} parent=75 // pred_check_branch
          %3190 = sbr.rel (%p3188) target = $region84
        $region83: #{tpu_custom_call.1} parent=75 // pred_region
          %3191 = vst.msk [vmem:[#allocation3] sm:$0xff] %vm699, %v3183
          %3192 = vst.msk [vmem:[#allocation3 + $0x8] sm:$0xff] %vm699, %v3184
        $region84: #{tpu_custom_call.1} parent=75 // pred_fallthru
          _
        // Predicated region
        $region85: #{tpu_custom_call.1} parent=75 // pred_check
          %p3193 = pneg %p420
        $region86: #{tpu_custom_call.1} parent=75 // pred_check_branch
          %3195 = sbr.rel (%p3193) target = $region88
        $region87: #{tpu_custom_call.1} parent=75 // pred_region
          %s3196 = smul.u32 2, %s30
          %s3198 = ssub.s32 256, 256
          %3199 = vsyncadd [#allocation4], %s3198
          %s3200 = smul.addr %s3196, 128
          %s3201 = scalar_lea.hbm %s14, %s3200
          %s3202 = sshll.u32 [#allocation3], 4
          %s3203 = int_to_ptr.vmem [resolvable:$true] %s3202
          %3208 = dma.vmem_to_hbm [thread:$0]  %s3203, 256, %s3201, [#allocation4], 128, 128, 8
        $region88: #{tpu_custom_call.1} parent=75 // pred_fallthru
          _
        // Predicated region
        $region89: #{tpu_custom_call.1} parent=75 // pred_check
          %p3209 = pneg %p420
        $region90: #{tpu_custom_call.1} parent=75 // pred_check_branch
          %3211 = sbr.rel (%p3209) target = $region92
        $region91: #{tpu_custom_call.1} parent=75 // pred_region
          %3212 = dma.done [#allocation4], 256
        $region92: #{tpu_custom_call.1} parent=75 // pred_fallthru
          _
      $region76: #{tpu_custom_call.1} parent=5 // pred_fallthru
        _
      %p3213 = scmp.le.s32.totalorder 2, %s21
      // Predicated region
      $region93: #{tpu_custom_call.1} parent=5 // pred_check
        %p3214 = pneg %p3213
      $region94: #{tpu_custom_call.1} parent=5 // pred_check_branch
        %3216 = sbr.rel (%p3214) target = $region96
      $region95: #{tpu_custom_call.1} parent=5 // pred_region
        %s3217 = ssub.s32 %s21, 2
      $region96: #{tpu_custom_call.1} parent=5 // pred_fallthru
        _
    $region6: #{tpu_custom_call.1} parent=1 // loop_footer
      %s25 = sadd.s32 1, %s21
    $region7: #{tpu_custom_call.1} parent=1 // loop_footer_branch
      %20 = sbr.rel target = $region3
    $region8: #{tpu_custom_call.1} parent=1 // loop_exit
      _
    %3218 = vsyncpa [#allocation4], 1
    %s3219 = scalar_lea.sflag [#allocation4], 1
    %3220 = vsyncpa %s3219, 1

</llo_original>
